<compile_context>
chip_gen: v7x
topology: tpu7x:2x2x1
jax: 0.10.0
libtpu: 0.0.40
codegen_flags: <defaults>
</compile_context>

<pallas_src>
import math
import functools

import jax
import jax.numpy as jnp
from jax.experimental import pallas as pl
from jax.experimental.pallas import tpu as pltpu


# --------------------------------------------------------------------------- #
# Kernel
# --------------------------------------------------------------------------- #
def _lsh_attention_kernel(qkv_ref, w_in_ref, b_in_ref, wo_ref, bo_ref, out_ref,
                          *, block_batch: int, seq_len: int, embed_dim: int,
                          compute_dtype):
    """One grid step == block_batch batch elements.  All tiles live in VMEM."""
    bb, s, e = block_batch, seq_len, embed_dim
    scale = 1.0 / math.sqrt(embed_dim)

    # (bb, 3, S, E) -> (bb*3*S, E); S is a multiple of the sublane tile, so the
    # reshape is layout-preserving (only leading dims fold).
    qkv2 = qkv_ref[...].reshape(bb * 3 * s, e)

    w_in = w_in_ref[...]      # (E, 2E) = [wqk.T | wv.T]  (y = x @ W + b layout)
    b_in = b_in_ref[...]      # (1, 2E) = [bqk | bv]
    wo = wo_ref[...]          # (E, E)
    bo = bo_ref[...]          # (1, E)

    if compute_dtype != jnp.float32:
        # bf16 operands for the native bf16 MXU; accumulation stays f32.
        qkv2 = qkv2.astype(compute_dtype)
        w_in = w_in.astype(compute_dtype)
        wo = wo.astype(compute_dtype)

    # Single fused input projection: all of Q, K, V rows against [wqk | wv].
    # No in-kernel concat; the only data movement afterwards is tile-aligned
    # leading-axis selection plus one small lane slice for V's columns.
    proj = jnp.dot(qkv2, w_in, preferred_element_type=jnp.float32) + b_in
    proj = proj.reshape(bb, 3, s, 2 * e)

    qp = proj[:, 0, :, :e] * scale   # fold 1/sqrt(E) into Q (commutes through matmul)
    kp = proj[:, 1, :, :e]
    vp = proj[:, 2, :, e:]

    if compute_dtype != jnp.float32:
        qp = qp.astype(compute_dtype)
        kp = kp.astype(compute_dtype)

    # Attention exactly as in the reference: scores = Q_proj @ K_proj with NO
    # transpose -> contract Q's embed axis against K's seq axis (requires S == E).
    scores = jnp.einsum('bse,bet->bst', qp, kp,
                        preferred_element_type=jnp.float32)

    # Numerically stable softmax over the last axis (EUP approx reciprocal).
    m = jnp.max(scores, axis=-1, keepdims=True)
    p = jnp.exp(scores - m)
    denom = jnp.sum(p, axis=-1, keepdims=True)
    attn = p * pl.reciprocal(denom, approx=True)

    ctx = jnp.einsum('bst,bte->bse',
                     attn.astype(compute_dtype), vp.astype(compute_dtype),
                     preferred_element_type=jnp.float32)

    # Output projection.
    ctx2 = ctx.reshape(bb * s, e).astype(compute_dtype)
    out = jnp.dot(ctx2, wo, preferred_element_type=jnp.float32) + bo
    out_ref[...] = out.reshape(bb, s, e).astype(out_ref.dtype)


# --------------------------------------------------------------------------- #
# Generation-aware sizing helpers
# --------------------------------------------------------------------------- #
def _device_kind() -> str:
    try:
        return jax.devices()[0].device_kind.lower()
    except Exception:
        return ""


def _is_v7(kind: str) -> bool:
    return ("v7" in kind) or ("7x" in kind)


def _num_tensorcores(kind: str) -> int:
    # v7x exposes 2 TensorCores per chip; v5e / v6e have 1.
    return 2 if _is_v7(kind) else 1


def _vmem_physical_bytes(kind: str) -> int:
    # v7x: 64 MiB per TensorCore; v5e / v6e: 128 MiB.
    return (64 << 20) if _is_v7(kind) else (128 << 20)


def _block_bytes(bb: int, s: int, e: int) -> int:
    """Rough per-grid-step VMEM residency (double-buffered I/O + weights + f32
    intermediates)."""
    itemsize = 4
    in_block = bb * 3 * s * e * itemsize
    out_block = bb * s * e * itemsize
    weights = (e * 2 * e + e * e + 2 * e + e) * itemsize
    # largest f32 intermediates: proj (bb,3,S,2E), scores/p/attn (bb,S,S), ctx (bb,S,E)
    interm = bb * (3 * s * 2 * e + 3 * s * s + 2 * s * e) * 4
    return 2 * (in_block + out_block) + weights + interm


def _pick_block_batch(batch: int, s: int, e: int,
                      num_cores: int, vmem_budget_bytes: int) -> int:
    """Largest divisor of `batch` fitting the VMEM budget; on multi-TC chips prefer
    a grid that splits evenly across TensorCores (ideally one step per core)."""
    candidates = [d for d in range(1, batch + 1)
                  if batch % d == 0 and _block_bytes(d, s, e) <= vmem_budget_bytes]
    if not candidates:
        return 1
    if num_cores > 1:
        even = [d for d in candidates if (batch // d) % num_cores == 0]
        if even:
            return max(even)
    return max(candidates)


def _vmem_limit_bytes(block_bytes: int, physical_bytes: int) -> int:
    limit = block_bytes + (8 << 20)            # footprint + headroom
    limit = max(limit, 16 << 20)
    limit = min(limit, physical_bytes - (8 << 20))
    return int(limit)


# --------------------------------------------------------------------------- #
# Wrapper
# --------------------------------------------------------------------------- #
def lsh_attention_forward(Q, K, V, params, *, block_batch=None,
                          compute_dtype=jnp.float32):
    """Q, K, V: (B, S, E) float32; params: dict of projection weights/biases."""
    B, S, E = Q.shape
    assert K.shape == (B, S, E) and V.shape == (B, S, E)
    assert S == E, "Reference forward uses Q @ K without transpose -> requires seq == embed."

    kind = _device_kind()
    num_cores = _num_tensorcores(kind)
    physical = _vmem_physical_bytes(kind)

    if block_batch is None:
        block_batch = _pick_block_batch(B, S, E, num_cores, physical // 2)
    assert B % block_batch == 0, "block_batch must divide batch"
    grid_b = B // block_batch

    # Stack Q, K, V wrapper-side -> one input DMA descriptor per grid step
    # instead of three tiny latency-bound ones.
    qkv = jnp.stack([Q, K, V], axis=1)                                   # (B, 3, S, E)

    # Fused input-projection weight [wqk | wv], already transposed (y = x @ W + b).
    w_in = jnp.concatenate([params["wqk"].T, params["wv"].T], axis=1)    # (E, 2E)
    b_in = jnp.concatenate([params["bqk"], params["bv"]]).reshape(1, 2 * E)
    wo_t = params["wo"].T                                                # (E, E)
    bo = params["bo"].reshape(1, E)

    qkv_spec = pl.BlockSpec((block_batch, 3, S, E), lambda b: (b, 0, 0, 0))
    out_spec = pl.BlockSpec((block_batch, S, E), lambda b: (b, 0, 0))
    w_in_spec = pl.BlockSpec((E, 2 * E), lambda b: (0, 0))
    b_in_spec = pl.BlockSpec((1, 2 * E), lambda b: (0, 0))
    wo_spec = pl.BlockSpec((E, E), lambda b: (0, 0))
    bo_spec = pl.BlockSpec((1, E), lambda b: (0, 0))

    kernel = functools.partial(
        _lsh_attention_kernel,
        block_batch=block_batch, seq_len=S, embed_dim=E,
        compute_dtype=compute_dtype)

    block_bytes = _block_bytes(block_batch, S, E)
    vmem_limit = _vmem_limit_bytes(block_bytes, physical)

    # Advisory cost hint for XLA's scheduler.
    flops = 2 * B * (3 * S) * E * (2 * E)        # fused QKV projection (incl. redundancy)
    flops += 2 * 2 * B * S * S * E               # scores + attn @ V
    flops += 2 * B * S * E * E                   # output projection
    transcendentals = B * S * S + B * S          # exp + reciprocal
    bytes_accessed = 4 * (3 * B * S * E + B * S * E + E * 2 * E + E * E + 3 * E)
    cost = pl.CostEstimate(flops=int(flops), transcendentals=int(transcendentals),
                           bytes_accessed=int(bytes_accessed))

    # Single-TC chips (v5e/v6e): grid=(1,) -> no per-step overhead to annotate.
    # v7x: CORE_PARALLEL so both TensorCores actually run; fall back if rejected.
    if grid_b == 1:
        semantics_options = ("arbitrary",)
    elif num_cores > 1 and grid_b % num_cores == 0:
        semantics_options = (pltpu.CORE_PARALLEL, "parallel")
    else:
        semantics_options = ("parallel",)

    def build(sem):
        return pl.pallas_call(
            kernel,
            out_shape=jax.ShapeDtypeStruct((B, S, E), Q.dtype),
            grid_spec=pltpu.PrefetchScalarGridSpec(
                num_scalar_prefetch=0,
                grid=(grid_b,),
                in_specs=[qkv_spec, w_in_spec, b_in_spec, wo_spec, bo_spec],
                out_specs=out_spec,
            ),
            compiler_params=pltpu.CompilerParams(
                dimension_semantics=(sem,),
                vmem_limit_bytes=vmem_limit,
            ),
            cost_estimate=cost,
        )

    last_err = None
    for sem in semantics_options:
        try:
            return build(sem)(qkv, w_in, b_in, wo_t, bo)
        except Exception as err:   # e.g. CORE_PARALLEL unsupported on this toolchain
            last_err = err
    raise last_err


# --------------------------------------------------------------------------- #
# Params + pure-JAX reference
# --------------------------------------------------------------------------- #
def init_params(key, embed_dim):
    """Deterministic nn.Linear-style init: U(-1/sqrt(in), 1/sqrt(in))."""
    bound = 1.0 / math.sqrt(embed_dim)
    keys = jax.random.split(key, 6)

    def u(k, shape):
        return jax.random.uniform(k, shape, jnp.float32, minval=-bound, maxval=bound)

    return {
        "wqk": u(keys[0], (embed_dim, embed_dim)),  # PyTorch layout (out, in)
        "bqk": u(keys[1], (embed_dim,)),
        "wv":  u(keys[2], (embed_dim, embed_dim)),
        "bv":  u(keys[3], (embed_dim,)),
        "wo":  u(keys[4], (embed_dim, embed_dim)),
        "bo":  u(keys[5], (embed_dim,)),
    }


def reference_forward(Q, K, V, params):
    """Pure-JAX reference mirroring the PyTorch module semantics."""
    E = Q.shape[-1]
    qp = Q @ params["wqk"].T + params["bqk"]
    kp = K @ params["wqk"].T + params["bqk"]
    vp = V @ params["wv"].T + params["bv"]
    scores = jnp.matmul(qp, kp) / math.sqrt(E)   # NOTE: no transpose, as in reference
    attn = jax.nn.softmax(scores, axis=-1)
    ctx = jnp.matmul(attn, vp)
    return ctx @ params["wo"].T + params["bo"]


# --------------------------------------------------------------------------- #
# Main
# --------------------------------------------------------------------------- #
if __name__ == "__main__":
    batch = 8
    embed_dim = 32
    seq_len = embed_dim  # required by the reference's Q @ K (no transpose)

    key = jax.random.PRNGKey(0)
    kq, kk, kv, kp = jax.random.split(key, 4)
    Q = jax.random.normal(kq, (batch, seq_len, embed_dim), jnp.float32)
    K = jax.random.normal(kk, (batch, seq_len, embed_dim), jnp.float32)
    V = jax.random.normal(kv, (batch, seq_len, embed_dim), jnp.float32)

    params = init_params(kp, embed_dim)

    # Auto block_batch: grid=(1,) on single-TC v5e/v6e, grid=(2,) CORE_PARALLEL on v7x.
    out = lsh_attention_forward(Q, K, V, params)
    out = jax.block_until_ready(out)

    ref = reference_forward(Q, K, V, params)
    assert out.shape == (batch, seq_len, embed_dim)
    # Tolerance 1e-3 accommodates the EUP approximate reciprocal in the softmax
    # denominator; all matmuls/accumulation remain f32 by default.
    assert jnp.allclose(out, ref, atol=1e-3, rtol=1e-3), "mismatch vs JAX reference"

    print("KERNEL_OK")
</pallas_src>

<mosaic_0001>
module attributes {stable_mosaic.version = 11 : i64} {
  func.func @_lsh_attention_kernel(%arg0: i32, %arg1: memref<8x3x32x32xf32, #tpu.memory_space<vmem>>, %arg2: memref<32x64xf32, #tpu.memory_space<vmem>>, %arg3: memref<1x64xf32, #tpu.memory_space<vmem>>, %arg4: memref<32x32xf32, #tpu.memory_space<vmem>>, %arg5: memref<1x32xf32, #tpu.memory_space<vmem>>, %arg6: memref<8x32x32xf32, #tpu.memory_space<vmem>>) attributes {dimension_semantics = [#tpu.dimension_semantics<arbitrary>], iteration_bounds = array<i64: 1>, scalar_prefetch = 0 : i64, scratch_operands = 0 : i64, tpu.core_type = #tpu.core_type<tc>, window_params = [{transform_indices = @transform_0, window_bounds = array<i64: 8, 3, 32, 32>}, {pipeline_mode = #tpu.pipeline_mode<synchronous>, transform_indices = @transform_1, window_bounds = array<i64: 32, 64>}, {pipeline_mode = #tpu.pipeline_mode<synchronous>, transform_indices = @transform_2, window_bounds = array<i64: 1, 64>}, {pipeline_mode = #tpu.pipeline_mode<synchronous>, transform_indices = @transform_3, window_bounds = array<i64: 32, 32>}, {pipeline_mode = #tpu.pipeline_mode<synchronous>, transform_indices = @transform_4, window_bounds = array<i64: 1, 32>}, {transform_indices = @transform_5, window_bounds = array<i64: 8, 32, 32>}]} {
    %c0 = arith.constant 0 : index
    %c0_0 = arith.constant 0 : index
    %c0_1 = arith.constant 0 : index
    %c0_2 = arith.constant 0 : index
    %0 = vector.load %arg1[%c0, %c0_0, %c0_1, %c0_2] : memref<8x3x32x32xf32, #tpu.memory_space<vmem>>, vector<8x3x32x32xf32>
    %1 = vector.shape_cast %0 : vector<8x3x32x32xf32> to vector<768x32xf32>
    %c0_3 = arith.constant 0 : index
    %c0_4 = arith.constant 0 : index
    %2 = vector.load %arg2[%c0_3, %c0_4] : memref<32x64xf32, #tpu.memory_space<vmem>>, vector<32x64xf32>
    %c0_5 = arith.constant 0 : index
    %c0_6 = arith.constant 0 : index
    %3 = vector.load %arg3[%c0_5, %c0_6] : memref<1x64xf32, #tpu.memory_space<vmem>>, vector<1x64xf32>
    %c0_7 = arith.constant 0 : index
    %c0_8 = arith.constant 0 : index
    %4 = vector.load %arg4[%c0_7, %c0_8] : memref<32x32xf32, #tpu.memory_space<vmem>>, vector<32x32xf32>
    %c0_9 = arith.constant 0 : index
    %c0_10 = arith.constant 0 : index
    %5 = vector.load %arg5[%c0_9, %c0_10] : memref<1x32xf32, #tpu.memory_space<vmem>>, vector<1x32xf32>
    %cst = arith.constant dense<0.000000e+00> : vector<768x64xf32>
    %6 = tpu.matmul %1, %2, %cst {dimension_numbers = #tpu.dot_dimension_numbers<[1], [0], [0], [1], [0, 0, 1, 1], [], []>} : vector<768x32xf32>, vector<32x64xf32>, vector<768x64xf32> -> vector<768x64xf32>
    %7 = vector.broadcast %3 : vector<1x64xf32> to vector<768x64xf32>
    %8 = arith.addf %6, %7 : vector<768x64xf32>
    %9 = vector.shape_cast %8 : vector<768x64xf32> to vector<8x3x32x64xf32>
    %10 = vector.extract_strided_slice %9 {offsets = [0, 0, 0, 0], sizes = [8, 1, 32, 32], strides = [1, 1, 1, 1]} : vector<8x3x32x64xf32> to vector<8x1x32x32xf32>
    %11 = vector.shape_cast %10 : vector<8x1x32x32xf32> to vector<8x32x32xf32>
    %cst_11 = arith.constant 0.176776692 : f32
    %12 = vector.broadcast %cst_11 : f32 to vector<8x32x32xf32>
    %13 = arith.mulf %11, %12 : vector<8x32x32xf32>
    %14 = vector.extract_strided_slice %9 {offsets = [0, 1, 0, 0], sizes = [8, 1, 32, 32], strides = [1, 1, 1, 1]} : vector<8x3x32x64xf32> to vector<8x1x32x32xf32>
    %15 = vector.shape_cast %14 : vector<8x1x32x32xf32> to vector<8x32x32xf32>
    %16 = vector.extract_strided_slice %9 {offsets = [0, 2, 0, 32], sizes = [8, 1, 32, 32], strides = [1, 1, 1, 1]} : vector<8x3x32x64xf32> to vector<8x1x32x32xf32>
    %17 = vector.shape_cast %16 : vector<8x1x32x32xf32> to vector<8x32x32xf32>
    "tpu.trace_start"() <{level = 10 : i32, message = "bse,bet->bst"}> : () -> ()
    %cst_12 = arith.constant dense<0.000000e+00> : vector<8x32x32xf32>
    %18 = tpu.matmul %13, %15, %cst_12 {dimension_numbers = #tpu.dot_dimension_numbers<[2], [1], [1], [2], [0, 0, 0, 1, 1, 2], [0], [0]>} : vector<8x32x32xf32>, vector<8x32x32xf32>, vector<8x32x32xf32> -> vector<8x32x32xf32>
    "tpu.trace_stop"() : () -> ()
    %cst_13 = arith.constant dense<0xFF800000> : vector<8x32xf32>
    %19 = vector.multi_reduction <maximumf>, %18, %cst_13 [2] : vector<8x32x32xf32> to vector<8x32xf32>
    %20 = vector.shape_cast %19 : vector<8x32xf32> to vector<8x32x1xf32>
    %21 = vector.broadcast %20 : vector<8x32x1xf32> to vector<8x32x32xf32>
    %22 = arith.subf %18, %21 : vector<8x32x32xf32>
    %23 = math.exp %22 : vector<8x32x32xf32>
    %cst_14 = arith.constant dense<0.000000e+00> : vector<8x32xf32>
    %24 = vector.multi_reduction <add>, %23, %cst_14 [2] : vector<8x32x32xf32> to vector<8x32xf32>
    %25 = vector.shape_cast %24 : vector<8x32xf32> to vector<8x32x1xf32>
    %26 = tpu.reciprocal %25 {approx = true} : vector<8x32x1xf32> -> vector<8x32x1xf32>
    %27 = vector.broadcast %26 : vector<8x32x1xf32> to vector<8x32x32xf32>
    %28 = arith.mulf %23, %27 : vector<8x32x32xf32>
    "tpu.trace_start"() <{level = 10 : i32, message = "bst,bte->bse"}> : () -> ()
    %cst_15 = arith.constant dense<0.000000e+00> : vector<8x32x32xf32>
    %29 = tpu.matmul %28, %17, %cst_15 {dimension_numbers = #tpu.dot_dimension_numbers<[2], [1], [1], [2], [0, 0, 0, 1, 1, 2], [0], [0]>} : vector<8x32x32xf32>, vector<8x32x32xf32>, vector<8x32x32xf32> -> vector<8x32x32xf32>
    "tpu.trace_stop"() : () -> ()
    %30 = vector.shape_cast %29 : vector<8x32x32xf32> to vector<256x32xf32>
    %cst_16 = arith.constant dense<0.000000e+00> : vector<256x32xf32>
    %31 = tpu.matmul %30, %4, %cst_16 {dimension_numbers = #tpu.dot_dimension_numbers<[1], [0], [0], [1], [0, 0, 1, 1], [], []>} : vector<256x32xf32>, vector<32x32xf32>, vector<256x32xf32> -> vector<256x32xf32>
    %32 = vector.broadcast %5 : vector<1x32xf32> to vector<256x32xf32>
    %33 = arith.addf %31, %32 : vector<256x32xf32>
    %34 = vector.shape_cast %33 : vector<256x32xf32> to vector<8x32x32xf32>
    %c0_17 = arith.constant 0 : index
    %c0_18 = arith.constant 0 : index
    %c0_19 = arith.constant 0 : index
    %35 = vector.load %arg6[%c0_17, %c0_18, %c0_19] : memref<8x32x32xf32, #tpu.memory_space<vmem>>, vector<8x32x32xf32>
    tpu.vector_store %arg6[%c0_17, %c0_18, %c0_19], %34 {strides = array<i32>} : memref<8x32x32xf32, #tpu.memory_space<vmem>>, vector<8x32x32xf32>,
    return
  }
  func.func @transform_0(%arg0: i32) -> (i32, i32, i32, i32) {
    %c0_i32 = arith.constant 0 : i32
    %c0_i32_0 = arith.constant 0 : i32
    %c0_i32_1 = arith.constant 0 : i32
    %c0_i32_2 = arith.constant 0 : i32
    return %arg0, %c0_i32, %c0_i32_0, %c0_i32_1 : i32, i32, i32, i32
  }
  func.func @transform_1(%arg0: i32) -> (i32, i32) {
    %c0_i32 = arith.constant 0 : i32
    %c0_i32_0 = arith.constant 0 : i32
    %c0_i32_1 = arith.constant 0 : i32
    return %c0_i32, %c0_i32_0 : i32, i32
  }
  func.func @transform_2(%arg0: i32) -> (i32, i32) {
    %c0_i32 = arith.constant 0 : i32
    %c0_i32_0 = arith.constant 0 : i32
    %c0_i32_1 = arith.constant 0 : i32
    return %c0_i32, %c0_i32_0 : i32, i32
  }
  func.func @transform_3(%arg0: i32) -> (i32, i32) {
    %c0_i32 = arith.constant 0 : i32
    %c0_i32_0 = arith.constant 0 : i32
    %c0_i32_1 = arith.constant 0 : i32
    return %c0_i32, %c0_i32_0 : i32, i32
  }
  func.func @transform_4(%arg0: i32) -> (i32, i32) {
    %c0_i32 = arith.constant 0 : i32
    %c0_i32_0 = arith.constant 0 : i32
    %c0_i32_1 = arith.constant 0 : i32
    return %c0_i32, %c0_i32_0 : i32, i32
  }
  func.func @transform_5(%arg0: i32) -> (i32, i32, i32) {
    %c0_i32 = arith.constant 0 : i32
    %c0_i32_0 = arith.constant 0 : i32
    %c0_i32_1 = arith.constant 0 : i32
    return %arg0, %c0_i32, %c0_i32_0 : i32, i32, i32
  }
}

</mosaic_0001>

<llo_original>
// kernel: tpu_custom_call.1
$region0: #{tpu_custom_call.1}
  #allocation0 [shape = 'u32[]', space=smem, size = 0x4, offset = 0x4, fixed_abs, tag = 'smem constant byte address 0x4 - core index']
  #allocation1 [shape = 'u32[144,128]{1,0:T(1,128)}', space=vmem, size = 0x12000, scoped, tag = 'internal scratch']
  %s0 = inlined_call_operand.hbm [shape: f32[8,3,32,32], index: 0, kind: input, shape index: {}]
  %s1 = inlined_call_operand.hbm [shape: f32[32,64], index: 1, kind: input, shape index: {}]
  %s2 = inlined_call_operand.vmem [shape: f32[1,64], index: 2, kind: input, shape index: {}]
  %s3 = inlined_call_operand.hbm [shape: f32[32,32], index: 3, kind: input, shape index: {}]
  %s4 = inlined_call_operand.vmem [shape: f32[1,32], index: 4, kind: input, shape index: {}]
  %s5 = inlined_call_operand.hbm [shape: f32[8,32,32], index: 5, kind: output, shape index: {}]
  %s6 = sld [smem:[#allocation0]]
  $region42: #{tpu_custom_call.1} parent=0
    _
  %s8 = ssub.s32 1, %s6
  %s9 = scalar_select 0, %s8, %s6
  $region1: #{tpu_custom_call.1} parent=0
    #allocation2 [shape = 'u8[393216]{0}', space=vmem, size = 0x60000, scoped, tag = 'input window, operand 0, single buffered']
    #allocation3 [shape = 's32[1]{0}', space=sflag, size = 0x4, scoped, tag = 'scoped memory for tpu_custom_call.1']
    #allocation4 [shape = 's32[1]{0}', space=sflag, size = 0x4, scoped, tag = 'scoped memory for tpu_custom_call.1']
    #allocation5 [shape = 'u8[16384]{0}', space=vmem, size = 0x4000, scoped, tag = 'input window, operand 1, single buffered']
    #allocation6 [shape = 's32[1]{0}', space=sflag, size = 0x4, scoped, tag = 'scoped memory for tpu_custom_call.1']
    #allocation7 [shape = 'u8[16384]{0}', space=vmem, size = 0x4000, scoped, tag = 'input window, operand 3, single buffered']
    #allocation8 [shape = 'u8[131072]{0}', space=vmem, size = 0x20000, scoped, tag = 'output window, operand 0, single buffered']
    %10 = vsyncpa [#allocation3], 0
    %11 = vsyncpa [#allocation6], 0
    %12 = vsyncpa [#allocation4], 0
    // Predicated region
    $region2: #{tpu_custom_call.1} parent=1 // pred_check
      _
    $region3: #{tpu_custom_call.1} parent=1 // pred_check_branch
      %14 = sbr.rel (0) target = $region5
    $region4: #{tpu_custom_call.1} parent=1 // pred_region
      %s16 = ssub.s32 12288, 12288
      %17 = vsyncadd [#allocation3], %s16
      %s18 = sshll.u32 [#allocation2], 4
      %s19 = int_to_ptr.vmem [resolvable:$true] %s18
      %24 = dma.hbm_to_vmem [thread:$0]  %s0, 12288, %s19, [#allocation3], 128, 128, 8
    $region5: #{tpu_custom_call.1} parent=1 // pred_fallthru
      _
    // Predicated region
    $region6: #{tpu_custom_call.1} parent=1 // pred_check
      _
    $region7: #{tpu_custom_call.1} parent=1 // pred_check_branch
      %26 = sbr.rel (0) target = $region9
    $region8: #{tpu_custom_call.1} parent=1 // pred_region
      %s28 = ssub.s32 512, 512
      %29 = vsyncadd [#allocation6], %s28
      %s30 = sshll.u32 [#allocation5], 4
      %s31 = int_to_ptr.vmem [resolvable:$true] %s30
      %36 = dma.hbm_to_vmem [thread:$0]  %s1, 512, %s31, [#allocation6], 128, 128, 8
    $region9: #{tpu_custom_call.1} parent=1 // pred_fallthru
      _
    // Predicated region
    $region10: #{tpu_custom_call.1} parent=1 // pred_check
      _
    $region11: #{tpu_custom_call.1} parent=1 // pred_check_branch
      %38 = sbr.rel (0) target = $region13
    $region12: #{tpu_custom_call.1} parent=1 // pred_region
      _
    $region13: #{tpu_custom_call.1} parent=1 // pred_fallthru
      _
    // Predicated region
    $region14: #{tpu_custom_call.1} parent=1 // pred_check
      _
    $region15: #{tpu_custom_call.1} parent=1 // pred_check_branch
      %40 = sbr.rel (0) target = $region17
    $region16: #{tpu_custom_call.1} parent=1 // pred_region
      %s42 = ssub.s32 512, 512
      %43 = vsyncadd [#allocation6], %s42
      %s44 = sshll.u32 [#allocation7], 4
      %s45 = int_to_ptr.vmem [resolvable:$true] %s44
      %50 = dma.hbm_to_vmem [thread:$0]  %s3, 512, %s45, [#allocation6], 128, 128, 8
    $region17: #{tpu_custom_call.1} parent=1 // pred_fallthru
      _
    // Predicated region
    $region18: #{tpu_custom_call.1} parent=1 // pred_check
      _
    $region19: #{tpu_custom_call.1} parent=1 // pred_check_branch
      %52 = sbr.rel (0) target = $region21
    $region20: #{tpu_custom_call.1} parent=1 // pred_region
      _
    $region21: #{tpu_custom_call.1} parent=1 // pred_fallthru
      _
    // Predicated region
    $region22: #{tpu_custom_call.1} parent=1 // pred_check
      _
    $region23: #{tpu_custom_call.1} parent=1 // pred_check_branch
      %54 = sbr.rel (0) target = $region25
    $region24: #{tpu_custom_call.1} parent=1 // pred_region
      %55 = dma.done [#allocation3], 12288
    $region25: #{tpu_custom_call.1} parent=1 // pred_fallthru
      _
    // Predicated region
    $region26: #{tpu_custom_call.1} parent=1 // pred_check
      _
    $region27: #{tpu_custom_call.1} parent=1 // pred_check_branch
      %57 = sbr.rel (0) target = $region29
    $region28: #{tpu_custom_call.1} parent=1 // pred_region
      %58 = dma.done [#allocation6], 512
    $region29: #{tpu_custom_call.1} parent=1 // pred_fallthru
      _
    // Predicated region
    $region30: #{tpu_custom_call.1} parent=1 // pred_check
      _
    $region31: #{tpu_custom_call.1} parent=1 // pred_check_branch
      %60 = sbr.rel (0) target = $region33
    $region32: #{tpu_custom_call.1} parent=1 // pred_region
      %61 = dma.done [#allocation6], 512
    $region33: #{tpu_custom_call.1} parent=1 // pred_fallthru
      _
    %v62 = vld [vmem:[#allocation2] sm:$0xff]
    %v63 = vld [vmem:[#allocation2 + $0x8] sm:$0xff]
    %v64 = vld [vmem:[#allocation2 + $0x10] sm:$0xff]
    %v65 = vld [vmem:[#allocation2 + $0x18] sm:$0xff]
    %v66 = vld [vmem:[#allocation2 + $0x20] sm:$0xff]
    %v67 = vld [vmem:[#allocation2 + $0x28] sm:$0xff]
    %v68 = vld [vmem:[#allocation2 + $0x30] sm:$0xff]
    %v69 = vld [vmem:[#allocation2 + $0x38] sm:$0xff]
    %v70 = vld [vmem:[#allocation2 + $0x40] sm:$0xff]
    %v71 = vld [vmem:[#allocation2 + $0x48] sm:$0xff]
    %v72 = vld [vmem:[#allocation2 + $0x50] sm:$0xff]
    %v73 = vld [vmem:[#allocation2 + $0x58] sm:$0xff]
    %v74 = vld [vmem:[#allocation2 + $0x60] sm:$0xff]
    %v75 = vld [vmem:[#allocation2 + $0x68] sm:$0xff]
    %v76 = vld [vmem:[#allocation2 + $0x70] sm:$0xff]
    %v77 = vld [vmem:[#allocation2 + $0x78] sm:$0xff]
    %v78 = vld [vmem:[#allocation2 + $0x80] sm:$0xff]
    %v79 = vld [vmem:[#allocation2 + $0x88] sm:$0xff]
    %v80 = vld [vmem:[#allocation2 + $0x90] sm:$0xff]
    %v81 = vld [vmem:[#allocation2 + $0x98] sm:$0xff]
    %v82 = vld [vmem:[#allocation2 + $0xa0] sm:$0xff]
    %v83 = vld [vmem:[#allocation2 + $0xa8] sm:$0xff]
    %v84 = vld [vmem:[#allocation2 + $0xb0] sm:$0xff]
    %v85 = vld [vmem:[#allocation2 + $0xb8] sm:$0xff]
    %v86 = vld [vmem:[#allocation2 + $0xc0] sm:$0xff]
    %v87 = vld [vmem:[#allocation2 + $0xc8] sm:$0xff]
    %v88 = vld [vmem:[#allocation2 + $0xd0] sm:$0xff]
    %v89 = vld [vmem:[#allocation2 + $0xd8] sm:$0xff]
    %v90 = vld [vmem:[#allocation2 + $0xe0] sm:$0xff]
    %v91 = vld [vmem:[#allocation2 + $0xe8] sm:$0xff]
    %v92 = vld [vmem:[#allocation2 + $0xf0] sm:$0xff]
    %v93 = vld [vmem:[#allocation2 + $0xf8] sm:$0xff]
    %v94 = vld [vmem:[#allocation2 + $0x100] sm:$0xff]
    %v95 = vld [vmem:[#allocation2 + $0x108] sm:$0xff]
    %v96 = vld [vmem:[#allocation2 + $0x110] sm:$0xff]
    %v97 = vld [vmem:[#allocation2 + $0x118] sm:$0xff]
    %v98 = vld [vmem:[#allocation2 + $0x120] sm:$0xff]
    %v99 = vld [vmem:[#allocation2 + $0x128] sm:$0xff]
    %v100 = vld [vmem:[#allocation2 + $0x130] sm:$0xff]
    %v101 = vld [vmem:[#allocation2 + $0x138] sm:$0xff]
    %v102 = vld [vmem:[#allocation2 + $0x140] sm:$0xff]
    %v103 = vld [vmem:[#allocation2 + $0x148] sm:$0xff]
    %v104 = vld [vmem:[#allocation2 + $0x150] sm:$0xff]
    %v105 = vld [vmem:[#allocation2 + $0x158] sm:$0xff]
    %v106 = vld [vmem:[#allocation2 + $0x160] sm:$0xff]
    %v107 = vld [vmem:[#allocation2 + $0x168] sm:$0xff]
    %v108 = vld [vmem:[#allocation2 + $0x170] sm:$0xff]
    %v109 = vld [vmem:[#allocation2 + $0x178] sm:$0xff]
    %v110 = vld [vmem:[#allocation2 + $0x180] sm:$0xff]
    %v111 = vld [vmem:[#allocation2 + $0x188] sm:$0xff]
    %v112 = vld [vmem:[#allocation2 + $0x190] sm:$0xff]
    %v113 = vld [vmem:[#allocation2 + $0x198] sm:$0xff]
    %v114 = vld [vmem:[#allocation2 + $0x1a0] sm:$0xff]
    %v115 = vld [vmem:[#allocation2 + $0x1a8] sm:$0xff]
    %v116 = vld [vmem:[#allocation2 + $0x1b0] sm:$0xff]
    %v117 = vld [vmem:[#allocation2 + $0x1b8] sm:$0xff]
    %v118 = vld [vmem:[#allocation2 + $0x1c0] sm:$0xff]
    %v119 = vld [vmem:[#allocation2 + $0x1c8] sm:$0xff]
    %v120 = vld [vmem:[#allocation2 + $0x1d0] sm:$0xff]
    %v121 = vld [vmem:[#allocation2 + $0x1d8] sm:$0xff]
    %v122 = vld [vmem:[#allocation2 + $0x1e0] sm:$0xff]
    %v123 = vld [vmem:[#allocation2 + $0x1e8] sm:$0xff]
    %v124 = vld [vmem:[#allocation2 + $0x1f0] sm:$0xff]
    %v125 = vld [vmem:[#allocation2 + $0x1f8] sm:$0xff]
    %v126 = vld [vmem:[#allocation2 + $0x200] sm:$0xff]
    %v127 = vld [vmem:[#allocation2 + $0x208] sm:$0xff]
    %v128 = vld [vmem:[#allocation2 + $0x210] sm:$0xff]
    %v129 = vld [vmem:[#allocation2 + $0x218] sm:$0xff]
    %v130 = vld [vmem:[#allocation2 + $0x220] sm:$0xff]
    %v131 = vld [vmem:[#allocation2 + $0x228] sm:$0xff]
    %v132 = vld [vmem:[#allocation2 + $0x230] sm:$0xff]
    %v133 = vld [vmem:[#allocation2 + $0x238] sm:$0xff]
    %v134 = vld [vmem:[#allocation2 + $0x240] sm:$0xff]
    %v135 = vld [vmem:[#allocation2 + $0x248] sm:$0xff]
    %v136 = vld [vmem:[#allocation2 + $0x250] sm:$0xff]
    %v137 = vld [vmem:[#allocation2 + $0x258] sm:$0xff]
    %v138 = vld [vmem:[#allocation2 + $0x260] sm:$0xff]
    %v139 = vld [vmem:[#allocation2 + $0x268] sm:$0xff]
    %v140 = vld [vmem:[#allocation2 + $0x270] sm:$0xff]
    %v141 = vld [vmem:[#allocation2 + $0x278] sm:$0xff]
    %v142 = vld [vmem:[#allocation2 + $0x280] sm:$0xff]
    %v143 = vld [vmem:[#allocation2 + $0x288] sm:$0xff]
    %v144 = vld [vmem:[#allocation2 + $0x290] sm:$0xff]
    %v145 = vld [vmem:[#allocation2 + $0x298] sm:$0xff]
    %v146 = vld [vmem:[#allocation2 + $0x2a0] sm:$0xff]
    %v147 = vld [vmem:[#allocation2 + $0x2a8] sm:$0xff]
    %v148 = vld [vmem:[#allocation2 + $0x2b0] sm:$0xff]
    %v149 = vld [vmem:[#allocation2 + $0x2b8] sm:$0xff]
    %v150 = vld [vmem:[#allocation2 + $0x2c0] sm:$0xff]
    %v151 = vld [vmem:[#allocation2 + $0x2c8] sm:$0xff]
    %v152 = vld [vmem:[#allocation2 + $0x2d0] sm:$0xff]
    %v153 = vld [vmem:[#allocation2 + $0x2d8] sm:$0xff]
    %v154 = vld [vmem:[#allocation2 + $0x2e0] sm:$0xff]
    %v155 = vld [vmem:[#allocation2 + $0x2e8] sm:$0xff]
    %v156 = vld [vmem:[#allocation2 + $0x2f0] sm:$0xff]
    %v157 = vld [vmem:[#allocation2 + $0x2f8] sm:$0xff]
    %v158 = vld [vmem:[#allocation5] sm:$0xff]
    %v159 = vld [vmem:[#allocation5 + $0x8] sm:$0xff]
    %v160 = vld [vmem:[#allocation5 + $0x10] sm:$0xff]
    %v161 = vld [vmem:[#allocation5 + $0x18] sm:$0xff]
    %v162 = vld [vmem:[%s2] sm:$0x1]
    %v163 = vld [vmem:[#allocation7] sm:$0xff]
    %v164 = vld [vmem:[#allocation7 + $0x8] sm:$0xff]
    %v165 = vld [vmem:[#allocation7 + $0x10] sm:$0xff]
    %v166 = vld [vmem:[#allocation7 + $0x18] sm:$0xff]
    %v167 = vld [vmem:[%s4] sm:$0x1]
    %v169 = vlaneseq
    %v170 = vshrl.u32 %v169, 7
    %v171 = vsub.s32 0, %v170
    %v172 = vrot.slane %v162, %v171
    %vm174 = vcmask 261120
    %v176 = vsel %vm174, %v62, 0
    %v179 = vsel %vm174, %v63, 0
    %v182 = vsel %vm174, %v64, 0
    %v185 = vsel %vm174, %v65, 0
    %v188 = vsel %vm174, %v66, 0
    %v191 = vsel %vm174, %v67, 0
    %v194 = vsel %vm174, %v68, 0
    %v197 = vsel %vm174, %v69, 0
    %v200 = vsel %vm174, %v70, 0
    %v203 = vsel %vm174, %v71, 0
    %v206 = vsel %vm174, %v72, 0
    %v209 = vsel %vm174, %v73, 0
    %v212 = vsel %vm174, %v74, 0
    %v215 = vsel %vm174, %v75, 0
    %v218 = vsel %vm174, %v76, 0
    %v221 = vsel %vm174, %v77, 0
    %v224 = vsel %vm174, %v78, 0
    %v227 = vsel %vm174, %v79, 0
    %v230 = vsel %vm174, %v80, 0
    %v233 = vsel %vm174, %v81, 0
    %v236 = vsel %vm174, %v82, 0
    %v239 = vsel %vm174, %v83, 0
    %v242 = vsel %vm174, %v84, 0
    %v245 = vsel %vm174, %v85, 0
    %v248 = vsel %vm174, %v86, 0
    %v251 = vsel %vm174, %v87, 0
    %v254 = vsel %vm174, %v88, 0
    %v257 = vsel %vm174, %v89, 0
    %v260 = vsel %vm174, %v90, 0
    %v263 = vsel %vm174, %v91, 0
    %v266 = vsel %vm174, %v92, 0
    %v269 = vsel %vm174, %v93, 0
    %v272 = vsel %vm174, %v94, 0
    %v275 = vsel %vm174, %v95, 0
    %v278 = vsel %vm174, %v96, 0
    %v281 = vsel %vm174, %v97, 0
    %v284 = vsel %vm174, %v98, 0
    %v287 = vsel %vm174, %v99, 0
    %v290 = vsel %vm174, %v100, 0
    %v293 = vsel %vm174, %v101, 0
    %v296 = vsel %vm174, %v102, 0
    %v299 = vsel %vm174, %v103, 0
    %v302 = vsel %vm174, %v104, 0
    %v305 = vsel %vm174, %v105, 0
    %v308 = vsel %vm174, %v106, 0
    %v311 = vsel %vm174, %v107, 0
    %v314 = vsel %vm174, %v108, 0
    %v317 = vsel %vm174, %v109, 0
    %v320 = vsel %vm174, %v110, 0
    %v323 = vsel %vm174, %v111, 0
    %v326 = vsel %vm174, %v112, 0
    %v329 = vsel %vm174, %v113, 0
    %v332 = vsel %vm174, %v114, 0
    %v335 = vsel %vm174, %v115, 0
    %v338 = vsel %vm174, %v116, 0
    %v341 = vsel %vm174, %v117, 0
    %v344 = vsel %vm174, %v118, 0
    %v347 = vsel %vm174, %v119, 0
    %v350 = vsel %vm174, %v120, 0
    %v353 = vsel %vm174, %v121, 0
    %v356 = vsel %vm174, %v122, 0
    %v359 = vsel %vm174, %v123, 0
    %v362 = vsel %vm174, %v124, 0
    %v365 = vsel %vm174, %v125, 0
    %v368 = vsel %vm174, %v126, 0
    %v371 = vsel %vm174, %v127, 0
    %v374 = vsel %vm174, %v128, 0
    %v377 = vsel %vm174, %v129, 0
    %v380 = vsel %vm174, %v130, 0
    %v383 = vsel %vm174, %v131, 0
    %v386 = vsel %vm174, %v132, 0
    %v389 = vsel %vm174, %v133, 0
    %v392 = vsel %vm174, %v134, 0
    %v395 = vsel %vm174, %v135, 0
    %v398 = vsel %vm174, %v136, 0
    %v401 = vsel %vm174, %v137, 0
    %v404 = vsel %vm174, %v138, 0
    %v407 = vsel %vm174, %v139, 0
    %v410 = vsel %vm174, %v140, 0
    %v413 = vsel %vm174, %v141, 0
    %v416 = vsel %vm174, %v142, 0
    %v419 = vsel %vm174, %v143, 0
    %v422 = vsel %vm174, %v144, 0
    %v425 = vsel %vm174, %v145, 0
    %v428 = vsel %vm174, %v146, 0
    %v431 = vsel %vm174, %v147, 0
    %v434 = vsel %vm174, %v148, 0
    %v437 = vsel %vm174, %v149, 0
    %v440 = vsel %vm174, %v150, 0
    %v443 = vsel %vm174, %v151, 0
    %v446 = vsel %vm174, %v152, 0
    %v449 = vsel %vm174, %v153, 0
    %v452 = vsel %vm174, %v154, 0
    %v455 = vsel %vm174, %v155, 0
    %v458 = vsel %vm174, %v156, 0
    %v461 = vsel %vm174, %v157, 0
    %463 = vmatprep.subr.mxu0 0.0
    %464 = vmatpush1.msra.mxu0 %v158
    %465 = vmatprep.subr.mxu0 0.0
    %466 = vmatpush1.msra.mxu0 %v159
    %467 = vmatprep.subr.mxu0 0.0
    %468 = vmatpush1.msra.mxu0 %v160
    %469 = vmatprep.subr.mxu0 0.0
    %470 = vmatpush1.msra.mxu0 %v161
    %471 = vmatprep.subr.mxu0 0.0
    %472 = vmatpush1.msra.mxu0 0.0
    %473 = vmatprep.subr.mxu0 0.0
    %474 = vmatpush1.msra.mxu0 0.0
    %475 = vmatprep.subr.mxu0 0.0
    %476 = vmatpush1.msra.mxu0 0.0
    %477 = vmatprep.subr.mxu0 0.0
    %478 = vmatpush1.msra.mxu0 0.0
    %479 = vmatprep.subr.mxu0 0.0
    %480 = vmatpush1.msra.mxu0 0.0
    %481 = vmatprep.subr.mxu0 0.0
    %482 = vmatpush1.msra.mxu0 0.0
    %483 = vmatprep.subr.mxu0 0.0
    %484 = vmatpush1.msra.mxu0 0.0
    %485 = vmatprep.subr.mxu0 0.0
    %486 = vmatpush1.msra.mxu0 0.0
    %487 = vmatprep.subr.mxu0 0.0
    %488 = vmatpush1.msra.mxu0 0.0
    %489 = vmatprep.subr.mxu0 0.0
    %490 = vmatpush1.msra.mxu0 0.0
    %491 = vmatprep.subr.mxu0 0.0
    %492 = vmatpush1.msra.mxu0 0.0
    %493 = vmatprep.subr.mxu0 0.0
    %494 = vmatpush1.msra.mxu0 0.0
    %495 = vmatprep.subr.mxu0 0.0
    %496 = vmatpush1.msra.mxu0 0.0
    %497 = vmatprep.subr.mxu0 0.0
    %498 = vmatpush1.msra.mxu0 0.0
    %499 = vmatprep.subr.mxu0 0.0
    %500 = vmatpush1.msra.mxu0 0.0
    %501 = vmatprep.subr.mxu0 0.0
    %502 = vmatpush1.msra.mxu0 0.0
    %503 = vmatprep.subr.mxu0 0.0
    %504 = vmatpush1.msra.mxu0 0.0
    %505 = vmatprep.subr.mxu0 0.0
    %506 = vmatpush1.msra.mxu0 0.0
    %507 = vmatprep.subr.mxu0 0.0
    %508 = vmatpush1.msra.mxu0 0.0
    %509 = vmatprep.subr.mxu0 0.0
    %510 = vmatpush1.msra.mxu0 0.0
    %511 = vmatprep.subr.mxu0 0.0
    %512 = vmatpush1.msra.mxu0 0.0
    %513 = vmatprep.subr.mxu0 0.0
    %514 = vmatpush1.msra.mxu0 0.0
    %515 = vmatprep.subr.mxu0 0.0
    %516 = vmatpush1.msra.mxu0 0.0
    %517 = vmatprep.subr.mxu0 0.0
    %518 = vmatpush1.msra.mxu0 0.0
    %519 = vmatprep.subr.mxu0 0.0
    %520 = vmatpush1.msra.mxu0 0.0
    %521 = vmatprep.subr.mxu0 0.0
    %522 = vmatpush1.msra.mxu0 0.0
    %523 = vmatprep.subr.mxu0 0.0
    %524 = vmatpush1.msra.mxu0 0.0
    %525 = vmatprep.subr.mxu0 0.0
    %526 = vmatpush1.msra.mxu0 0.0
    %527 = vmatprep.mubr.f32.mxu0 0.0
    %528 = vmatmul.mubr.f32.gmra.mrb[0].mxu0 %v176
    %v529 = vpop.f32.mrb[0].mxu0
    %v530 = vadd.f32 %v172, %v529
    %v531 = vpop.f32.mrb[0].mxu0
    %532 = vmatprep.mubr.f32.mxu0 0.0
    %533 = vmatmul.mubr.f32.gmra.mrb[0].mxu0 %v179
    %v534 = vpop.f32.mrb[0].mxu0
    %v535 = vadd.f32 %v172, %v534
    %v536 = vpop.f32.mrb[0].mxu0
    %537 = vmatprep.mubr.f32.mxu0 0.0
    %538 = vmatmul.mubr.f32.gmra.mrb[0].mxu0 %v182
    %v539 = vpop.f32.mrb[0].mxu0
    %v540 = vadd.f32 %v172, %v539
    %v541 = vpop.f32.mrb[0].mxu0
    %542 = vmatprep.mubr.f32.mxu0 0.0
    %543 = vmatmul.mubr.f32.gmra.mrb[0].mxu0 %v185
    %v544 = vpop.f32.mrb[0].mxu0
    %v545 = vadd.f32 %v172, %v544
    %v546 = vpop.f32.mrb[0].mxu0
    %547 = vmatprep.mubr.f32.mxu0 0.0
    %548 = vmatmul.mubr.f32.gmra.mrb[0].mxu0 %v188
    %v549 = vpop.f32.mrb[0].mxu0
    %v550 = vadd.f32 %v172, %v549
    %v551 = vpop.f32.mrb[0].mxu0
    %552 = vmatprep.mubr.f32.mxu0 0.0
    %553 = vmatmul.mubr.f32.gmra.mrb[0].mxu0 %v191
    %v554 = vpop.f32.mrb[0].mxu0
    %v555 = vadd.f32 %v172, %v554
    %v556 = vpop.f32.mrb[0].mxu0
    %557 = vmatprep.mubr.f32.mxu0 0.0
    %558 = vmatmul.mubr.f32.gmra.mrb[0].mxu0 %v194
    %v559 = vpop.f32.mrb[0].mxu0
    %v560 = vadd.f32 %v172, %v559
    %v561 = vpop.f32.mrb[0].mxu0
    %562 = vmatprep.mubr.f32.mxu0 0.0
    %563 = vmatmul.mubr.f32.gmra.mrb[0].mxu0 %v197
    %v564 = vpop.f32.mrb[0].mxu0
    %v565 = vadd.f32 %v172, %v564
    %v566 = vpop.f32.mrb[0].mxu0
    %567 = vmatprep.mubr.f32.mxu0 0.0
    %568 = vmatmul.mubr.f32.gmra.mrb[0].mxu0 %v200
    %v569 = vpop.f32.mrb[0].mxu0
    %v570 = vadd.f32 %v172, %v569
    %v571 = vpop.f32.mrb[0].mxu0
    %572 = vmatprep.mubr.f32.mxu0 0.0
    %573 = vmatmul.mubr.f32.gmra.mrb[0].mxu0 %v203
    %v574 = vpop.f32.mrb[0].mxu0
    %v575 = vadd.f32 %v172, %v574
    %v576 = vpop.f32.mrb[0].mxu0
    %577 = vmatprep.mubr.f32.mxu0 0.0
    %578 = vmatmul.mubr.f32.gmra.mrb[0].mxu0 %v206
    %v579 = vpop.f32.mrb[0].mxu0
    %v580 = vadd.f32 %v172, %v579
    %v581 = vpop.f32.mrb[0].mxu0
    %582 = vmatprep.mubr.f32.mxu0 0.0
    %583 = vmatmul.mubr.f32.gmra.mrb[0].mxu0 %v209
    %v584 = vpop.f32.mrb[0].mxu0
    %v585 = vadd.f32 %v172, %v584
    %v586 = vpop.f32.mrb[0].mxu0
    %587 = vmatprep.mubr.f32.mxu0 0.0
    %588 = vmatmul.mubr.f32.gmra.mrb[0].mxu0 %v212
    %v589 = vpop.f32.mrb[0].mxu0
    %v590 = vadd.f32 %v172, %v589
    %v591 = vpop.f32.mrb[0].mxu0
    %592 = vmatprep.mubr.f32.mxu0 0.0
    %593 = vmatmul.mubr.f32.gmra.mrb[0].mxu0 %v215
    %v594 = vpop.f32.mrb[0].mxu0
    %v595 = vadd.f32 %v172, %v594
    %v596 = vpop.f32.mrb[0].mxu0
    %597 = vmatprep.mubr.f32.mxu0 0.0
    %598 = vmatmul.mubr.f32.gmra.mrb[0].mxu0 %v218
    %v599 = vpop.f32.mrb[0].mxu0
    %v600 = vadd.f32 %v172, %v599
    %v601 = vpop.f32.mrb[0].mxu0
    %602 = vmatprep.mubr.f32.mxu0 0.0
    %603 = vmatmul.mubr.f32.gmra.mrb[0].mxu0 %v221
    %v604 = vpop.f32.mrb[0].mxu0
    %v605 = vadd.f32 %v172, %v604
    %v606 = vpop.f32.mrb[0].mxu0
    %607 = vmatprep.mubr.f32.mxu0 0.0
    %608 = vmatmul.mubr.f32.gmra.mrb[0].mxu0 %v224
    %v609 = vpop.f32.mrb[0].mxu0
    %v610 = vadd.f32 %v172, %v609
    %v611 = vpop.f32.mrb[0].mxu0
    %612 = vmatprep.mubr.f32.mxu0 0.0
    %613 = vmatmul.mubr.f32.gmra.mrb[0].mxu0 %v227
    %v614 = vpop.f32.mrb[0].mxu0
    %v615 = vadd.f32 %v172, %v614
    %v616 = vpop.f32.mrb[0].mxu0
    %617 = vmatprep.mubr.f32.mxu0 0.0
    %618 = vmatmul.mubr.f32.gmra.mrb[0].mxu0 %v230
    %v619 = vpop.f32.mrb[0].mxu0
    %v620 = vadd.f32 %v172, %v619
    %v621 = vpop.f32.mrb[0].mxu0
    %622 = vmatprep.mubr.f32.mxu0 0.0
    %623 = vmatmul.mubr.f32.gmra.mrb[0].mxu0 %v233
    %v624 = vpop.f32.mrb[0].mxu0
    %v625 = vadd.f32 %v172, %v624
    %v626 = vpop.f32.mrb[0].mxu0
    %627 = vmatprep.mubr.f32.mxu0 0.0
    %628 = vmatmul.mubr.f32.gmra.mrb[0].mxu0 %v236
    %v629 = vpop.f32.mrb[0].mxu0
    %v630 = vadd.f32 %v172, %v629
    %v631 = vpop.f32.mrb[0].mxu0
    %632 = vmatprep.mubr.f32.mxu0 0.0
    %633 = vmatmul.mubr.f32.gmra.mrb[0].mxu0 %v239
    %v634 = vpop.f32.mrb[0].mxu0
    %v635 = vadd.f32 %v172, %v634
    %v636 = vpop.f32.mrb[0].mxu0
    %637 = vmatprep.mubr.f32.mxu0 0.0
    %638 = vmatmul.mubr.f32.gmra.mrb[0].mxu0 %v242
    %v639 = vpop.f32.mrb[0].mxu0
    %v640 = vadd.f32 %v172, %v639
    %v641 = vpop.f32.mrb[0].mxu0
    %642 = vmatprep.mubr.f32.mxu0 0.0
    %643 = vmatmul.mubr.f32.gmra.mrb[0].mxu0 %v245
    %v644 = vpop.f32.mrb[0].mxu0
    %v645 = vadd.f32 %v172, %v644
    %v646 = vpop.f32.mrb[0].mxu0
    %647 = vmatprep.mubr.f32.mxu0 0.0
    %648 = vmatmul.mubr.f32.gmra.mrb[0].mxu0 %v248
    %v649 = vpop.f32.mrb[0].mxu0
    %v650 = vadd.f32 %v172, %v649
    %v651 = vpop.f32.mrb[0].mxu0
    %652 = vmatprep.mubr.f32.mxu0 0.0
    %653 = vmatmul.mubr.f32.gmra.mrb[0].mxu0 %v251
    %v654 = vpop.f32.mrb[0].mxu0
    %v655 = vadd.f32 %v172, %v654
    %v656 = vpop.f32.mrb[0].mxu0
    %657 = vmatprep.mubr.f32.mxu0 0.0
    %658 = vmatmul.mubr.f32.gmra.mrb[0].mxu0 %v254
    %v659 = vpop.f32.mrb[0].mxu0
    %v660 = vadd.f32 %v172, %v659
    %v661 = vpop.f32.mrb[0].mxu0
    %662 = vmatprep.mubr.f32.mxu0 0.0
    %663 = vmatmul.mubr.f32.gmra.mrb[0].mxu0 %v257
    %v664 = vpop.f32.mrb[0].mxu0
    %v665 = vadd.f32 %v172, %v664
    %v666 = vpop.f32.mrb[0].mxu0
    %667 = vmatprep.mubr.f32.mxu0 0.0
    %668 = vmatmul.mubr.f32.gmra.mrb[0].mxu0 %v260
    %v669 = vpop.f32.mrb[0].mxu0
    %v670 = vadd.f32 %v172, %v669
    %v671 = vpop.f32.mrb[0].mxu0
    %672 = vmatprep.mubr.f32.mxu0 0.0
    %673 = vmatmul.mubr.f32.gmra.mrb[0].mxu0 %v263
    %v674 = vpop.f32.mrb[0].mxu0
    %v675 = vadd.f32 %v172, %v674
    %v676 = vpop.f32.mrb[0].mxu0
    %677 = vmatprep.mubr.f32.mxu0 0.0
    %678 = vmatmul.mubr.f32.gmra.mrb[0].mxu0 %v266
    %v679 = vpop.f32.mrb[0].mxu0
    %v680 = vadd.f32 %v172, %v679
    %v681 = vpop.f32.mrb[0].mxu0
    %682 = vmatprep.mubr.f32.mxu0 0.0
    %683 = vmatmul.mubr.f32.gmra.mrb[0].mxu0 %v269
    %v684 = vpop.f32.mrb[0].mxu0
    %v685 = vadd.f32 %v172, %v684
    %v686 = vpop.f32.mrb[0].mxu0
    %687 = vmatprep.mubr.f32.mxu0 0.0
    %688 = vmatmul.mubr.f32.gmra.mrb[0].mxu0 %v272
    %v689 = vpop.f32.mrb[0].mxu0
    %v690 = vadd.f32 %v172, %v689
    %v691 = vpop.f32.mrb[0].mxu0
    %692 = vmatprep.mubr.f32.mxu0 0.0
    %693 = vmatmul.mubr.f32.gmra.mrb[0].mxu0 %v275
    %v694 = vpop.f32.mrb[0].mxu0
    %v695 = vadd.f32 %v172, %v694
    %v696 = vpop.f32.mrb[0].mxu0
    %697 = vmatprep.mubr.f32.mxu0 0.0
    %698 = vmatmul.mubr.f32.gmra.mrb[0].mxu0 %v278
    %v699 = vpop.f32.mrb[0].mxu0
    %v700 = vadd.f32 %v172, %v699
    %v701 = vpop.f32.mrb[0].mxu0
    %702 = vmatprep.mubr.f32.mxu0 0.0
    %703 = vmatmul.mubr.f32.gmra.mrb[0].mxu0 %v281
    %v704 = vpop.f32.mrb[0].mxu0
    %v705 = vadd.f32 %v172, %v704
    %v706 = vpop.f32.mrb[0].mxu0
    %707 = vmatprep.mubr.f32.mxu0 0.0
    %708 = vmatmul.mubr.f32.gmra.mrb[0].mxu0 %v284
    %v709 = vpop.f32.mrb[0].mxu0
    %v710 = vadd.f32 %v172, %v709
    %v711 = vpop.f32.mrb[0].mxu0
    %712 = vmatprep.mubr.f32.mxu0 0.0
    %713 = vmatmul.mubr.f32.gmra.mrb[0].mxu0 %v287
    %v714 = vpop.f32.mrb[0].mxu0
    %v715 = vadd.f32 %v172, %v714
    %v716 = vpop.f32.mrb[0].mxu0
    %717 = vmatprep.mubr.f32.mxu0 0.0
    %718 = vmatmul.mubr.f32.gmra.mrb[0].mxu0 %v290
    %v719 = vpop.f32.mrb[0].mxu0
    %v720 = vadd.f32 %v172, %v719
    %v721 = vpop.f32.mrb[0].mxu0
    %722 = vmatprep.mubr.f32.mxu0 0.0
    %723 = vmatmul.mubr.f32.gmra.mrb[0].mxu0 %v293
    %v724 = vpop.f32.mrb[0].mxu0
    %v725 = vadd.f32 %v172, %v724
    %v726 = vpop.f32.mrb[0].mxu0
    %727 = vmatprep.mubr.f32.mxu0 0.0
    %728 = vmatmul.mubr.f32.gmra.mrb[0].mxu0 %v296
    %v729 = vpop.f32.mrb[0].mxu0
    %v730 = vadd.f32 %v172, %v729
    %v731 = vpop.f32.mrb[0].mxu0
    %732 = vmatprep.mubr.f32.mxu0 0.0
    %733 = vmatmul.mubr.f32.gmra.mrb[0].mxu0 %v299
    %v734 = vpop.f32.mrb[0].mxu0
    %v735 = vadd.f32 %v172, %v734
    %v736 = vpop.f32.mrb[0].mxu0
    %737 = vmatprep.mubr.f32.mxu0 0.0
    %738 = vmatmul.mubr.f32.gmra.mrb[0].mxu0 %v302
    %v739 = vpop.f32.mrb[0].mxu0
    %v740 = vadd.f32 %v172, %v739
    %v741 = vpop.f32.mrb[0].mxu0
    %742 = vmatprep.mubr.f32.mxu0 0.0
    %743 = vmatmul.mubr.f32.gmra.mrb[0].mxu0 %v305
    %v744 = vpop.f32.mrb[0].mxu0
    %v745 = vadd.f32 %v172, %v744
    %v746 = vpop.f32.mrb[0].mxu0
    %747 = vmatprep.mubr.f32.mxu0 0.0
    %748 = vmatmul.mubr.f32.gmra.mrb[0].mxu0 %v308
    %v749 = vpop.f32.mrb[0].mxu0
    %v750 = vadd.f32 %v172, %v749
    %v751 = vpop.f32.mrb[0].mxu0
    %752 = vmatprep.mubr.f32.mxu0 0.0
    %753 = vmatmul.mubr.f32.gmra.mrb[0].mxu0 %v311
    %v754 = vpop.f32.mrb[0].mxu0
    %v755 = vadd.f32 %v172, %v754
    %v756 = vpop.f32.mrb[0].mxu0
    %757 = vmatprep.mubr.f32.mxu0 0.0
    %758 = vmatmul.mubr.f32.gmra.mrb[0].mxu0 %v314
    %v759 = vpop.f32.mrb[0].mxu0
    %v760 = vadd.f32 %v172, %v759
    %v761 = vpop.f32.mrb[0].mxu0
    %762 = vmatprep.mubr.f32.mxu0 0.0
    %763 = vmatmul.mubr.f32.gmra.mrb[0].mxu0 %v317
    %v764 = vpop.f32.mrb[0].mxu0
    %v765 = vadd.f32 %v172, %v764
    %v766 = vpop.f32.mrb[0].mxu0
    %767 = vmatprep.mubr.f32.mxu0 0.0
    %768 = vmatmul.mubr.f32.gmra.mrb[0].mxu0 %v320
    %v769 = vpop.f32.mrb[0].mxu0
    %v770 = vadd.f32 %v172, %v769
    %v771 = vpop.f32.mrb[0].mxu0
    %772 = vmatprep.mubr.f32.mxu0 0.0
    %773 = vmatmul.mubr.f32.gmra.mrb[0].mxu0 %v323
    %v774 = vpop.f32.mrb[0].mxu0
    %v775 = vadd.f32 %v172, %v774
    %v776 = vpop.f32.mrb[0].mxu0
    %777 = vmatprep.mubr.f32.mxu0 0.0
    %778 = vmatmul.mubr.f32.gmra.mrb[0].mxu0 %v326
    %v779 = vpop.f32.mrb[0].mxu0
    %v780 = vadd.f32 %v172, %v779
    %v781 = vpop.f32.mrb[0].mxu0
    %782 = vmatprep.mubr.f32.mxu0 0.0
    %783 = vmatmul.mubr.f32.gmra.mrb[0].mxu0 %v329
    %v784 = vpop.f32.mrb[0].mxu0
    %v785 = vadd.f32 %v172, %v784
    %v786 = vpop.f32.mrb[0].mxu0
    %787 = vmatprep.mubr.f32.mxu0 0.0
    %788 = vmatmul.mubr.f32.gmra.mrb[0].mxu0 %v332
    %v789 = vpop.f32.mrb[0].mxu0
    %v790 = vadd.f32 %v172, %v789
    %v791 = vpop.f32.mrb[0].mxu0
    %792 = vmatprep.mubr.f32.mxu0 0.0
    %793 = vmatmul.mubr.f32.gmra.mrb[0].mxu0 %v335
    %v794 = vpop.f32.mrb[0].mxu0
    %v795 = vadd.f32 %v172, %v794
    %v796 = vpop.f32.mrb[0].mxu0
    %797 = vmatprep.mubr.f32.mxu0 0.0
    %798 = vmatmul.mubr.f32.gmra.mrb[0].mxu0 %v338
    %v799 = vpop.f32.mrb[0].mxu0
    %v800 = vadd.f32 %v172, %v799
    %v801 = vpop.f32.mrb[0].mxu0
    %802 = vmatprep.mubr.f32.mxu0 0.0
    %803 = vmatmul.mubr.f32.gmra.mrb[0].mxu0 %v341
    %v804 = vpop.f32.mrb[0].mxu0
    %v805 = vadd.f32 %v172, %v804
    %v806 = vpop.f32.mrb[0].mxu0
    %807 = vmatprep.mubr.f32.mxu0 0.0
    %808 = vmatmul.mubr.f32.gmra.mrb[0].mxu0 %v344
    %v809 = vpop.f32.mrb[0].mxu0
    %v810 = vadd.f32 %v172, %v809
    %v811 = vpop.f32.mrb[0].mxu0
    %812 = vmatprep.mubr.f32.mxu0 0.0
    %813 = vmatmul.mubr.f32.gmra.mrb[0].mxu0 %v347
    %v814 = vpop.f32.mrb[0].mxu0
    %v815 = vadd.f32 %v172, %v814
    %v816 = vpop.f32.mrb[0].mxu0
    %817 = vmatprep.mubr.f32.mxu0 0.0
    %818 = vmatmul.mubr.f32.gmra.mrb[0].mxu0 %v350
    %v819 = vpop.f32.mrb[0].mxu0
    %v820 = vadd.f32 %v172, %v819
    %v821 = vpop.f32.mrb[0].mxu0
    %822 = vmatprep.mubr.f32.mxu0 0.0
    %823 = vmatmul.mubr.f32.gmra.mrb[0].mxu0 %v353
    %v824 = vpop.f32.mrb[0].mxu0
    %v825 = vadd.f32 %v172, %v824
    %v826 = vpop.f32.mrb[0].mxu0
    %827 = vmatprep.mubr.f32.mxu0 0.0
    %828 = vmatmul.mubr.f32.gmra.mrb[0].mxu0 %v356
    %v829 = vpop.f32.mrb[0].mxu0
    %v830 = vadd.f32 %v172, %v829
    %v831 = vpop.f32.mrb[0].mxu0
    %832 = vmatprep.mubr.f32.mxu0 0.0
    %833 = vmatmul.mubr.f32.gmra.mrb[0].mxu0 %v359
    %v834 = vpop.f32.mrb[0].mxu0
    %v835 = vadd.f32 %v172, %v834
    %v836 = vpop.f32.mrb[0].mxu0
    %837 = vmatprep.mubr.f32.mxu0 0.0
    %838 = vmatmul.mubr.f32.gmra.mrb[0].mxu0 %v362
    %v839 = vpop.f32.mrb[0].mxu0
    %v840 = vadd.f32 %v172, %v839
    %v841 = vpop.f32.mrb[0].mxu0
    %842 = vmatprep.mubr.f32.mxu0 0.0
    %843 = vmatmul.mubr.f32.gmra.mrb[0].mxu0 %v365
    %v844 = vpop.f32.mrb[0].mxu0
    %v845 = vadd.f32 %v172, %v844
    %v846 = vpop.f32.mrb[0].mxu0
    %847 = vmatprep.mubr.f32.mxu0 0.0
    %848 = vmatmul.mubr.f32.gmra.mrb[0].mxu0 %v368
    %v849 = vpop.f32.mrb[0].mxu0
    %v850 = vadd.f32 %v172, %v849
    %v851 = vpop.f32.mrb[0].mxu0
    %852 = vmatprep.mubr.f32.mxu0 0.0
    %853 = vmatmul.mubr.f32.gmra.mrb[0].mxu0 %v371
    %v854 = vpop.f32.mrb[0].mxu0
    %v855 = vadd.f32 %v172, %v854
    %v856 = vpop.f32.mrb[0].mxu0
    %857 = vmatprep.mubr.f32.mxu0 0.0
    %858 = vmatmul.mubr.f32.gmra.mrb[0].mxu0 %v374
    %v859 = vpop.f32.mrb[0].mxu0
    %v860 = vadd.f32 %v172, %v859
    %v861 = vpop.f32.mrb[0].mxu0
    %862 = vmatprep.mubr.f32.mxu0 0.0
    %863 = vmatmul.mubr.f32.gmra.mrb[0].mxu0 %v377
    %v864 = vpop.f32.mrb[0].mxu0
    %v865 = vadd.f32 %v172, %v864
    %v866 = vpop.f32.mrb[0].mxu0
    %867 = vmatprep.mubr.f32.mxu0 0.0
    %868 = vmatmul.mubr.f32.gmra.mrb[0].mxu0 %v380
    %v869 = vpop.f32.mrb[0].mxu0
    %v870 = vadd.f32 %v172, %v869
    %v871 = vpop.f32.mrb[0].mxu0
    %872 = vmatprep.mubr.f32.mxu0 0.0
    %873 = vmatmul.mubr.f32.gmra.mrb[0].mxu0 %v383
    %v874 = vpop.f32.mrb[0].mxu0
    %v875 = vadd.f32 %v172, %v874
    %v876 = vpop.f32.mrb[0].mxu0
    %877 = vmatprep.mubr.f32.mxu0 0.0
    %878 = vmatmul.mubr.f32.gmra.mrb[0].mxu0 %v386
    %v879 = vpop.f32.mrb[0].mxu0
    %v880 = vadd.f32 %v172, %v879
    %v881 = vpop.f32.mrb[0].mxu0
    %882 = vmatprep.mubr.f32.mxu0 0.0
    %883 = vmatmul.mubr.f32.gmra.mrb[0].mxu0 %v389
    %v884 = vpop.f32.mrb[0].mxu0
    %v885 = vadd.f32 %v172, %v884
    %v886 = vpop.f32.mrb[0].mxu0
    %887 = vmatprep.mubr.f32.mxu0 0.0
    %888 = vmatmul.mubr.f32.gmra.mrb[0].mxu0 %v392
    %v889 = vpop.f32.mrb[0].mxu0
    %v890 = vadd.f32 %v172, %v889
    %v891 = vpop.f32.mrb[0].mxu0
    %892 = vmatprep.mubr.f32.mxu0 0.0
    %893 = vmatmul.mubr.f32.gmra.mrb[0].mxu0 %v395
    %v894 = vpop.f32.mrb[0].mxu0
    %v895 = vadd.f32 %v172, %v894
    %v896 = vpop.f32.mrb[0].mxu0
    %897 = vmatprep.mubr.f32.mxu0 0.0
    %898 = vmatmul.mubr.f32.gmra.mrb[0].mxu0 %v398
    %v899 = vpop.f32.mrb[0].mxu0
    %v900 = vadd.f32 %v172, %v899
    %v901 = vpop.f32.mrb[0].mxu0
    %902 = vmatprep.mubr.f32.mxu0 0.0
    %903 = vmatmul.mubr.f32.gmra.mrb[0].mxu0 %v401
    %v904 = vpop.f32.mrb[0].mxu0
    %v905 = vadd.f32 %v172, %v904
    %v906 = vpop.f32.mrb[0].mxu0
    %907 = vmatprep.mubr.f32.mxu0 0.0
    %908 = vmatmul.mubr.f32.gmra.mrb[0].mxu0 %v404
    %v909 = vpop.f32.mrb[0].mxu0
    %v910 = vadd.f32 %v172, %v909
    %v911 = vpop.f32.mrb[0].mxu0
    %912 = vmatprep.mubr.f32.mxu0 0.0
    %913 = vmatmul.mubr.f32.gmra.mrb[0].mxu0 %v407
    %v914 = vpop.f32.mrb[0].mxu0
    %v915 = vadd.f32 %v172, %v914
    %v916 = vpop.f32.mrb[0].mxu0
    %917 = vmatprep.mubr.f32.mxu0 0.0
    %918 = vmatmul.mubr.f32.gmra.mrb[0].mxu0 %v410
    %v919 = vpop.f32.mrb[0].mxu0
    %v920 = vadd.f32 %v172, %v919
    %v921 = vpop.f32.mrb[0].mxu0
    %922 = vmatprep.mubr.f32.mxu0 0.0
    %923 = vmatmul.mubr.f32.gmra.mrb[0].mxu0 %v413
    %v924 = vpop.f32.mrb[0].mxu0
    %v925 = vadd.f32 %v172, %v924
    %v926 = vpop.f32.mrb[0].mxu0
    %927 = vmatprep.mubr.f32.mxu0 0.0
    %928 = vmatmul.mubr.f32.gmra.mrb[0].mxu0 %v416
    %v929 = vpop.f32.mrb[0].mxu0
    %v930 = vadd.f32 %v172, %v929
    %v931 = vpop.f32.mrb[0].mxu0
    %932 = vmatprep.mubr.f32.mxu0 0.0
    %933 = vmatmul.mubr.f32.gmra.mrb[0].mxu0 %v419
    %v934 = vpop.f32.mrb[0].mxu0
    %v935 = vadd.f32 %v172, %v934
    %v936 = vpop.f32.mrb[0].mxu0
    %937 = vmatprep.mubr.f32.mxu0 0.0
    %938 = vmatmul.mubr.f32.gmra.mrb[0].mxu0 %v422
    %v939 = vpop.f32.mrb[0].mxu0
    %v940 = vadd.f32 %v172, %v939
    %v941 = vpop.f32.mrb[0].mxu0
    %942 = vmatprep.mubr.f32.mxu0 0.0
    %943 = vmatmul.mubr.f32.gmra.mrb[0].mxu0 %v425
    %v944 = vpop.f32.mrb[0].mxu0
    %v945 = vadd.f32 %v172, %v944
    %v946 = vpop.f32.mrb[0].mxu0
    %947 = vmatprep.mubr.f32.mxu0 0.0
    %948 = vmatmul.mubr.f32.gmra.mrb[0].mxu0 %v428
    %v949 = vpop.f32.mrb[0].mxu0
    %v950 = vadd.f32 %v172, %v949
    %v951 = vpop.f32.mrb[0].mxu0
    %952 = vmatprep.mubr.f32.mxu0 0.0
    %953 = vmatmul.mubr.f32.gmra.mrb[0].mxu0 %v431
    %v954 = vpop.f32.mrb[0].mxu0
    %v955 = vadd.f32 %v172, %v954
    %v956 = vpop.f32.mrb[0].mxu0
    %957 = vmatprep.mubr.f32.mxu0 0.0
    %958 = vmatmul.mubr.f32.gmra.mrb[0].mxu0 %v434
    %v959 = vpop.f32.mrb[0].mxu0
    %v960 = vadd.f32 %v172, %v959
    %v961 = vpop.f32.mrb[0].mxu0
    %962 = vmatprep.mubr.f32.mxu0 0.0
    %963 = vmatmul.mubr.f32.gmra.mrb[0].mxu0 %v437
    %v964 = vpop.f32.mrb[0].mxu0
    %v965 = vadd.f32 %v172, %v964
    %v966 = vpop.f32.mrb[0].mxu0
    %967 = vmatprep.mubr.f32.mxu0 0.0
    %968 = vmatmul.mubr.f32.gmra.mrb[0].mxu0 %v440
    %v969 = vpop.f32.mrb[0].mxu0
    %v970 = vadd.f32 %v172, %v969
    %v971 = vpop.f32.mrb[0].mxu0
    %972 = vmatprep.mubr.f32.mxu0 0.0
    %973 = vmatmul.mubr.f32.gmra.mrb[0].mxu0 %v443
    %v974 = vpop.f32.mrb[0].mxu0
    %v975 = vadd.f32 %v172, %v974
    %v976 = vpop.f32.mrb[0].mxu0
    %977 = vmatprep.mubr.f32.mxu0 0.0
    %978 = vmatmul.mubr.f32.gmra.mrb[0].mxu0 %v446
    %v979 = vpop.f32.mrb[0].mxu0
    %v980 = vadd.f32 %v172, %v979
    %v981 = vpop.f32.mrb[0].mxu0
    %982 = vmatprep.mubr.f32.mxu0 0.0
    %983 = vmatmul.mubr.f32.gmra.mrb[0].mxu0 %v449
    %v984 = vpop.f32.mrb[0].mxu0
    %v985 = vadd.f32 %v172, %v984
    %v986 = vpop.f32.mrb[0].mxu0
    %987 = vmatprep.mubr.f32.mxu0 0.0
    %988 = vmatmul.mubr.f32.gmra.mrb[0].mxu0 %v452
    %v989 = vpop.f32.mrb[0].mxu0
    %v990 = vadd.f32 %v172, %v989
    %v991 = vpop.f32.mrb[0].mxu0
    %992 = vmatprep.mubr.f32.mxu0 0.0
    %993 = vmatmul.mubr.f32.gmra.mrb[0].mxu0 %v455
    %v994 = vpop.f32.mrb[0].mxu0
    %v995 = vadd.f32 %v172, %v994
    %v996 = vpop.f32.mrb[0].mxu0
    %997 = vmatprep.mubr.f32.mxu0 0.0
    %998 = vmatmul.mubr.f32.gmra.mrb[0].mxu0 %v458
    %v999 = vpop.f32.mrb[0].mxu0
    %v1000 = vadd.f32 %v172, %v999
    %v1001 = vpop.f32.mrb[0].mxu0
    %1002 = vmatprep.mubr.f32.mxu0 0.0
    %1003 = vmatmul.mubr.f32.gmra.mrb[0].mxu0 %v461
    %v1004 = vpop.f32.mrb[0].mxu0
    %v1005 = vadd.f32 %v172, %v1004
    %v1006 = vpop.f32.mrb[0].mxu0
    %1007 = vdwg.mxu0
    %v1008 = vmul.f32 %v530, 0.17677669
    %v1009 = vmul.f32 %v535, 0.17677669
    %v1010 = vmul.f32 %v540, 0.17677669
    %v1011 = vmul.f32 %v545, 0.17677669
    %v1012 = vmul.f32 %v590, 0.17677669
    %v1013 = vmul.f32 %v595, 0.17677669
    %v1014 = vmul.f32 %v600, 0.17677669
    %v1015 = vmul.f32 %v605, 0.17677669
    %v1016 = vmul.f32 %v650, 0.17677669
    %v1017 = vmul.f32 %v655, 0.17677669
    %v1018 = vmul.f32 %v660, 0.17677669
    %v1019 = vmul.f32 %v665, 0.17677669
    %v1020 = vmul.f32 %v710, 0.17677669
    %v1021 = vmul.f32 %v715, 0.17677669
    %v1022 = vmul.f32 %v720, 0.17677669
    %v1023 = vmul.f32 %v725, 0.17677669
    %v1024 = vmul.f32 %v770, 0.17677669
    %v1025 = vmul.f32 %v775, 0.17677669
    %v1026 = vmul.f32 %v780, 0.17677669
    %v1027 = vmul.f32 %v785, 0.17677669
    %v1028 = vmul.f32 %v830, 0.17677669
    %v1029 = vmul.f32 %v835, 0.17677669
    %v1030 = vmul.f32 %v840, 0.17677669
    %v1031 = vmul.f32 %v845, 0.17677669
    %v1032 = vmul.f32 %v890, 0.17677669
    %v1033 = vmul.f32 %v895, 0.17677669
    %v1034 = vmul.f32 %v900, 0.17677669
    %v1035 = vmul.f32 %v905, 0.17677669
    %v1036 = vmul.f32 %v950, 0.17677669
    %v1037 = vmul.f32 %v955, 0.17677669
    %v1038 = vmul.f32 %v960, 0.17677669
    %v1039 = vmul.f32 %v965, 0.17677669
    %v1041 = vsel %vm174, %v1008, 0
    %v1044 = vsel %vm174, %v1009, 0
    %v1047 = vsel %vm174, %v1010, 0
    %v1050 = vsel %vm174, %v1011, 0
    %1052 = vmatprep.subr.mxu0 0.0
    %1053 = vmatpush1.msra.mxu0 %v550
    %1054 = vmatprep.subr.mxu0 0.0
    %1055 = vmatpush1.msra.mxu0 %v555
    %1056 = vmatprep.subr.mxu0 0.0
    %1057 = vmatpush1.msra.mxu0 %v560
    %1058 = vmatprep.subr.mxu0 0.0
    %1059 = vmatpush1.msra.mxu0 %v565
    %1060 = vmatprep.subr.mxu0 0.0
    %1061 = vmatpush1.msra.mxu0 0.0
    %1062 = vmatprep.subr.mxu0 0.0
    %1063 = vmatpush1.msra.mxu0 0.0
    %1064 = vmatprep.subr.mxu0 0.0
    %1065 = vmatpush1.msra.mxu0 0.0
    %1066 = vmatprep.subr.mxu0 0.0
    %1067 = vmatpush1.msra.mxu0 0.0
    %1068 = vmatprep.subr.mxu0 0.0
    %1069 = vmatpush1.msra.mxu0 0.0
    %1070 = vmatprep.subr.mxu0 0.0
    %1071 = vmatpush1.msra.mxu0 0.0
    %1072 = vmatprep.subr.mxu0 0.0
    %1073 = vmatpush1.msra.mxu0 0.0
    %1074 = vmatprep.subr.mxu0 0.0
    %1075 = vmatpush1.msra.mxu0 0.0
    %1076 = vmatprep.subr.mxu0 0.0
    %1077 = vmatpush1.msra.mxu0 0.0
    %1078 = vmatprep.subr.mxu0 0.0
    %1079 = vmatpush1.msra.mxu0 0.0
    %1080 = vmatprep.subr.mxu0 0.0
    %1081 = vmatpush1.msra.mxu0 0.0
    %1082 = vmatprep.subr.mxu0 0.0
    %1083 = vmatpush1.msra.mxu0 0.0
    %1084 = vmatprep.subr.mxu0 0.0
    %1085 = vmatpush1.msra.mxu0 0.0
    %1086 = vmatprep.subr.mxu0 0.0
    %1087 = vmatpush1.msra.mxu0 0.0
    %1088 = vmatprep.subr.mxu0 0.0
    %1089 = vmatpush1.msra.mxu0 0.0
    %1090 = vmatprep.subr.mxu0 0.0
    %1091 = vmatpush1.msra.mxu0 0.0
    %1092 = vmatprep.subr.mxu0 0.0
    %1093 = vmatpush1.msra.mxu0 0.0
    %1094 = vmatprep.subr.mxu0 0.0
    %1095 = vmatpush1.msra.mxu0 0.0
    %1096 = vmatprep.subr.mxu0 0.0
    %1097 = vmatpush1.msra.mxu0 0.0
    %1098 = vmatprep.subr.mxu0 0.0
    %1099 = vmatpush1.msra.mxu0 0.0
    %1100 = vmatprep.subr.mxu0 0.0
    %1101 = vmatpush1.msra.mxu0 0.0
    %1102 = vmatprep.subr.mxu0 0.0
    %1103 = vmatpush1.msra.mxu0 0.0
    %1104 = vmatprep.subr.mxu0 0.0
    %1105 = vmatpush1.msra.mxu0 0.0
    %1106 = vmatprep.subr.mxu0 0.0
    %1107 = vmatpush1.msra.mxu0 0.0
    %1108 = vmatprep.subr.mxu0 0.0
    %1109 = vmatpush1.msra.mxu0 0.0
    %1110 = vmatprep.subr.mxu0 0.0
    %1111 = vmatpush1.msra.mxu0 0.0
    %1112 = vmatprep.subr.mxu0 0.0
    %1113 = vmatpush1.msra.mxu0 0.0
    %1114 = vmatprep.subr.mxu0 0.0
    %1115 = vmatpush1.msra.mxu0 0.0
    %1116 = vmatprep.mubr.f32.mxu0 0.0
    %1117 = vmatmul.mubr.f32.gmra.mrb[0].mxu0 %v1041
    %v1118 = vpop.f32.mrb[0].mxu0
    %v1119 = vadd.f32 0.0, %v1118
    %v1120 = vpop.f32.mrb[0].mxu0
    %1121 = vmatprep.mubr.f32.mxu0 0.0
    %1122 = vmatmul.mubr.f32.gmra.mrb[0].mxu0 %v1044
    %v1123 = vpop.f32.mrb[0].mxu0
    %v1124 = vadd.f32 0.0, %v1123
    %v1125 = vpop.f32.mrb[0].mxu0
    %1126 = vmatprep.mubr.f32.mxu0 0.0
    %1127 = vmatmul.mubr.f32.gmra.mrb[0].mxu0 %v1047
    %v1128 = vpop.f32.mrb[0].mxu0
    %v1129 = vadd.f32 0.0, %v1128
    %v1130 = vpop.f32.mrb[0].mxu0
    %1131 = vmatprep.mubr.f32.mxu0 0.0
    %1132 = vmatmul.mubr.f32.gmra.mrb[0].mxu0 %v1050
    %v1133 = vpop.f32.mrb[0].mxu0
    %v1134 = vadd.f32 0.0, %v1133
    %v1135 = vpop.f32.mrb[0].mxu0
    %1136 = vdwg.mxu0
    %v1138 = vsel %vm174, %v1012, 0
    %v1141 = vsel %vm174, %v1013, 0
    %v1144 = vsel %vm174, %v1014, 0
    %v1147 = vsel %vm174, %v1015, 0
    %1149 = vmatprep.subr.mxu0 0.0
    %1150 = vmatpush1.msra.mxu0 %v610
    %1151 = vmatprep.subr.mxu0 0.0
    %1152 = vmatpush1.msra.mxu0 %v615
    %1153 = vmatprep.subr.mxu0 0.0
    %1154 = vmatpush1.msra.mxu0 %v620
    %1155 = vmatprep.subr.mxu0 0.0
    %1156 = vmatpush1.msra.mxu0 %v625
    %1157 = vmatprep.subr.mxu0 0.0
    %1158 = vmatpush1.msra.mxu0 0.0
    %1159 = vmatprep.subr.mxu0 0.0
    %1160 = vmatpush1.msra.mxu0 0.0
    %1161 = vmatprep.subr.mxu0 0.0
    %1162 = vmatpush1.msra.mxu0 0.0
    %1163 = vmatprep.subr.mxu0 0.0
    %1164 = vmatpush1.msra.mxu0 0.0
    %1165 = vmatprep.subr.mxu0 0.0
    %1166 = vmatpush1.msra.mxu0 0.0
    %1167 = vmatprep.subr.mxu0 0.0
    %1168 = vmatpush1.msra.mxu0 0.0
    %1169 = vmatprep.subr.mxu0 0.0
    %1170 = vmatpush1.msra.mxu0 0.0
    %1171 = vmatprep.subr.mxu0 0.0
    %1172 = vmatpush1.msra.mxu0 0.0
    %1173 = vmatprep.subr.mxu0 0.0
    %1174 = vmatpush1.msra.mxu0 0.0
    %1175 = vmatprep.subr.mxu0 0.0
    %1176 = vmatpush1.msra.mxu0 0.0
    %1177 = vmatprep.subr.mxu0 0.0
    %1178 = vmatpush1.msra.mxu0 0.0
    %1179 = vmatprep.subr.mxu0 0.0
    %1180 = vmatpush1.msra.mxu0 0.0
    %1181 = vmatprep.subr.mxu0 0.0
    %1182 = vmatpush1.msra.mxu0 0.0
    %1183 = vmatprep.subr.mxu0 0.0
    %1184 = vmatpush1.msra.mxu0 0.0
    %1185 = vmatprep.subr.mxu0 0.0
    %1186 = vmatpush1.msra.mxu0 0.0
    %1187 = vmatprep.subr.mxu0 0.0
    %1188 = vmatpush1.msra.mxu0 0.0
    %1189 = vmatprep.subr.mxu0 0.0
    %1190 = vmatpush1.msra.mxu0 0.0
    %1191 = vmatprep.subr.mxu0 0.0
    %1192 = vmatpush1.msra.mxu0 0.0
    %1193 = vmatprep.subr.mxu0 0.0
    %1194 = vmatpush1.msra.mxu0 0.0
    %1195 = vmatprep.subr.mxu0 0.0
    %1196 = vmatpush1.msra.mxu0 0.0
    %1197 = vmatprep.subr.mxu0 0.0
    %1198 = vmatpush1.msra.mxu0 0.0
    %1199 = vmatprep.subr.mxu0 0.0
    %1200 = vmatpush1.msra.mxu0 0.0
    %1201 = vmatprep.subr.mxu0 0.0
    %1202 = vmatpush1.msra.mxu0 0.0
    %1203 = vmatprep.subr.mxu0 0.0
    %1204 = vmatpush1.msra.mxu0 0.0
    %1205 = vmatprep.subr.mxu0 0.0
    %1206 = vmatpush1.msra.mxu0 0.0
    %1207 = vmatprep.subr.mxu0 0.0
    %1208 = vmatpush1.msra.mxu0 0.0
    %1209 = vmatprep.subr.mxu0 0.0
    %1210 = vmatpush1.msra.mxu0 0.0
    %1211 = vmatprep.subr.mxu0 0.0
    %1212 = vmatpush1.msra.mxu0 0.0
    %1213 = vmatprep.mubr.f32.mxu0 0.0
    %1214 = vmatmul.mubr.f32.gmra.mrb[0].mxu0 %v1138
    %v1215 = vpop.f32.mrb[0].mxu0
    %v1216 = vadd.f32 0.0, %v1215
    %v1217 = vpop.f32.mrb[0].mxu0
    %1218 = vmatprep.mubr.f32.mxu0 0.0
    %1219 = vmatmul.mubr.f32.gmra.mrb[0].mxu0 %v1141
    %v1220 = vpop.f32.mrb[0].mxu0
    %v1221 = vadd.f32 0.0, %v1220
    %v1222 = vpop.f32.mrb[0].mxu0
    %1223 = vmatprep.mubr.f32.mxu0 0.0
    %1224 = vmatmul.mubr.f32.gmra.mrb[0].mxu0 %v1144
    %v1225 = vpop.f32.mrb[0].mxu0
    %v1226 = vadd.f32 0.0, %v1225
    %v1227 = vpop.f32.mrb[0].mxu0
    %1228 = vmatprep.mubr.f32.mxu0 0.0
    %1229 = vmatmul.mubr.f32.gmra.mrb[0].mxu0 %v1147
    %v1230 = vpop.f32.mrb[0].mxu0
    %v1231 = vadd.f32 0.0, %v1230
    %v1232 = vpop.f32.mrb[0].mxu0
    %1233 = vdwg.mxu0
    %v1235 = vsel %vm174, %v1016, 0
    %v1238 = vsel %vm174, %v1017, 0
    %v1241 = vsel %vm174, %v1018, 0
    %v1244 = vsel %vm174, %v1019, 0
    %1246 = vmatprep.subr.mxu0 0.0
    %1247 = vmatpush1.msra.mxu0 %v670
    %1248 = vmatprep.subr.mxu0 0.0
    %1249 = vmatpush1.msra.mxu0 %v675
    %1250 = vmatprep.subr.mxu0 0.0
    %1251 = vmatpush1.msra.mxu0 %v680
    %1252 = vmatprep.subr.mxu0 0.0
    %1253 = vmatpush1.msra.mxu0 %v685
    %1254 = vmatprep.subr.mxu0 0.0
    %1255 = vmatpush1.msra.mxu0 0.0
    %1256 = vmatprep.subr.mxu0 0.0
    %1257 = vmatpush1.msra.mxu0 0.0
    %1258 = vmatprep.subr.mxu0 0.0
    %1259 = vmatpush1.msra.mxu0 0.0
    %1260 = vmatprep.subr.mxu0 0.0
    %1261 = vmatpush1.msra.mxu0 0.0
    %1262 = vmatprep.subr.mxu0 0.0
    %1263 = vmatpush1.msra.mxu0 0.0
    %1264 = vmatprep.subr.mxu0 0.0
    %1265 = vmatpush1.msra.mxu0 0.0
    %1266 = vmatprep.subr.mxu0 0.0
    %1267 = vmatpush1.msra.mxu0 0.0
    %1268 = vmatprep.subr.mxu0 0.0
    %1269 = vmatpush1.msra.mxu0 0.0
    %1270 = vmatprep.subr.mxu0 0.0
    %1271 = vmatpush1.msra.mxu0 0.0
    %1272 = vmatprep.subr.mxu0 0.0
    %1273 = vmatpush1.msra.mxu0 0.0
    %1274 = vmatprep.subr.mxu0 0.0
    %1275 = vmatpush1.msra.mxu0 0.0
    %1276 = vmatprep.subr.mxu0 0.0
    %1277 = vmatpush1.msra.mxu0 0.0
    %1278 = vmatprep.subr.mxu0 0.0
    %1279 = vmatpush1.msra.mxu0 0.0
    %1280 = vmatprep.subr.mxu0 0.0
    %1281 = vmatpush1.msra.mxu0 0.0
    %1282 = vmatprep.subr.mxu0 0.0
    %1283 = vmatpush1.msra.mxu0 0.0
    %1284 = vmatprep.subr.mxu0 0.0
    %1285 = vmatpush1.msra.mxu0 0.0
    %1286 = vmatprep.subr.mxu0 0.0
    %1287 = vmatpush1.msra.mxu0 0.0
    %1288 = vmatprep.subr.mxu0 0.0
    %1289 = vmatpush1.msra.mxu0 0.0
    %1290 = vmatprep.subr.mxu0 0.0
    %1291 = vmatpush1.msra.mxu0 0.0
    %1292 = vmatprep.subr.mxu0 0.0
    %1293 = vmatpush1.msra.mxu0 0.0
    %1294 = vmatprep.subr.mxu0 0.0
    %1295 = vmatpush1.msra.mxu0 0.0
    %1296 = vmatprep.subr.mxu0 0.0
    %1297 = vmatpush1.msra.mxu0 0.0
    %1298 = vmatprep.subr.mxu0 0.0
    %1299 = vmatpush1.msra.mxu0 0.0
    %1300 = vmatprep.subr.mxu0 0.0
    %1301 = vmatpush1.msra.mxu0 0.0
    %1302 = vmatprep.subr.mxu0 0.0
    %1303 = vmatpush1.msra.mxu0 0.0
    %1304 = vmatprep.subr.mxu0 0.0
    %1305 = vmatpush1.msra.mxu0 0.0
    %1306 = vmatprep.subr.mxu0 0.0
    %1307 = vmatpush1.msra.mxu0 0.0
    %1308 = vmatprep.subr.mxu0 0.0
    %1309 = vmatpush1.msra.mxu0 0.0
    %1310 = vmatprep.mubr.f32.mxu0 0.0
    %1311 = vmatmul.mubr.f32.gmra.mrb[0].mxu0 %v1235
    %v1312 = vpop.f32.mrb[0].mxu0
    %v1313 = vadd.f32 0.0, %v1312
    %v1314 = vpop.f32.mrb[0].mxu0
    %1315 = vmatprep.mubr.f32.mxu0 0.0
    %1316 = vmatmul.mubr.f32.gmra.mrb[0].mxu0 %v1238
    %v1317 = vpop.f32.mrb[0].mxu0
    %v1318 = vadd.f32 0.0, %v1317
    %v1319 = vpop.f32.mrb[0].mxu0
    %1320 = vmatprep.mubr.f32.mxu0 0.0
    %1321 = vmatmul.mubr.f32.gmra.mrb[0].mxu0 %v1241
    %v1322 = vpop.f32.mrb[0].mxu0
    %v1323 = vadd.f32 0.0, %v1322
    %v1324 = vpop.f32.mrb[0].mxu0
    %1325 = vmatprep.mubr.f32.mxu0 0.0
    %1326 = vmatmul.mubr.f32.gmra.mrb[0].mxu0 %v1244
    %v1327 = vpop.f32.mrb[0].mxu0
    %v1328 = vadd.f32 0.0, %v1327
    %v1329 = vpop.f32.mrb[0].mxu0
    %1330 = vdwg.mxu0
    %v1332 = vsel %vm174, %v1020, 0
    %v1335 = vsel %vm174, %v1021, 0
    %v1338 = vsel %vm174, %v1022, 0
    %v1341 = vsel %vm174, %v1023, 0
    %1343 = vmatprep.subr.mxu0 0.0
    %1344 = vmatpush1.msra.mxu0 %v730
    %1345 = vmatprep.subr.mxu0 0.0
    %1346 = vmatpush1.msra.mxu0 %v735
    %1347 = vmatprep.subr.mxu0 0.0
    %1348 = vmatpush1.msra.mxu0 %v740
    %1349 = vmatprep.subr.mxu0 0.0
    %1350 = vmatpush1.msra.mxu0 %v745
    %1351 = vmatprep.subr.mxu0 0.0
    %1352 = vmatpush1.msra.mxu0 0.0
    %1353 = vmatprep.subr.mxu0 0.0
    %1354 = vmatpush1.msra.mxu0 0.0
    %1355 = vmatprep.subr.mxu0 0.0
    %1356 = vmatpush1.msra.mxu0 0.0
    %1357 = vmatprep.subr.mxu0 0.0
    %1358 = vmatpush1.msra.mxu0 0.0
    %1359 = vmatprep.subr.mxu0 0.0
    %1360 = vmatpush1.msra.mxu0 0.0
    %1361 = vmatprep.subr.mxu0 0.0
    %1362 = vmatpush1.msra.mxu0 0.0
    %1363 = vmatprep.subr.mxu0 0.0
    %1364 = vmatpush1.msra.mxu0 0.0
    %1365 = vmatprep.subr.mxu0 0.0
    %1366 = vmatpush1.msra.mxu0 0.0
    %1367 = vmatprep.subr.mxu0 0.0
    %1368 = vmatpush1.msra.mxu0 0.0
    %1369 = vmatprep.subr.mxu0 0.0
    %1370 = vmatpush1.msra.mxu0 0.0
    %1371 = vmatprep.subr.mxu0 0.0
    %1372 = vmatpush1.msra.mxu0 0.0
    %1373 = vmatprep.subr.mxu0 0.0
    %1374 = vmatpush1.msra.mxu0 0.0
    %1375 = vmatprep.subr.mxu0 0.0
    %1376 = vmatpush1.msra.mxu0 0.0
    %1377 = vmatprep.subr.mxu0 0.0
    %1378 = vmatpush1.msra.mxu0 0.0
    %1379 = vmatprep.subr.mxu0 0.0
    %1380 = vmatpush1.msra.mxu0 0.0
    %1381 = vmatprep.subr.mxu0 0.0
    %1382 = vmatpush1.msra.mxu0 0.0
    %1383 = vmatprep.subr.mxu0 0.0
    %1384 = vmatpush1.msra.mxu0 0.0
    %1385 = vmatprep.subr.mxu0 0.0
    %1386 = vmatpush1.msra.mxu0 0.0
    %1387 = vmatprep.subr.mxu0 0.0
    %1388 = vmatpush1.msra.mxu0 0.0
    %1389 = vmatprep.subr.mxu0 0.0
    %1390 = vmatpush1.msra.mxu0 0.0
    %1391 = vmatprep.subr.mxu0 0.0
    %1392 = vmatpush1.msra.mxu0 0.0
    %1393 = vmatprep.subr.mxu0 0.0
    %1394 = vmatpush1.msra.mxu0 0.0
    %1395 = vmatprep.subr.mxu0 0.0
    %1396 = vmatpush1.msra.mxu0 0.0
    %1397 = vmatprep.subr.mxu0 0.0
    %1398 = vmatpush1.msra.mxu0 0.0
    %1399 = vmatprep.subr.mxu0 0.0
    %1400 = vmatpush1.msra.mxu0 0.0
    %1401 = vmatprep.subr.mxu0 0.0
    %1402 = vmatpush1.msra.mxu0 0.0
    %1403 = vmatprep.subr.mxu0 0.0
    %1404 = vmatpush1.msra.mxu0 0.0
    %1405 = vmatprep.subr.mxu0 0.0
    %1406 = vmatpush1.msra.mxu0 0.0
    %1407 = vmatprep.mubr.f32.mxu0 0.0
    %1408 = vmatmul.mubr.f32.gmra.mrb[0].mxu0 %v1332
    %v1409 = vpop.f32.mrb[0].mxu0
    %v1410 = vadd.f32 0.0, %v1409
    %v1411 = vpop.f32.mrb[0].mxu0
    %1412 = vmatprep.mubr.f32.mxu0 0.0
    %1413 = vmatmul.mubr.f32.gmra.mrb[0].mxu0 %v1335
    %v1414 = vpop.f32.mrb[0].mxu0
    %v1415 = vadd.f32 0.0, %v1414
    %v1416 = vpop.f32.mrb[0].mxu0
    %1417 = vmatprep.mubr.f32.mxu0 0.0
    %1418 = vmatmul.mubr.f32.gmra.mrb[0].mxu0 %v1338
    %v1419 = vpop.f32.mrb[0].mxu0
    %v1420 = vadd.f32 0.0, %v1419
    %v1421 = vpop.f32.mrb[0].mxu0
    %1422 = vmatprep.mubr.f32.mxu0 0.0
    %1423 = vmatmul.mubr.f32.gmra.mrb[0].mxu0 %v1341
    %v1424 = vpop.f32.mrb[0].mxu0
    %v1425 = vadd.f32 0.0, %v1424
    %v1426 = vpop.f32.mrb[0].mxu0
    %1427 = vdwg.mxu0
    %v1429 = vsel %vm174, %v1024, 0
    %v1432 = vsel %vm174, %v1025, 0
    %v1435 = vsel %vm174, %v1026, 0
    %v1438 = vsel %vm174, %v1027, 0
    %1440 = vmatprep.subr.mxu0 0.0
    %1441 = vmatpush1.msra.mxu0 %v790
    %1442 = vmatprep.subr.mxu0 0.0
    %1443 = vmatpush1.msra.mxu0 %v795
    %1444 = vmatprep.subr.mxu0 0.0
    %1445 = vmatpush1.msra.mxu0 %v800
    %1446 = vmatprep.subr.mxu0 0.0
    %1447 = vmatpush1.msra.mxu0 %v805
    %1448 = vmatprep.subr.mxu0 0.0
    %1449 = vmatpush1.msra.mxu0 0.0
    %1450 = vmatprep.subr.mxu0 0.0
    %1451 = vmatpush1.msra.mxu0 0.0
    %1452 = vmatprep.subr.mxu0 0.0
    %1453 = vmatpush1.msra.mxu0 0.0
    %1454 = vmatprep.subr.mxu0 0.0
    %1455 = vmatpush1.msra.mxu0 0.0
    %1456 = vmatprep.subr.mxu0 0.0
    %1457 = vmatpush1.msra.mxu0 0.0
    %1458 = vmatprep.subr.mxu0 0.0
    %1459 = vmatpush1.msra.mxu0 0.0
    %1460 = vmatprep.subr.mxu0 0.0
    %1461 = vmatpush1.msra.mxu0 0.0
    %1462 = vmatprep.subr.mxu0 0.0
    %1463 = vmatpush1.msra.mxu0 0.0
    %1464 = vmatprep.subr.mxu0 0.0
    %1465 = vmatpush1.msra.mxu0 0.0
    %1466 = vmatprep.subr.mxu0 0.0
    %1467 = vmatpush1.msra.mxu0 0.0
    %1468 = vmatprep.subr.mxu0 0.0
    %1469 = vmatpush1.msra.mxu0 0.0
    %1470 = vmatprep.subr.mxu0 0.0
    %1471 = vmatpush1.msra.mxu0 0.0
    %1472 = vmatprep.subr.mxu0 0.0
    %1473 = vmatpush1.msra.mxu0 0.0
    %1474 = vmatprep.subr.mxu0 0.0
    %1475 = vmatpush1.msra.mxu0 0.0
    %1476 = vmatprep.subr.mxu0 0.0
    %1477 = vmatpush1.msra.mxu0 0.0
    %1478 = vmatprep.subr.mxu0 0.0
    %1479 = vmatpush1.msra.mxu0 0.0
    %1480 = vmatprep.subr.mxu0 0.0
    %1481 = vmatpush1.msra.mxu0 0.0
    %1482 = vmatprep.subr.mxu0 0.0
    %1483 = vmatpush1.msra.mxu0 0.0
    %1484 = vmatprep.subr.mxu0 0.0
    %1485 = vmatpush1.msra.mxu0 0.0
    %1486 = vmatprep.subr.mxu0 0.0
    %1487 = vmatpush1.msra.mxu0 0.0
    %1488 = vmatprep.subr.mxu0 0.0
    %1489 = vmatpush1.msra.mxu0 0.0
    %1490 = vmatprep.subr.mxu0 0.0
    %1491 = vmatpush1.msra.mxu0 0.0
    %1492 = vmatprep.subr.mxu0 0.0
    %1493 = vmatpush1.msra.mxu0 0.0
    %1494 = vmatprep.subr.mxu0 0.0
    %1495 = vmatpush1.msra.mxu0 0.0
    %1496 = vmatprep.subr.mxu0 0.0
    %1497 = vmatpush1.msra.mxu0 0.0
    %1498 = vmatprep.subr.mxu0 0.0
    %1499 = vmatpush1.msra.mxu0 0.0
    %1500 = vmatprep.subr.mxu0 0.0
    %1501 = vmatpush1.msra.mxu0 0.0
    %1502 = vmatprep.subr.mxu0 0.0
    %1503 = vmatpush1.msra.mxu0 0.0
    %1504 = vmatprep.mubr.f32.mxu0 0.0
    %1505 = vmatmul.mubr.f32.gmra.mrb[0].mxu0 %v1429
    %v1506 = vpop.f32.mrb[0].mxu0
    %v1507 = vadd.f32 0.0, %v1506
    %v1508 = vpop.f32.mrb[0].mxu0
    %1509 = vmatprep.mubr.f32.mxu0 0.0
    %1510 = vmatmul.mubr.f32.gmra.mrb[0].mxu0 %v1432
    %v1511 = vpop.f32.mrb[0].mxu0
    %v1512 = vadd.f32 0.0, %v1511
    %v1513 = vpop.f32.mrb[0].mxu0
    %1514 = vmatprep.mubr.f32.mxu0 0.0
    %1515 = vmatmul.mubr.f32.gmra.mrb[0].mxu0 %v1435
    %v1516 = vpop.f32.mrb[0].mxu0
    %v1517 = vadd.f32 0.0, %v1516
    %v1518 = vpop.f32.mrb[0].mxu0
    %1519 = vmatprep.mubr.f32.mxu0 0.0
    %1520 = vmatmul.mubr.f32.gmra.mrb[0].mxu0 %v1438
    %v1521 = vpop.f32.mrb[0].mxu0
    %v1522 = vadd.f32 0.0, %v1521
    %v1523 = vpop.f32.mrb[0].mxu0
    %1524 = vdwg.mxu0
    %v1526 = vsel %vm174, %v1028, 0
    %v1529 = vsel %vm174, %v1029, 0
    %v1532 = vsel %vm174, %v1030, 0
    %v1535 = vsel %vm174, %v1031, 0
    %1537 = vmatprep.subr.mxu0 0.0
    %1538 = vmatpush1.msra.mxu0 %v850
    %1539 = vmatprep.subr.mxu0 0.0
    %1540 = vmatpush1.msra.mxu0 %v855
    %1541 = vmatprep.subr.mxu0 0.0
    %1542 = vmatpush1.msra.mxu0 %v860
    %1543 = vmatprep.subr.mxu0 0.0
    %1544 = vmatpush1.msra.mxu0 %v865
    %1545 = vmatprep.subr.mxu0 0.0
    %1546 = vmatpush1.msra.mxu0 0.0
    %1547 = vmatprep.subr.mxu0 0.0
    %1548 = vmatpush1.msra.mxu0 0.0
    %1549 = vmatprep.subr.mxu0 0.0
    %1550 = vmatpush1.msra.mxu0 0.0
    %1551 = vmatprep.subr.mxu0 0.0
    %1552 = vmatpush1.msra.mxu0 0.0
    %1553 = vmatprep.subr.mxu0 0.0
    %1554 = vmatpush1.msra.mxu0 0.0
    %1555 = vmatprep.subr.mxu0 0.0
    %1556 = vmatpush1.msra.mxu0 0.0
    %1557 = vmatprep.subr.mxu0 0.0
    %1558 = vmatpush1.msra.mxu0 0.0
    %1559 = vmatprep.subr.mxu0 0.0
    %1560 = vmatpush1.msra.mxu0 0.0
    %1561 = vmatprep.subr.mxu0 0.0
    %1562 = vmatpush1.msra.mxu0 0.0
    %1563 = vmatprep.subr.mxu0 0.0
    %1564 = vmatpush1.msra.mxu0 0.0
    %1565 = vmatprep.subr.mxu0 0.0
    %1566 = vmatpush1.msra.mxu0 0.0
    %1567 = vmatprep.subr.mxu0 0.0
    %1568 = vmatpush1.msra.mxu0 0.0
    %1569 = vmatprep.subr.mxu0 0.0
    %1570 = vmatpush1.msra.mxu0 0.0
    %1571 = vmatprep.subr.mxu0 0.0
    %1572 = vmatpush1.msra.mxu0 0.0
    %1573 = vmatprep.subr.mxu0 0.0
    %1574 = vmatpush1.msra.mxu0 0.0
    %1575 = vmatprep.subr.mxu0 0.0
    %1576 = vmatpush1.msra.mxu0 0.0
    %1577 = vmatprep.subr.mxu0 0.0
    %1578 = vmatpush1.msra.mxu0 0.0
    %1579 = vmatprep.subr.mxu0 0.0
    %1580 = vmatpush1.msra.mxu0 0.0
    %1581 = vmatprep.subr.mxu0 0.0
    %1582 = vmatpush1.msra.mxu0 0.0
    %1583 = vmatprep.subr.mxu0 0.0
    %1584 = vmatpush1.msra.mxu0 0.0
    %1585 = vmatprep.subr.mxu0 0.0
    %1586 = vmatpush1.msra.mxu0 0.0
    %1587 = vmatprep.subr.mxu0 0.0
    %1588 = vmatpush1.msra.mxu0 0.0
    %1589 = vmatprep.subr.mxu0 0.0
    %1590 = vmatpush1.msra.mxu0 0.0
    %1591 = vmatprep.subr.mxu0 0.0
    %1592 = vmatpush1.msra.mxu0 0.0
    %1593 = vmatprep.subr.mxu0 0.0
    %1594 = vmatpush1.msra.mxu0 0.0
    %1595 = vmatprep.subr.mxu0 0.0
    %1596 = vmatpush1.msra.mxu0 0.0
    %1597 = vmatprep.subr.mxu0 0.0
    %1598 = vmatpush1.msra.mxu0 0.0
    %1599 = vmatprep.subr.mxu0 0.0
    %1600 = vmatpush1.msra.mxu0 0.0
    %1601 = vmatprep.mubr.f32.mxu0 0.0
    %1602 = vmatmul.mubr.f32.gmra.mrb[0].mxu0 %v1526
    %v1603 = vpop.f32.mrb[0].mxu0
    %v1604 = vadd.f32 0.0, %v1603
    %v1605 = vpop.f32.mrb[0].mxu0
    %1606 = vmatprep.mubr.f32.mxu0 0.0
    %1607 = vmatmul.mubr.f32.gmra.mrb[0].mxu0 %v1529
    %v1608 = vpop.f32.mrb[0].mxu0
    %v1609 = vadd.f32 0.0, %v1608
    %v1610 = vpop.f32.mrb[0].mxu0
    %1611 = vmatprep.mubr.f32.mxu0 0.0
    %1612 = vmatmul.mubr.f32.gmra.mrb[0].mxu0 %v1532
    %v1613 = vpop.f32.mrb[0].mxu0
    %v1614 = vadd.f32 0.0, %v1613
    %v1615 = vpop.f32.mrb[0].mxu0
    %1616 = vmatprep.mubr.f32.mxu0 0.0
    %1617 = vmatmul.mubr.f32.gmra.mrb[0].mxu0 %v1535
    %v1618 = vpop.f32.mrb[0].mxu0
    %v1619 = vadd.f32 0.0, %v1618
    %v1620 = vpop.f32.mrb[0].mxu0
    %1621 = vdwg.mxu0
    %v1623 = vsel %vm174, %v1032, 0
    %v1626 = vsel %vm174, %v1033, 0
    %v1629 = vsel %vm174, %v1034, 0
    %v1632 = vsel %vm174, %v1035, 0
    %1634 = vmatprep.subr.mxu0 0.0
    %1635 = vmatpush1.msra.mxu0 %v910
    %1636 = vmatprep.subr.mxu0 0.0
    %1637 = vmatpush1.msra.mxu0 %v915
    %1638 = vmatprep.subr.mxu0 0.0
    %1639 = vmatpush1.msra.mxu0 %v920
    %1640 = vmatprep.subr.mxu0 0.0
    %1641 = vmatpush1.msra.mxu0 %v925
    %1642 = vmatprep.subr.mxu0 0.0
    %1643 = vmatpush1.msra.mxu0 0.0
    %1644 = vmatprep.subr.mxu0 0.0
    %1645 = vmatpush1.msra.mxu0 0.0
    %1646 = vmatprep.subr.mxu0 0.0
    %1647 = vmatpush1.msra.mxu0 0.0
    %1648 = vmatprep.subr.mxu0 0.0
    %1649 = vmatpush1.msra.mxu0 0.0
    %1650 = vmatprep.subr.mxu0 0.0
    %1651 = vmatpush1.msra.mxu0 0.0
    %1652 = vmatprep.subr.mxu0 0.0
    %1653 = vmatpush1.msra.mxu0 0.0
    %1654 = vmatprep.subr.mxu0 0.0
    %1655 = vmatpush1.msra.mxu0 0.0
    %1656 = vmatprep.subr.mxu0 0.0
    %1657 = vmatpush1.msra.mxu0 0.0
    %1658 = vmatprep.subr.mxu0 0.0
    %1659 = vmatpush1.msra.mxu0 0.0
    %1660 = vmatprep.subr.mxu0 0.0
    %1661 = vmatpush1.msra.mxu0 0.0
    %1662 = vmatprep.subr.mxu0 0.0
    %1663 = vmatpush1.msra.mxu0 0.0
    %1664 = vmatprep.subr.mxu0 0.0
    %1665 = vmatpush1.msra.mxu0 0.0
    %1666 = vmatprep.subr.mxu0 0.0
    %1667 = vmatpush1.msra.mxu0 0.0
    %1668 = vmatprep.subr.mxu0 0.0
    %1669 = vmatpush1.msra.mxu0 0.0
    %1670 = vmatprep.subr.mxu0 0.0
    %1671 = vmatpush1.msra.mxu0 0.0
    %1672 = vmatprep.subr.mxu0 0.0
    %1673 = vmatpush1.msra.mxu0 0.0
    %1674 = vmatprep.subr.mxu0 0.0
    %1675 = vmatpush1.msra.mxu0 0.0
    %1676 = vmatprep.subr.mxu0 0.0
    %1677 = vmatpush1.msra.mxu0 0.0
    %1678 = vmatprep.subr.mxu0 0.0
    %1679 = vmatpush1.msra.mxu0 0.0
    %1680 = vmatprep.subr.mxu0 0.0
    %1681 = vmatpush1.msra.mxu0 0.0
    %1682 = vmatprep.subr.mxu0 0.0
    %1683 = vmatpush1.msra.mxu0 0.0
    %1684 = vmatprep.subr.mxu0 0.0
    %1685 = vmatpush1.msra.mxu0 0.0
    %1686 = vmatprep.subr.mxu0 0.0
    %1687 = vmatpush1.msra.mxu0 0.0
    %1688 = vmatprep.subr.mxu0 0.0
    %1689 = vmatpush1.msra.mxu0 0.0
    %1690 = vmatprep.subr.mxu0 0.0
    %1691 = vmatpush1.msra.mxu0 0.0
    %1692 = vmatprep.subr.mxu0 0.0
    %1693 = vmatpush1.msra.mxu0 0.0
    %1694 = vmatprep.subr.mxu0 0.0
    %1695 = vmatpush1.msra.mxu0 0.0
    %1696 = vmatprep.subr.mxu0 0.0
    %1697 = vmatpush1.msra.mxu0 0.0
    %1698 = vmatprep.mubr.f32.mxu0 0.0
    %1699 = vmatmul.mubr.f32.gmra.mrb[0].mxu0 %v1623
    %v1700 = vpop.f32.mrb[0].mxu0
    %v1701 = vadd.f32 0.0, %v1700
    %v1702 = vpop.f32.mrb[0].mxu0
    %1703 = vmatprep.mubr.f32.mxu0 0.0
    %1704 = vmatmul.mubr.f32.gmra.mrb[0].mxu0 %v1626
    %v1705 = vpop.f32.mrb[0].mxu0
    %v1706 = vadd.f32 0.0, %v1705
    %v1707 = vpop.f32.mrb[0].mxu0
    %1708 = vmatprep.mubr.f32.mxu0 0.0
    %1709 = vmatmul.mubr.f32.gmra.mrb[0].mxu0 %v1629
    %v1710 = vpop.f32.mrb[0].mxu0
    %v1711 = vadd.f32 0.0, %v1710
    %v1712 = vpop.f32.mrb[0].mxu0
    %1713 = vmatprep.mubr.f32.mxu0 0.0
    %1714 = vmatmul.mubr.f32.gmra.mrb[0].mxu0 %v1632
    %v1715 = vpop.f32.mrb[0].mxu0
    %v1716 = vadd.f32 0.0, %v1715
    %v1717 = vpop.f32.mrb[0].mxu0
    %1718 = vdwg.mxu0
    %v1720 = vsel %vm174, %v1036, 0
    %v1723 = vsel %vm174, %v1037, 0
    %v1726 = vsel %vm174, %v1038, 0
    %v1729 = vsel %vm174, %v1039, 0
    %1731 = vmatprep.subr.mxu0 0.0
    %1732 = vmatpush1.msra.mxu0 %v970
    %1733 = vmatprep.subr.mxu0 0.0
    %1734 = vmatpush1.msra.mxu0 %v975
    %1735 = vmatprep.subr.mxu0 0.0
    %1736 = vmatpush1.msra.mxu0 %v980
    %1737 = vmatprep.subr.mxu0 0.0
    %1738 = vmatpush1.msra.mxu0 %v985
    %1739 = vmatprep.subr.mxu0 0.0
    %1740 = vmatpush1.msra.mxu0 0.0
    %1741 = vmatprep.subr.mxu0 0.0
    %1742 = vmatpush1.msra.mxu0 0.0
    %1743 = vmatprep.subr.mxu0 0.0
    %1744 = vmatpush1.msra.mxu0 0.0
    %1745 = vmatprep.subr.mxu0 0.0
    %1746 = vmatpush1.msra.mxu0 0.0
    %1747 = vmatprep.subr.mxu0 0.0
    %1748 = vmatpush1.msra.mxu0 0.0
    %1749 = vmatprep.subr.mxu0 0.0
    %1750 = vmatpush1.msra.mxu0 0.0
    %1751 = vmatprep.subr.mxu0 0.0
    %1752 = vmatpush1.msra.mxu0 0.0
    %1753 = vmatprep.subr.mxu0 0.0
    %1754 = vmatpush1.msra.mxu0 0.0
    %1755 = vmatprep.subr.mxu0 0.0
    %1756 = vmatpush1.msra.mxu0 0.0
    %1757 = vmatprep.subr.mxu0 0.0
    %1758 = vmatpush1.msra.mxu0 0.0
    %1759 = vmatprep.subr.mxu0 0.0
    %1760 = vmatpush1.msra.mxu0 0.0
    %1761 = vmatprep.subr.mxu0 0.0
    %1762 = vmatpush1.msra.mxu0 0.0
    %1763 = vmatprep.subr.mxu0 0.0
    %1764 = vmatpush1.msra.mxu0 0.0
    %1765 = vmatprep.subr.mxu0 0.0
    %1766 = vmatpush1.msra.mxu0 0.0
    %1767 = vmatprep.subr.mxu0 0.0
    %1768 = vmatpush1.msra.mxu0 0.0
    %1769 = vmatprep.subr.mxu0 0.0
    %1770 = vmatpush1.msra.mxu0 0.0
    %1771 = vmatprep.subr.mxu0 0.0
    %1772 = vmatpush1.msra.mxu0 0.0
    %1773 = vmatprep.subr.mxu0 0.0
    %1774 = vmatpush1.msra.mxu0 0.0
    %1775 = vmatprep.subr.mxu0 0.0
    %1776 = vmatpush1.msra.mxu0 0.0
    %1777 = vmatprep.subr.mxu0 0.0
    %1778 = vmatpush1.msra.mxu0 0.0
    %1779 = vmatprep.subr.mxu0 0.0
    %1780 = vmatpush1.msra.mxu0 0.0
    %1781 = vmatprep.subr.mxu0 0.0
    %1782 = vmatpush1.msra.mxu0 0.0
    %1783 = vmatprep.subr.mxu0 0.0
    %1784 = vmatpush1.msra.mxu0 0.0
    %1785 = vmatprep.subr.mxu0 0.0
    %1786 = vmatpush1.msra.mxu0 0.0
    %1787 = vmatprep.subr.mxu0 0.0
    %1788 = vmatpush1.msra.mxu0 0.0
    %1789 = vmatprep.subr.mxu0 0.0
    %1790 = vmatpush1.msra.mxu0 0.0
    %1791 = vmatprep.subr.mxu0 0.0
    %1792 = vmatpush1.msra.mxu0 0.0
    %1793 = vmatprep.subr.mxu0 0.0
    %1794 = vmatpush1.msra.mxu0 0.0
    %1795 = vmatprep.mubr.f32.mxu0 0.0
    %1796 = vmatmul.mubr.f32.gmra.mrb[0].mxu0 %v1720
    %v1797 = vpop.f32.mrb[0].mxu0
    %v1798 = vadd.f32 0.0, %v1797
    %v1799 = vpop.f32.mrb[0].mxu0
    %1800 = vmatprep.mubr.f32.mxu0 0.0
    %1801 = vmatmul.mubr.f32.gmra.mrb[0].mxu0 %v1723
    %v1802 = vpop.f32.mrb[0].mxu0
    %v1803 = vadd.f32 0.0, %v1802
    %v1804 = vpop.f32.mrb[0].mxu0
    %1805 = vmatprep.mubr.f32.mxu0 0.0
    %1806 = vmatmul.mubr.f32.gmra.mrb[0].mxu0 %v1726
    %v1807 = vpop.f32.mrb[0].mxu0
    %v1808 = vadd.f32 0.0, %v1807
    %v1809 = vpop.f32.mrb[0].mxu0
    %1810 = vmatprep.mubr.f32.mxu0 0.0
    %1811 = vmatmul.mubr.f32.gmra.mrb[0].mxu0 %v1729
    %v1812 = vpop.f32.mrb[0].mxu0
    %v1813 = vadd.f32 0.0, %v1812
    %v1814 = vpop.f32.mrb[0].mxu0
    %1815 = vdwg.mxu0
    %v1816 = vsel %vm174, %v1119, -inf
    %1817 = vmax.xlane.f32.xlu0 %v1816
    %v1818 = vpop.xlane.xlu0 %1817
    %v1819 = vsel %vm174, %v1124, -inf
    %1820 = vmax.xlane.f32.xlu0 %v1819
    %v1821 = vpop.xlane.xlu0 %1820
    %v1822 = vsel %vm174, %v1129, -inf
    %1823 = vmax.xlane.f32.xlu0 %v1822
    %v1824 = vpop.xlane.xlu0 %1823
    %v1825 = vsel %vm174, %v1134, -inf
    %1826 = vmax.xlane.f32.xlu0 %v1825
    %v1827 = vpop.xlane.xlu0 %1826
    %v1828 = vsel %vm174, %v1216, -inf
    %1829 = vmax.xlane.f32.xlu0 %v1828
    %v1830 = vpop.xlane.xlu0 %1829
    %v1831 = vsel %vm174, %v1221, -inf
    %1832 = vmax.xlane.f32.xlu0 %v1831
    %v1833 = vpop.xlane.xlu0 %1832
    %v1834 = vsel %vm174, %v1226, -inf
    %1835 = vmax.xlane.f32.xlu0 %v1834
    %v1836 = vpop.xlane.xlu0 %1835
    %v1837 = vsel %vm174, %v1231, -inf
    %1838 = vmax.xlane.f32.xlu0 %v1837
    %v1839 = vpop.xlane.xlu0 %1838
    %v1840 = vsel %vm174, %v1313, -inf
    %1841 = vmax.xlane.f32.xlu0 %v1840
    %v1842 = vpop.xlane.xlu0 %1841
    %v1843 = vsel %vm174, %v1318, -inf
    %1844 = vmax.xlane.f32.xlu0 %v1843
    %v1845 = vpop.xlane.xlu0 %1844
    %v1846 = vsel %vm174, %v1323, -inf
    %1847 = vmax.xlane.f32.xlu0 %v1846
    %v1848 = vpop.xlane.xlu0 %1847
    %v1849 = vsel %vm174, %v1328, -inf
    %1850 = vmax.xlane.f32.xlu0 %v1849
    %v1851 = vpop.xlane.xlu0 %1850
    %v1852 = vsel %vm174, %v1410, -inf
    %1853 = vmax.xlane.f32.xlu0 %v1852
    %v1854 = vpop.xlane.xlu0 %1853
    %v1855 = vsel %vm174, %v1415, -inf
    %1856 = vmax.xlane.f32.xlu0 %v1855
    %v1857 = vpop.xlane.xlu0 %1856
    %v1858 = vsel %vm174, %v1420, -inf
    %1859 = vmax.xlane.f32.xlu0 %v1858
    %v1860 = vpop.xlane.xlu0 %1859
    %v1861 = vsel %vm174, %v1425, -inf
    %1862 = vmax.xlane.f32.xlu0 %v1861
    %v1863 = vpop.xlane.xlu0 %1862
    %v1864 = vsel %vm174, %v1507, -inf
    %1865 = vmax.xlane.f32.xlu0 %v1864
    %v1866 = vpop.xlane.xlu0 %1865
    %v1867 = vsel %vm174, %v1512, -inf
    %1868 = vmax.xlane.f32.xlu0 %v1867
    %v1869 = vpop.xlane.xlu0 %1868
    %v1870 = vsel %vm174, %v1517, -inf
    %1871 = vmax.xlane.f32.xlu0 %v1870
    %v1872 = vpop.xlane.xlu0 %1871
    %v1873 = vsel %vm174, %v1522, -inf
    %1874 = vmax.xlane.f32.xlu0 %v1873
    %v1875 = vpop.xlane.xlu0 %1874
    %v1876 = vsel %vm174, %v1604, -inf
    %1877 = vmax.xlane.f32.xlu0 %v1876
    %v1878 = vpop.xlane.xlu0 %1877
    %v1879 = vsel %vm174, %v1609, -inf
    %1880 = vmax.xlane.f32.xlu0 %v1879
    %v1881 = vpop.xlane.xlu0 %1880
    %v1882 = vsel %vm174, %v1614, -inf
    %1883 = vmax.xlane.f32.xlu0 %v1882
    %v1884 = vpop.xlane.xlu0 %1883
    %v1885 = vsel %vm174, %v1619, -inf
    %1886 = vmax.xlane.f32.xlu0 %v1885
    %v1887 = vpop.xlane.xlu0 %1886
    %v1888 = vsel %vm174, %v1701, -inf
    %1889 = vmax.xlane.f32.xlu0 %v1888
    %v1890 = vpop.xlane.xlu0 %1889
    %v1891 = vsel %vm174, %v1706, -inf
    %1892 = vmax.xlane.f32.xlu0 %v1891
    %v1893 = vpop.xlane.xlu0 %1892
    %v1894 = vsel %vm174, %v1711, -inf
    %1895 = vmax.xlane.f32.xlu0 %v1894
    %v1896 = vpop.xlane.xlu0 %1895
    %v1897 = vsel %vm174, %v1716, -inf
    %1898 = vmax.xlane.f32.xlu0 %v1897
    %v1899 = vpop.xlane.xlu0 %1898
    %v1900 = vsel %vm174, %v1798, -inf
    %1901 = vmax.xlane.f32.xlu0 %v1900
    %v1902 = vpop.xlane.xlu0 %1901
    %v1903 = vsel %vm174, %v1803, -inf
    %1904 = vmax.xlane.f32.xlu0 %v1903
    %v1905 = vpop.xlane.xlu0 %1904
    %v1906 = vsel %vm174, %v1808, -inf
    %1907 = vmax.xlane.f32.xlu0 %v1906
    %v1908 = vpop.xlane.xlu0 %1907
    %v1909 = vsel %vm174, %v1813, -inf
    %1910 = vmax.xlane.f32.xlu0 %v1909
    %v1911 = vpop.xlane.xlu0 %1910
    %v1912 = vsub.f32 %v1119, %v1818
    %v1913 = vsub.f32 %v1124, %v1821
    %v1914 = vsub.f32 %v1129, %v1824
    %v1915 = vsub.f32 %v1134, %v1827
    %v1916 = vsub.f32 %v1216, %v1830
    %v1917 = vsub.f32 %v1221, %v1833
    %v1918 = vsub.f32 %v1226, %v1836
    %v1919 = vsub.f32 %v1231, %v1839
    %v1920 = vsub.f32 %v1313, %v1842
    %v1921 = vsub.f32 %v1318, %v1845
    %v1922 = vsub.f32 %v1323, %v1848
    %v1923 = vsub.f32 %v1328, %v1851
    %v1924 = vsub.f32 %v1410, %v1854
    %v1925 = vsub.f32 %v1415, %v1857
    %v1926 = vsub.f32 %v1420, %v1860
    %v1927 = vsub.f32 %v1425, %v1863
    %v1928 = vsub.f32 %v1507, %v1866
    %v1929 = vsub.f32 %v1512, %v1869
    %v1930 = vsub.f32 %v1517, %v1872
    %v1931 = vsub.f32 %v1522, %v1875
    %v1932 = vsub.f32 %v1604, %v1878
    %v1933 = vsub.f32 %v1609, %v1881
    %v1934 = vsub.f32 %v1614, %v1884
    %v1935 = vsub.f32 %v1619, %v1887
    %v1936 = vsub.f32 %v1701, %v1890
    %v1937 = vsub.f32 %v1706, %v1893
    %v1938 = vsub.f32 %v1711, %v1896
    %v1939 = vsub.f32 %v1716, %v1899
    %v1940 = vsub.f32 %v1798, %v1902
    %v1941 = vsub.f32 %v1803, %v1905
    %v1942 = vsub.f32 %v1808, %v1908
    %v1943 = vsub.f32 %v1813, %v1911
    %v1944 = vmul.f32 %v1912, 1.442695
    %v1945 = vpow.pop %v1944
    %v1946 = vmul.f32 %v1913, 1.442695
    %v1947 = vpow.pop %v1946
    %v1948 = vmul.f32 %v1914, 1.442695
    %v1949 = vpow.pop %v1948
    %v1950 = vmul.f32 %v1915, 1.442695
    %v1951 = vpow.pop %v1950
    %v1952 = vmul.f32 %v1916, 1.442695
    %v1953 = vpow.pop %v1952
    %v1954 = vmul.f32 %v1917, 1.442695
    %v1955 = vpow.pop %v1954
    %v1956 = vmul.f32 %v1918, 1.442695
    %v1957 = vpow.pop %v1956
    %v1958 = vmul.f32 %v1919, 1.442695
    %v1959 = vpow.pop %v1958
    %v1960 = vmul.f32 %v1920, 1.442695
    %v1961 = vpow.pop %v1960
    %v1962 = vmul.f32 %v1921, 1.442695
    %v1963 = vpow.pop %v1962
    %v1964 = vmul.f32 %v1922, 1.442695
    %v1965 = vpow.pop %v1964
    %v1966 = vmul.f32 %v1923, 1.442695
    %v1967 = vpow.pop %v1966
    %v1968 = vmul.f32 %v1924, 1.442695
    %v1969 = vpow.pop %v1968
    %v1970 = vmul.f32 %v1925, 1.442695
    %v1971 = vpow.pop %v1970
    %v1972 = vmul.f32 %v1926, 1.442695
    %v1973 = vpow.pop %v1972
    %v1974 = vmul.f32 %v1927, 1.442695
    %v1975 = vpow.pop %v1974
    %v1976 = vmul.f32 %v1928, 1.442695
    %v1977 = vpow.pop %v1976
    %v1978 = vmul.f32 %v1929, 1.442695
    %v1979 = vpow.pop %v1978
    %v1980 = vmul.f32 %v1930, 1.442695
    %v1981 = vpow.pop %v1980
    %v1982 = vmul.f32 %v1931, 1.442695
    %v1983 = vpow.pop %v1982
    %v1984 = vmul.f32 %v1932, 1.442695
    %v1985 = vpow.pop %v1984
    %v1986 = vmul.f32 %v1933, 1.442695
    %v1987 = vpow.pop %v1986
    %v1988 = vmul.f32 %v1934, 1.442695
    %v1989 = vpow.pop %v1988
    %v1990 = vmul.f32 %v1935, 1.442695
    %v1991 = vpow.pop %v1990
    %v1992 = vmul.f32 %v1936, 1.442695
    %v1993 = vpow.pop %v1992
    %v1994 = vmul.f32 %v1937, 1.442695
    %v1995 = vpow.pop %v1994
    %v1996 = vmul.f32 %v1938, 1.442695
    %v1997 = vpow.pop %v1996
    %v1998 = vmul.f32 %v1939, 1.442695
    %v1999 = vpow.pop %v1998
    %v2000 = vmul.f32 %v1940, 1.442695
    %v2001 = vpow.pop %v2000
    %v2002 = vmul.f32 %v1941, 1.442695
    %v2003 = vpow.pop %v2002
    %v2004 = vmul.f32 %v1942, 1.442695
    %v2005 = vpow.pop %v2004
    %v2006 = vmul.f32 %v1943, 1.442695
    %v2007 = vpow.pop %v2006
    %v2008 = vsel %vm174, %v1945, 0.0
    %2009 = vadd.xlane.f32.xlu0 %v2008
    %v2010 = vpop.xlane.xlu0 %2009
    %v2011 = vsel %vm174, %v1947, 0.0
    %2012 = vadd.xlane.f32.xlu0 %v2011
    %v2013 = vpop.xlane.xlu0 %2012
    %v2014 = vsel %vm174, %v1949, 0.0
    %2015 = vadd.xlane.f32.xlu0 %v2014
    %v2016 = vpop.xlane.xlu0 %2015
    %v2017 = vsel %vm174, %v1951, 0.0
    %2018 = vadd.xlane.f32.xlu0 %v2017
    %v2019 = vpop.xlane.xlu0 %2018
    %v2020 = vsel %vm174, %v1953, 0.0
    %2021 = vadd.xlane.f32.xlu0 %v2020
    %v2022 = vpop.xlane.xlu0 %2021
    %v2023 = vsel %vm174, %v1955, 0.0
    %2024 = vadd.xlane.f32.xlu0 %v2023
    %v2025 = vpop.xlane.xlu0 %2024
    %v2026 = vsel %vm174, %v1957, 0.0
    %2027 = vadd.xlane.f32.xlu0 %v2026
    %v2028 = vpop.xlane.xlu0 %2027
    %v2029 = vsel %vm174, %v1959, 0.0
    %2030 = vadd.xlane.f32.xlu0 %v2029
    %v2031 = vpop.xlane.xlu0 %2030
    %v2032 = vsel %vm174, %v1961, 0.0
    %2033 = vadd.xlane.f32.xlu0 %v2032
    %v2034 = vpop.xlane.xlu0 %2033
    %v2035 = vsel %vm174, %v1963, 0.0
    %2036 = vadd.xlane.f32.xlu0 %v2035
    %v2037 = vpop.xlane.xlu0 %2036
    %v2038 = vsel %vm174, %v1965, 0.0
    %2039 = vadd.xlane.f32.xlu0 %v2038
    %v2040 = vpop.xlane.xlu0 %2039
    %v2041 = vsel %vm174, %v1967, 0.0
    %2042 = vadd.xlane.f32.xlu0 %v2041
    %v2043 = vpop.xlane.xlu0 %2042
    %v2044 = vsel %vm174, %v1969, 0.0
    %2045 = vadd.xlane.f32.xlu0 %v2044
    %v2046 = vpop.xlane.xlu0 %2045
    %v2047 = vsel %vm174, %v1971, 0.0
    %2048 = vadd.xlane.f32.xlu0 %v2047
    %v2049 = vpop.xlane.xlu0 %2048
    %v2050 = vsel %vm174, %v1973, 0.0
    %2051 = vadd.xlane.f32.xlu0 %v2050
    %v2052 = vpop.xlane.xlu0 %2051
    %v2053 = vsel %vm174, %v1975, 0.0
    %2054 = vadd.xlane.f32.xlu0 %v2053
    %v2055 = vpop.xlane.xlu0 %2054
    %v2056 = vsel %vm174, %v1977, 0.0
    %2057 = vadd.xlane.f32.xlu0 %v2056
    %v2058 = vpop.xlane.xlu0 %2057
    %v2059 = vsel %vm174, %v1979, 0.0
    %2060 = vadd.xlane.f32.xlu0 %v2059
    %v2061 = vpop.xlane.xlu0 %2060
    %v2062 = vsel %vm174, %v1981, 0.0
    %2063 = vadd.xlane.f32.xlu0 %v2062
    %v2064 = vpop.xlane.xlu0 %2063
    %v2065 = vsel %vm174, %v1983, 0.0
    %2066 = vadd.xlane.f32.xlu0 %v2065
    %v2067 = vpop.xlane.xlu0 %2066
    %v2068 = vsel %vm174, %v1985, 0.0
    %2069 = vadd.xlane.f32.xlu0 %v2068
    %v2070 = vpop.xlane.xlu0 %2069
    %v2071 = vsel %vm174, %v1987, 0.0
    %2072 = vadd.xlane.f32.xlu0 %v2071
    %v2073 = vpop.xlane.xlu0 %2072
    %v2074 = vsel %vm174, %v1989, 0.0
    %2075 = vadd.xlane.f32.xlu0 %v2074
    %v2076 = vpop.xlane.xlu0 %2075
    %v2077 = vsel %vm174, %v1991, 0.0
    %2078 = vadd.xlane.f32.xlu0 %v2077
    %v2079 = vpop.xlane.xlu0 %2078
    %v2080 = vsel %vm174, %v1993, 0.0
    %2081 = vadd.xlane.f32.xlu0 %v2080
    %v2082 = vpop.xlane.xlu0 %2081
    %v2083 = vsel %vm174, %v1995, 0.0
    %2084 = vadd.xlane.f32.xlu0 %v2083
    %v2085 = vpop.xlane.xlu0 %2084
    %v2086 = vsel %vm174, %v1997, 0.0
    %2087 = vadd.xlane.f32.xlu0 %v2086
    %v2088 = vpop.xlane.xlu0 %2087
    %v2089 = vsel %vm174, %v1999, 0.0
    %2090 = vadd.xlane.f32.xlu0 %v2089
    %v2091 = vpop.xlane.xlu0 %2090
    %v2092 = vsel %vm174, %v2001, 0.0
    %2093 = vadd.xlane.f32.xlu0 %v2092
    %v2094 = vpop.xlane.xlu0 %2093
    %v2095 = vsel %vm174, %v2003, 0.0
    %2096 = vadd.xlane.f32.xlu0 %v2095
    %v2097 = vpop.xlane.xlu0 %2096
    %v2098 = vsel %vm174, %v2005, 0.0
    %2099 = vadd.xlane.f32.xlu0 %v2098
    %v2100 = vpop.xlane.xlu0 %2099
    %v2101 = vsel %vm174, %v2007, 0.0
    %2102 = vadd.xlane.f32.xlu0 %v2101
    %v2103 = vpop.xlane.xlu0 %2102
    %v2104 = vrcp.pop %v2010
    %v2105 = vrcp.pop %v2013
    %v2106 = vrcp.pop %v2016
    %v2107 = vrcp.pop %v2019
    %v2108 = vrcp.pop %v2022
    %v2109 = vrcp.pop %v2025
    %v2110 = vrcp.pop %v2028
    %v2111 = vrcp.pop %v2031
    %v2112 = vrcp.pop %v2034
    %v2113 = vrcp.pop %v2037
    %v2114 = vrcp.pop %v2040
    %v2115 = vrcp.pop %v2043
    %v2116 = vrcp.pop %v2046
    %v2117 = vrcp.pop %v2049
    %v2118 = vrcp.pop %v2052
    %v2119 = vrcp.pop %v2055
    %v2120 = vrcp.pop %v2058
    %v2121 = vrcp.pop %v2061
    %v2122 = vrcp.pop %v2064
    %v2123 = vrcp.pop %v2067
    %v2124 = vrcp.pop %v2070
    %v2125 = vrcp.pop %v2073
    %v2126 = vrcp.pop %v2076
    %v2127 = vrcp.pop %v2079
    %v2128 = vrcp.pop %v2082
    %v2129 = vrcp.pop %v2085
    %v2130 = vrcp.pop %v2088
    %v2131 = vrcp.pop %v2091
    %v2132 = vrcp.pop %v2094
    %v2133 = vrcp.pop %v2097
    %v2134 = vrcp.pop %v2100
    %v2135 = vrcp.pop %v2103
    %v2136 = vmul.f32 %v1945, %v2104
    %v2137 = vmul.f32 %v1947, %v2105
    %v2138 = vmul.f32 %v1949, %v2106
    %v2139 = vmul.f32 %v1951, %v2107
    %v2140 = vmul.f32 %v1953, %v2108
    %v2141 = vmul.f32 %v1955, %v2109
    %v2142 = vmul.f32 %v1957, %v2110
    %v2143 = vmul.f32 %v1959, %v2111
    %v2144 = vmul.f32 %v1961, %v2112
    %v2145 = vmul.f32 %v1963, %v2113
    %v2146 = vmul.f32 %v1965, %v2114
    %v2147 = vmul.f32 %v1967, %v2115
    %v2148 = vmul.f32 %v1969, %v2116
    %v2149 = vmul.f32 %v1971, %v2117
    %v2150 = vmul.f32 %v1973, %v2118
    %v2151 = vmul.f32 %v1975, %v2119
    %v2152 = vmul.f32 %v1977, %v2120
    %v2153 = vmul.f32 %v1979, %v2121
    %v2154 = vmul.f32 %v1981, %v2122
    %v2155 = vmul.f32 %v1983, %v2123
    %v2156 = vmul.f32 %v1985, %v2124
    %v2157 = vmul.f32 %v1987, %v2125
    %v2158 = vmul.f32 %v1989, %v2126
    %v2159 = vmul.f32 %v1991, %v2127
    %v2160 = vmul.f32 %v1993, %v2128
    %v2161 = vmul.f32 %v1995, %v2129
    %v2162 = vmul.f32 %v1997, %v2130
    %v2163 = vmul.f32 %v1999, %v2131
    %v2164 = vmul.f32 %v2001, %v2132
    %v2165 = vmul.f32 %v2003, %v2133
    %v2166 = vmul.f32 %v2005, %v2134
    %v2167 = vmul.f32 %v2007, %v2135
    %2172 = vrot.lane.b32.xlu0 %v570, 96
    %v2173 = vpop.permute.xlu0 %2172
    %2174 = vrot.lane.b32.xlu0 %v575, 96
    %v2175 = vpop.permute.xlu0 %2174
    %2176 = vrot.lane.b32.xlu0 %v580, 96
    %v2177 = vpop.permute.xlu0 %2176
    %2178 = vrot.lane.b32.xlu0 %v585, 96
    %v2179 = vpop.permute.xlu0 %2178
    %v2185 = vsel %vm174, %v2136, 0
    %v2188 = vsel %vm174, %v2137, 0
    %v2191 = vsel %vm174, %v2138, 0
    %v2194 = vsel %vm174, %v2139, 0
    %2196 = vmatprep.subr.mxu0 0.0
    %2197 = vmatpush1.msra.mxu0 %v2173
    %2198 = vmatprep.subr.mxu0 0.0
    %2199 = vmatpush1.msra.mxu0 %v2175
    %2200 = vmatprep.subr.mxu0 0.0
    %2201 = vmatpush1.msra.mxu0 %v2177
    %2202 = vmatprep.subr.mxu0 0.0
    %2203 = vmatpush1.msra.mxu0 %v2179
    %2204 = vmatprep.subr.mxu0 0.0
    %2205 = vmatpush1.msra.mxu0 0.0
    %2206 = vmatprep.subr.mxu0 0.0
    %2207 = vmatpush1.msra.mxu0 0.0
    %2208 = vmatprep.subr.mxu0 0.0
    %2209 = vmatpush1.msra.mxu0 0.0
    %2210 = vmatprep.subr.mxu0 0.0
    %2211 = vmatpush1.msra.mxu0 0.0
    %2212 = vmatprep.subr.mxu0 0.0
    %2213 = vmatpush1.msra.mxu0 0.0
    %2214 = vmatprep.subr.mxu0 0.0
    %2215 = vmatpush1.msra.mxu0 0.0
    %2216 = vmatprep.subr.mxu0 0.0
    %2217 = vmatpush1.msra.mxu0 0.0
    %2218 = vmatprep.subr.mxu0 0.0
    %2219 = vmatpush1.msra.mxu0 0.0
    %2220 = vmatprep.subr.mxu0 0.0
    %2221 = vmatpush1.msra.mxu0 0.0
    %2222 = vmatprep.subr.mxu0 0.0
    %2223 = vmatpush1.msra.mxu0 0.0
    %2224 = vmatprep.subr.mxu0 0.0
    %2225 = vmatpush1.msra.mxu0 0.0
    %2226 = vmatprep.subr.mxu0 0.0
    %2227 = vmatpush1.msra.mxu0 0.0
    %2228 = vmatprep.subr.mxu0 0.0
    %2229 = vmatpush1.msra.mxu0 0.0
    %2230 = vmatprep.subr.mxu0 0.0
    %2231 = vmatpush1.msra.mxu0 0.0
    %2232 = vmatprep.subr.mxu0 0.0
    %2233 = vmatpush1.msra.mxu0 0.0
    %2234 = vmatprep.subr.mxu0 0.0
    %2235 = vmatpush1.msra.mxu0 0.0
    %2236 = vmatprep.subr.mxu0 0.0
    %2237 = vmatpush1.msra.mxu0 0.0
    %2238 = vmatprep.subr.mxu0 0.0
    %2239 = vmatpush1.msra.mxu0 0.0
    %2240 = vmatprep.subr.mxu0 0.0
    %2241 = vmatpush1.msra.mxu0 0.0
    %2242 = vmatprep.subr.mxu0 0.0
    %2243 = vmatpush1.msra.mxu0 0.0
    %2244 = vmatprep.subr.mxu0 0.0
    %2245 = vmatpush1.msra.mxu0 0.0
    %2246 = vmatprep.subr.mxu0 0.0
    %2247 = vmatpush1.msra.mxu0 0.0
    %2248 = vmatprep.subr.mxu0 0.0
    %2249 = vmatpush1.msra.mxu0 0.0
    %2250 = vmatprep.subr.mxu0 0.0
    %2251 = vmatpush1.msra.mxu0 0.0
    %2252 = vmatprep.subr.mxu0 0.0
    %2253 = vmatpush1.msra.mxu0 0.0
    %2254 = vmatprep.subr.mxu0 0.0
    %2255 = vmatpush1.msra.mxu0 0.0
    %2256 = vmatprep.subr.mxu0 0.0
    %2257 = vmatpush1.msra.mxu0 0.0
    %2258 = vmatprep.subr.mxu0 0.0
    %2259 = vmatpush1.msra.mxu0 0.0
    %2260 = vmatprep.mubr.f32.mxu0 0.0
    %2261 = vmatmul.mubr.f32.gmra.mrb[0].mxu0 %v2185
    %v2262 = vpop.f32.mrb[0].mxu0
    %v2263 = vadd.f32 0.0, %v2262
    %v2264 = vpop.f32.mrb[0].mxu0
    %2265 = vmatprep.mubr.f32.mxu0 0.0
    %2266 = vmatmul.mubr.f32.gmra.mrb[0].mxu0 %v2188
    %v2267 = vpop.f32.mrb[0].mxu0
    %v2268 = vadd.f32 0.0, %v2267
    %v2269 = vpop.f32.mrb[0].mxu0
    %2270 = vmatprep.mubr.f32.mxu0 0.0
    %2271 = vmatmul.mubr.f32.gmra.mrb[0].mxu0 %v2191
    %v2272 = vpop.f32.mrb[0].mxu0
    %v2273 = vadd.f32 0.0, %v2272
    %v2274 = vpop.f32.mrb[0].mxu0
    %2275 = vmatprep.mubr.f32.mxu0 0.0
    %2276 = vmatmul.mubr.f32.gmra.mrb[0].mxu0 %v2194
    %v2277 = vpop.f32.mrb[0].mxu0
    %v2278 = vadd.f32 0.0, %v2277
    %v2279 = vpop.f32.mrb[0].mxu0
    %2280 = vdwg.mxu0
    %2285 = vrot.lane.b32.xlu0 %v630, 96
    %v2286 = vpop.permute.xlu0 %2285
    %2287 = vrot.lane.b32.xlu0 %v635, 96
    %v2288 = vpop.permute.xlu0 %2287
    %2289 = vrot.lane.b32.xlu0 %v640, 96
    %v2290 = vpop.permute.xlu0 %2289
    %2291 = vrot.lane.b32.xlu0 %v645, 96
    %v2292 = vpop.permute.xlu0 %2291
    %v2298 = vsel %vm174, %v2140, 0
    %v2301 = vsel %vm174, %v2141, 0
    %v2304 = vsel %vm174, %v2142, 0
    %v2307 = vsel %vm174, %v2143, 0
    %2309 = vmatprep.subr.mxu0 0.0
    %2310 = vmatpush1.msra.mxu0 %v2286
    %2311 = vmatprep.subr.mxu0 0.0
    %2312 = vmatpush1.msra.mxu0 %v2288
    %2313 = vmatprep.subr.mxu0 0.0
    %2314 = vmatpush1.msra.mxu0 %v2290
    %2315 = vmatprep.subr.mxu0 0.0
    %2316 = vmatpush1.msra.mxu0 %v2292
    %2317 = vmatprep.subr.mxu0 0.0
    %2318 = vmatpush1.msra.mxu0 0.0
    %2319 = vmatprep.subr.mxu0 0.0
    %2320 = vmatpush1.msra.mxu0 0.0
    %2321 = vmatprep.subr.mxu0 0.0
    %2322 = vmatpush1.msra.mxu0 0.0
    %2323 = vmatprep.subr.mxu0 0.0
    %2324 = vmatpush1.msra.mxu0 0.0
    %2325 = vmatprep.subr.mxu0 0.0
    %2326 = vmatpush1.msra.mxu0 0.0
    %2327 = vmatprep.subr.mxu0 0.0
    %2328 = vmatpush1.msra.mxu0 0.0
    %2329 = vmatprep.subr.mxu0 0.0
    %2330 = vmatpush1.msra.mxu0 0.0
    %2331 = vmatprep.subr.mxu0 0.0
    %2332 = vmatpush1.msra.mxu0 0.0
    %2333 = vmatprep.subr.mxu0 0.0
    %2334 = vmatpush1.msra.mxu0 0.0
    %2335 = vmatprep.subr.mxu0 0.0
    %2336 = vmatpush1.msra.mxu0 0.0
    %2337 = vmatprep.subr.mxu0 0.0
    %2338 = vmatpush1.msra.mxu0 0.0
    %2339 = vmatprep.subr.mxu0 0.0
    %2340 = vmatpush1.msra.mxu0 0.0
    %2341 = vmatprep.subr.mxu0 0.0
    %2342 = vmatpush1.msra.mxu0 0.0
    %2343 = vmatprep.subr.mxu0 0.0
    %2344 = vmatpush1.msra.mxu0 0.0
    %2345 = vmatprep.subr.mxu0 0.0
    %2346 = vmatpush1.msra.mxu0 0.0
    %2347 = vmatprep.subr.mxu0 0.0
    %2348 = vmatpush1.msra.mxu0 0.0
    %2349 = vmatprep.subr.mxu0 0.0
    %2350 = vmatpush1.msra.mxu0 0.0
    %2351 = vmatprep.subr.mxu0 0.0
    %2352 = vmatpush1.msra.mxu0 0.0
    %2353 = vmatprep.subr.mxu0 0.0
    %2354 = vmatpush1.msra.mxu0 0.0
    %2355 = vmatprep.subr.mxu0 0.0
    %2356 = vmatpush1.msra.mxu0 0.0
    %2357 = vmatprep.subr.mxu0 0.0
    %2358 = vmatpush1.msra.mxu0 0.0
    %2359 = vmatprep.subr.mxu0 0.0
    %2360 = vmatpush1.msra.mxu0 0.0
    %2361 = vmatprep.subr.mxu0 0.0
    %2362 = vmatpush1.msra.mxu0 0.0
    %2363 = vmatprep.subr.mxu0 0.0
    %2364 = vmatpush1.msra.mxu0 0.0
    %2365 = vmatprep.subr.mxu0 0.0
    %2366 = vmatpush1.msra.mxu0 0.0
    %2367 = vmatprep.subr.mxu0 0.0
    %2368 = vmatpush1.msra.mxu0 0.0
    %2369 = vmatprep.subr.mxu0 0.0
    %2370 = vmatpush1.msra.mxu0 0.0
    %2371 = vmatprep.subr.mxu0 0.0
    %2372 = vmatpush1.msra.mxu0 0.0
    %2373 = vmatprep.mubr.f32.mxu0 0.0
    %2374 = vmatmul.mubr.f32.gmra.mrb[0].mxu0 %v2298
    %v2375 = vpop.f32.mrb[0].mxu0
    %v2376 = vadd.f32 0.0, %v2375
    %v2377 = vpop.f32.mrb[0].mxu0
    %2378 = vmatprep.mubr.f32.mxu0 0.0
    %2379 = vmatmul.mubr.f32.gmra.mrb[0].mxu0 %v2301
    %v2380 = vpop.f32.mrb[0].mxu0
    %v2381 = vadd.f32 0.0, %v2380
    %v2382 = vpop.f32.mrb[0].mxu0
    %2383 = vmatprep.mubr.f32.mxu0 0.0
    %2384 = vmatmul.mubr.f32.gmra.mrb[0].mxu0 %v2304
    %v2385 = vpop.f32.mrb[0].mxu0
    %v2386 = vadd.f32 0.0, %v2385
    %v2387 = vpop.f32.mrb[0].mxu0
    %2388 = vmatprep.mubr.f32.mxu0 0.0
    %2389 = vmatmul.mubr.f32.gmra.mrb[0].mxu0 %v2307
    %v2390 = vpop.f32.mrb[0].mxu0
    %v2391 = vadd.f32 0.0, %v2390
    %v2392 = vpop.f32.mrb[0].mxu0
    %2393 = vdwg.mxu0
    %2398 = vrot.lane.b32.xlu0 %v690, 96
    %v2399 = vpop.permute.xlu0 %2398
    %2400 = vrot.lane.b32.xlu0 %v695, 96
    %v2401 = vpop.permute.xlu0 %2400
    %2402 = vrot.lane.b32.xlu0 %v700, 96
    %v2403 = vpop.permute.xlu0 %2402
    %2404 = vrot.lane.b32.xlu0 %v705, 96
    %v2405 = vpop.permute.xlu0 %2404
    %v2411 = vsel %vm174, %v2144, 0
    %v2414 = vsel %vm174, %v2145, 0
    %v2417 = vsel %vm174, %v2146, 0
    %v2420 = vsel %vm174, %v2147, 0
    %2422 = vmatprep.subr.mxu0 0.0
    %2423 = vmatpush1.msra.mxu0 %v2399
    %2424 = vmatprep.subr.mxu0 0.0
    %2425 = vmatpush1.msra.mxu0 %v2401
    %2426 = vmatprep.subr.mxu0 0.0
    %2427 = vmatpush1.msra.mxu0 %v2403
    %2428 = vmatprep.subr.mxu0 0.0
    %2429 = vmatpush1.msra.mxu0 %v2405
    %2430 = vmatprep.subr.mxu0 0.0
    %2431 = vmatpush1.msra.mxu0 0.0
    %2432 = vmatprep.subr.mxu0 0.0
    %2433 = vmatpush1.msra.mxu0 0.0
    %2434 = vmatprep.subr.mxu0 0.0
    %2435 = vmatpush1.msra.mxu0 0.0
    %2436 = vmatprep.subr.mxu0 0.0
    %2437 = vmatpush1.msra.mxu0 0.0
    %2438 = vmatprep.subr.mxu0 0.0
    %2439 = vmatpush1.msra.mxu0 0.0
    %2440 = vmatprep.subr.mxu0 0.0
    %2441 = vmatpush1.msra.mxu0 0.0
    %2442 = vmatprep.subr.mxu0 0.0
    %2443 = vmatpush1.msra.mxu0 0.0
    %2444 = vmatprep.subr.mxu0 0.0
    %2445 = vmatpush1.msra.mxu0 0.0
    %2446 = vmatprep.subr.mxu0 0.0
    %2447 = vmatpush1.msra.mxu0 0.0
    %2448 = vmatprep.subr.mxu0 0.0
    %2449 = vmatpush1.msra.mxu0 0.0
    %2450 = vmatprep.subr.mxu0 0.0
    %2451 = vmatpush1.msra.mxu0 0.0
    %2452 = vmatprep.subr.mxu0 0.0
    %2453 = vmatpush1.msra.mxu0 0.0
    %2454 = vmatprep.subr.mxu0 0.0
    %2455 = vmatpush1.msra.mxu0 0.0
    %2456 = vmatprep.subr.mxu0 0.0
    %2457 = vmatpush1.msra.mxu0 0.0
    %2458 = vmatprep.subr.mxu0 0.0
    %2459 = vmatpush1.msra.mxu0 0.0
    %2460 = vmatprep.subr.mxu0 0.0
    %2461 = vmatpush1.msra.mxu0 0.0
    %2462 = vmatprep.subr.mxu0 0.0
    %2463 = vmatpush1.msra.mxu0 0.0
    %2464 = vmatprep.subr.mxu0 0.0
    %2465 = vmatpush1.msra.mxu0 0.0
    %2466 = vmatprep.subr.mxu0 0.0
    %2467 = vmatpush1.msra.mxu0 0.0
    %2468 = vmatprep.subr.mxu0 0.0
    %2469 = vmatpush1.msra.mxu0 0.0
    %2470 = vmatprep.subr.mxu0 0.0
    %2471 = vmatpush1.msra.mxu0 0.0
    %2472 = vmatprep.subr.mxu0 0.0
    %2473 = vmatpush1.msra.mxu0 0.0
    %2474 = vmatprep.subr.mxu0 0.0
    %2475 = vmatpush1.msra.mxu0 0.0
    %2476 = vmatprep.subr.mxu0 0.0
    %2477 = vmatpush1.msra.mxu0 0.0
    %2478 = vmatprep.subr.mxu0 0.0
    %2479 = vmatpush1.msra.mxu0 0.0
    %2480 = vmatprep.subr.mxu0 0.0
    %2481 = vmatpush1.msra.mxu0 0.0
    %2482 = vmatprep.subr.mxu0 0.0
    %2483 = vmatpush1.msra.mxu0 0.0
    %2484 = vmatprep.subr.mxu0 0.0
    %2485 = vmatpush1.msra.mxu0 0.0
    %2486 = vmatprep.mubr.f32.mxu0 0.0
    %2487 = vmatmul.mubr.f32.gmra.mrb[0].mxu0 %v2411
    %v2488 = vpop.f32.mrb[0].mxu0
    %v2489 = vadd.f32 0.0, %v2488
    %v2490 = vpop.f32.mrb[0].mxu0
    %2491 = vmatprep.mubr.f32.mxu0 0.0
    %2492 = vmatmul.mubr.f32.gmra.mrb[0].mxu0 %v2414
    %v2493 = vpop.f32.mrb[0].mxu0
    %v2494 = vadd.f32 0.0, %v2493
    %v2495 = vpop.f32.mrb[0].mxu0
    %2496 = vmatprep.mubr.f32.mxu0 0.0
    %2497 = vmatmul.mubr.f32.gmra.mrb[0].mxu0 %v2417
    %v2498 = vpop.f32.mrb[0].mxu0
    %v2499 = vadd.f32 0.0, %v2498
    %v2500 = vpop.f32.mrb[0].mxu0
    %2501 = vmatprep.mubr.f32.mxu0 0.0
    %2502 = vmatmul.mubr.f32.gmra.mrb[0].mxu0 %v2420
    %v2503 = vpop.f32.mrb[0].mxu0
    %v2504 = vadd.f32 0.0, %v2503
    %v2505 = vpop.f32.mrb[0].mxu0
    %2506 = vdwg.mxu0
    %2511 = vrot.lane.b32.xlu0 %v750, 96
    %v2512 = vpop.permute.xlu0 %2511
    %2513 = vrot.lane.b32.xlu0 %v755, 96
    %v2514 = vpop.permute.xlu0 %2513
    %2515 = vrot.lane.b32.xlu0 %v760, 96
    %v2516 = vpop.permute.xlu0 %2515
    %2517 = vrot.lane.b32.xlu0 %v765, 96
    %v2518 = vpop.permute.xlu0 %2517
    %v2524 = vsel %vm174, %v2148, 0
    %v2527 = vsel %vm174, %v2149, 0
    %v2530 = vsel %vm174, %v2150, 0
    %v2533 = vsel %vm174, %v2151, 0
    %2535 = vmatprep.subr.mxu0 0.0
    %2536 = vmatpush1.msra.mxu0 %v2512
    %2537 = vmatprep.subr.mxu0 0.0
    %2538 = vmatpush1.msra.mxu0 %v2514
    %2539 = vmatprep.subr.mxu0 0.0
    %2540 = vmatpush1.msra.mxu0 %v2516
    %2541 = vmatprep.subr.mxu0 0.0
    %2542 = vmatpush1.msra.mxu0 %v2518
    %2543 = vmatprep.subr.mxu0 0.0
    %2544 = vmatpush1.msra.mxu0 0.0
    %2545 = vmatprep.subr.mxu0 0.0
    %2546 = vmatpush1.msra.mxu0 0.0
    %2547 = vmatprep.subr.mxu0 0.0
    %2548 = vmatpush1.msra.mxu0 0.0
    %2549 = vmatprep.subr.mxu0 0.0
    %2550 = vmatpush1.msra.mxu0 0.0
    %2551 = vmatprep.subr.mxu0 0.0
    %2552 = vmatpush1.msra.mxu0 0.0
    %2553 = vmatprep.subr.mxu0 0.0
    %2554 = vmatpush1.msra.mxu0 0.0
    %2555 = vmatprep.subr.mxu0 0.0
    %2556 = vmatpush1.msra.mxu0 0.0
    %2557 = vmatprep.subr.mxu0 0.0
    %2558 = vmatpush1.msra.mxu0 0.0
    %2559 = vmatprep.subr.mxu0 0.0
    %2560 = vmatpush1.msra.mxu0 0.0
    %2561 = vmatprep.subr.mxu0 0.0
    %2562 = vmatpush1.msra.mxu0 0.0
    %2563 = vmatprep.subr.mxu0 0.0
    %2564 = vmatpush1.msra.mxu0 0.0
    %2565 = vmatprep.subr.mxu0 0.0
    %2566 = vmatpush1.msra.mxu0 0.0
    %2567 = vmatprep.subr.mxu0 0.0
    %2568 = vmatpush1.msra.mxu0 0.0
    %2569 = vmatprep.subr.mxu0 0.0
    %2570 = vmatpush1.msra.mxu0 0.0
    %2571 = vmatprep.subr.mxu0 0.0
    %2572 = vmatpush1.msra.mxu0 0.0
    %2573 = vmatprep.subr.mxu0 0.0
    %2574 = vmatpush1.msra.mxu0 0.0
    %2575 = vmatprep.subr.mxu0 0.0
    %2576 = vmatpush1.msra.mxu0 0.0
    %2577 = vmatprep.subr.mxu0 0.0
    %2578 = vmatpush1.msra.mxu0 0.0
    %2579 = vmatprep.subr.mxu0 0.0
    %2580 = vmatpush1.msra.mxu0 0.0
    %2581 = vmatprep.subr.mxu0 0.0
    %2582 = vmatpush1.msra.mxu0 0.0
    %2583 = vmatprep.subr.mxu0 0.0
    %2584 = vmatpush1.msra.mxu0 0.0
    %2585 = vmatprep.subr.mxu0 0.0
    %2586 = vmatpush1.msra.mxu0 0.0
    %2587 = vmatprep.subr.mxu0 0.0
    %2588 = vmatpush1.msra.mxu0 0.0
    %2589 = vmatprep.subr.mxu0 0.0
    %2590 = vmatpush1.msra.mxu0 0.0
    %2591 = vmatprep.subr.mxu0 0.0
    %2592 = vmatpush1.msra.mxu0 0.0
    %2593 = vmatprep.subr.mxu0 0.0
    %2594 = vmatpush1.msra.mxu0 0.0
    %2595 = vmatprep.subr.mxu0 0.0
    %2596 = vmatpush1.msra.mxu0 0.0
    %2597 = vmatprep.subr.mxu0 0.0
    %2598 = vmatpush1.msra.mxu0 0.0
    %2599 = vmatprep.mubr.f32.mxu0 0.0
    %2600 = vmatmul.mubr.f32.gmra.mrb[0].mxu0 %v2524
    %v2601 = vpop.f32.mrb[0].mxu0
    %v2602 = vadd.f32 0.0, %v2601
    %v2603 = vpop.f32.mrb[0].mxu0
    %2604 = vmatprep.mubr.f32.mxu0 0.0
    %2605 = vmatmul.mubr.f32.gmra.mrb[0].mxu0 %v2527
    %v2606 = vpop.f32.mrb[0].mxu0
    %v2607 = vadd.f32 0.0, %v2606
    %v2608 = vpop.f32.mrb[0].mxu0
    %2609 = vmatprep.mubr.f32.mxu0 0.0
    %2610 = vmatmul.mubr.f32.gmra.mrb[0].mxu0 %v2530
    %v2611 = vpop.f32.mrb[0].mxu0
    %v2612 = vadd.f32 0.0, %v2611
    %v2613 = vpop.f32.mrb[0].mxu0
    %2614 = vmatprep.mubr.f32.mxu0 0.0
    %2615 = vmatmul.mubr.f32.gmra.mrb[0].mxu0 %v2533
    %v2616 = vpop.f32.mrb[0].mxu0
    %v2617 = vadd.f32 0.0, %v2616
    %v2618 = vpop.f32.mrb[0].mxu0
    %2619 = vdwg.mxu0
    %2624 = vrot.lane.b32.xlu0 %v810, 96
    %v2625 = vpop.permute.xlu0 %2624
    %2626 = vrot.lane.b32.xlu0 %v815, 96
    %v2627 = vpop.permute.xlu0 %2626
    %2628 = vrot.lane.b32.xlu0 %v820, 96
    %v2629 = vpop.permute.xlu0 %2628
    %2630 = vrot.lane.b32.xlu0 %v825, 96
    %v2631 = vpop.permute.xlu0 %2630
    %v2637 = vsel %vm174, %v2152, 0
    %v2640 = vsel %vm174, %v2153, 0
    %v2643 = vsel %vm174, %v2154, 0
    %v2646 = vsel %vm174, %v2155, 0
    %2648 = vmatprep.subr.mxu0 0.0
    %2649 = vmatpush1.msra.mxu0 %v2625
    %2650 = vmatprep.subr.mxu0 0.0
    %2651 = vmatpush1.msra.mxu0 %v2627
    %2652 = vmatprep.subr.mxu0 0.0
    %2653 = vmatpush1.msra.mxu0 %v2629
    %2654 = vmatprep.subr.mxu0 0.0
    %2655 = vmatpush1.msra.mxu0 %v2631
    %2656 = vmatprep.subr.mxu0 0.0
    %2657 = vmatpush1.msra.mxu0 0.0
    %2658 = vmatprep.subr.mxu0 0.0
    %2659 = vmatpush1.msra.mxu0 0.0
    %2660 = vmatprep.subr.mxu0 0.0
    %2661 = vmatpush1.msra.mxu0 0.0
    %2662 = vmatprep.subr.mxu0 0.0
    %2663 = vmatpush1.msra.mxu0 0.0
    %2664 = vmatprep.subr.mxu0 0.0
    %2665 = vmatpush1.msra.mxu0 0.0
    %2666 = vmatprep.subr.mxu0 0.0
    %2667 = vmatpush1.msra.mxu0 0.0
    %2668 = vmatprep.subr.mxu0 0.0
    %2669 = vmatpush1.msra.mxu0 0.0
    %2670 = vmatprep.subr.mxu0 0.0
    %2671 = vmatpush1.msra.mxu0 0.0
    %2672 = vmatprep.subr.mxu0 0.0
    %2673 = vmatpush1.msra.mxu0 0.0
    %2674 = vmatprep.subr.mxu0 0.0
    %2675 = vmatpush1.msra.mxu0 0.0
    %2676 = vmatprep.subr.mxu0 0.0
    %2677 = vmatpush1.msra.mxu0 0.0
    %2678 = vmatprep.subr.mxu0 0.0
    %2679 = vmatpush1.msra.mxu0 0.0
    %2680 = vmatprep.subr.mxu0 0.0
    %2681 = vmatpush1.msra.mxu0 0.0
    %2682 = vmatprep.subr.mxu0 0.0
    %2683 = vmatpush1.msra.mxu0 0.0
    %2684 = vmatprep.subr.mxu0 0.0
    %2685 = vmatpush1.msra.mxu0 0.0
    %2686 = vmatprep.subr.mxu0 0.0
    %2687 = vmatpush1.msra.mxu0 0.0
    %2688 = vmatprep.subr.mxu0 0.0
    %2689 = vmatpush1.msra.mxu0 0.0
    %2690 = vmatprep.subr.mxu0 0.0
    %2691 = vmatpush1.msra.mxu0 0.0
    %2692 = vmatprep.subr.mxu0 0.0
    %2693 = vmatpush1.msra.mxu0 0.0
    %2694 = vmatprep.subr.mxu0 0.0
    %2695 = vmatpush1.msra.mxu0 0.0
    %2696 = vmatprep.subr.mxu0 0.0
    %2697 = vmatpush1.msra.mxu0 0.0
    %2698 = vmatprep.subr.mxu0 0.0
    %2699 = vmatpush1.msra.mxu0 0.0
    %2700 = vmatprep.subr.mxu0 0.0
    %2701 = vmatpush1.msra.mxu0 0.0
    %2702 = vmatprep.subr.mxu0 0.0
    %2703 = vmatpush1.msra.mxu0 0.0
    %2704 = vmatprep.subr.mxu0 0.0
    %2705 = vmatpush1.msra.mxu0 0.0
    %2706 = vmatprep.subr.mxu0 0.0
    %2707 = vmatpush1.msra.mxu0 0.0
    %2708 = vmatprep.subr.mxu0 0.0
    %2709 = vmatpush1.msra.mxu0 0.0
    %2710 = vmatprep.subr.mxu0 0.0
    %2711 = vmatpush1.msra.mxu0 0.0
    %2712 = vmatprep.mubr.f32.mxu0 0.0
    %2713 = vmatmul.mubr.f32.gmra.mrb[0].mxu0 %v2637
    %v2714 = vpop.f32.mrb[0].mxu0
    %v2715 = vadd.f32 0.0, %v2714
    %v2716 = vpop.f32.mrb[0].mxu0
    %2717 = vmatprep.mubr.f32.mxu0 0.0
    %2718 = vmatmul.mubr.f32.gmra.mrb[0].mxu0 %v2640
    %v2719 = vpop.f32.mrb[0].mxu0
    %v2720 = vadd.f32 0.0, %v2719
    %v2721 = vpop.f32.mrb[0].mxu0
    %2722 = vmatprep.mubr.f32.mxu0 0.0
    %2723 = vmatmul.mubr.f32.gmra.mrb[0].mxu0 %v2643
    %v2724 = vpop.f32.mrb[0].mxu0
    %v2725 = vadd.f32 0.0, %v2724
    %v2726 = vpop.f32.mrb[0].mxu0
    %2727 = vmatprep.mubr.f32.mxu0 0.0
    %2728 = vmatmul.mubr.f32.gmra.mrb[0].mxu0 %v2646
    %v2729 = vpop.f32.mrb[0].mxu0
    %v2730 = vadd.f32 0.0, %v2729
    %v2731 = vpop.f32.mrb[0].mxu0
    %2732 = vdwg.mxu0
    %2737 = vrot.lane.b32.xlu0 %v870, 96
    %v2738 = vpop.permute.xlu0 %2737
    %2739 = vrot.lane.b32.xlu0 %v875, 96
    %v2740 = vpop.permute.xlu0 %2739
    %2741 = vrot.lane.b32.xlu0 %v880, 96
    %v2742 = vpop.permute.xlu0 %2741
    %2743 = vrot.lane.b32.xlu0 %v885, 96
    %v2744 = vpop.permute.xlu0 %2743
    %v2750 = vsel %vm174, %v2156, 0
    %v2753 = vsel %vm174, %v2157, 0
    %v2756 = vsel %vm174, %v2158, 0
    %v2759 = vsel %vm174, %v2159, 0
    %2761 = vmatprep.subr.mxu0 0.0
    %2762 = vmatpush1.msra.mxu0 %v2738
    %2763 = vmatprep.subr.mxu0 0.0
    %2764 = vmatpush1.msra.mxu0 %v2740
    %2765 = vmatprep.subr.mxu0 0.0
    %2766 = vmatpush1.msra.mxu0 %v2742
    %2767 = vmatprep.subr.mxu0 0.0
    %2768 = vmatpush1.msra.mxu0 %v2744
    %2769 = vmatprep.subr.mxu0 0.0
    %2770 = vmatpush1.msra.mxu0 0.0
    %2771 = vmatprep.subr.mxu0 0.0
    %2772 = vmatpush1.msra.mxu0 0.0
    %2773 = vmatprep.subr.mxu0 0.0
    %2774 = vmatpush1.msra.mxu0 0.0
    %2775 = vmatprep.subr.mxu0 0.0
    %2776 = vmatpush1.msra.mxu0 0.0
    %2777 = vmatprep.subr.mxu0 0.0
    %2778 = vmatpush1.msra.mxu0 0.0
    %2779 = vmatprep.subr.mxu0 0.0
    %2780 = vmatpush1.msra.mxu0 0.0
    %2781 = vmatprep.subr.mxu0 0.0
    %2782 = vmatpush1.msra.mxu0 0.0
    %2783 = vmatprep.subr.mxu0 0.0
    %2784 = vmatpush1.msra.mxu0 0.0
    %2785 = vmatprep.subr.mxu0 0.0
    %2786 = vmatpush1.msra.mxu0 0.0
    %2787 = vmatprep.subr.mxu0 0.0
    %2788 = vmatpush1.msra.mxu0 0.0
    %2789 = vmatprep.subr.mxu0 0.0
    %2790 = vmatpush1.msra.mxu0 0.0
    %2791 = vmatprep.subr.mxu0 0.0
    %2792 = vmatpush1.msra.mxu0 0.0
    %2793 = vmatprep.subr.mxu0 0.0
    %2794 = vmatpush1.msra.mxu0 0.0
    %2795 = vmatprep.subr.mxu0 0.0
    %2796 = vmatpush1.msra.mxu0 0.0
    %2797 = vmatprep.subr.mxu0 0.0
    %2798 = vmatpush1.msra.mxu0 0.0
    %2799 = vmatprep.subr.mxu0 0.0
    %2800 = vmatpush1.msra.mxu0 0.0
    %2801 = vmatprep.subr.mxu0 0.0
    %2802 = vmatpush1.msra.mxu0 0.0
    %2803 = vmatprep.subr.mxu0 0.0
    %2804 = vmatpush1.msra.mxu0 0.0
    %2805 = vmatprep.subr.mxu0 0.0
    %2806 = vmatpush1.msra.mxu0 0.0
    %2807 = vmatprep.subr.mxu0 0.0
    %2808 = vmatpush1.msra.mxu0 0.0
    %2809 = vmatprep.subr.mxu0 0.0
    %2810 = vmatpush1.msra.mxu0 0.0
    %2811 = vmatprep.subr.mxu0 0.0
    %2812 = vmatpush1.msra.mxu0 0.0
    %2813 = vmatprep.subr.mxu0 0.0
    %2814 = vmatpush1.msra.mxu0 0.0
    %2815 = vmatprep.subr.mxu0 0.0
    %2816 = vmatpush1.msra.mxu0 0.0
    %2817 = vmatprep.subr.mxu0 0.0
    %2818 = vmatpush1.msra.mxu0 0.0
    %2819 = vmatprep.subr.mxu0 0.0
    %2820 = vmatpush1.msra.mxu0 0.0
    %2821 = vmatprep.subr.mxu0 0.0
    %2822 = vmatpush1.msra.mxu0 0.0
    %2823 = vmatprep.subr.mxu0 0.0
    %2824 = vmatpush1.msra.mxu0 0.0
    %2825 = vmatprep.mubr.f32.mxu0 0.0
    %2826 = vmatmul.mubr.f32.gmra.mrb[0].mxu0 %v2750
    %v2827 = vpop.f32.mrb[0].mxu0
    %v2828 = vadd.f32 0.0, %v2827
    %v2829 = vpop.f32.mrb[0].mxu0
    %2830 = vmatprep.mubr.f32.mxu0 0.0
    %2831 = vmatmul.mubr.f32.gmra.mrb[0].mxu0 %v2753
    %v2832 = vpop.f32.mrb[0].mxu0
    %v2833 = vadd.f32 0.0, %v2832
    %v2834 = vpop.f32.mrb[0].mxu0
    %2835 = vmatprep.mubr.f32.mxu0 0.0
    %2836 = vmatmul.mubr.f32.gmra.mrb[0].mxu0 %v2756
    %v2837 = vpop.f32.mrb[0].mxu0
    %v2838 = vadd.f32 0.0, %v2837
    %v2839 = vpop.f32.mrb[0].mxu0
    %2840 = vmatprep.mubr.f32.mxu0 0.0
    %2841 = vmatmul.mubr.f32.gmra.mrb[0].mxu0 %v2759
    %v2842 = vpop.f32.mrb[0].mxu0
    %v2843 = vadd.f32 0.0, %v2842
    %v2844 = vpop.f32.mrb[0].mxu0
    %2845 = vdwg.mxu0
    %2850 = vrot.lane.b32.xlu0 %v930, 96
    %v2851 = vpop.permute.xlu0 %2850
    %2852 = vrot.lane.b32.xlu0 %v935, 96
    %v2853 = vpop.permute.xlu0 %2852
    %2854 = vrot.lane.b32.xlu0 %v940, 96
    %v2855 = vpop.permute.xlu0 %2854
    %2856 = vrot.lane.b32.xlu0 %v945, 96
    %v2857 = vpop.permute.xlu0 %2856
    %v2863 = vsel %vm174, %v2160, 0
    %v2866 = vsel %vm174, %v2161, 0
    %v2869 = vsel %vm174, %v2162, 0
    %v2872 = vsel %vm174, %v2163, 0
    %2874 = vmatprep.subr.mxu0 0.0
    %2875 = vmatpush1.msra.mxu0 %v2851
    %2876 = vmatprep.subr.mxu0 0.0
    %2877 = vmatpush1.msra.mxu0 %v2853
    %2878 = vmatprep.subr.mxu0 0.0
    %2879 = vmatpush1.msra.mxu0 %v2855
    %2880 = vmatprep.subr.mxu0 0.0
    %2881 = vmatpush1.msra.mxu0 %v2857
    %2882 = vmatprep.subr.mxu0 0.0
    %2883 = vmatpush1.msra.mxu0 0.0
    %2884 = vmatprep.subr.mxu0 0.0
    %2885 = vmatpush1.msra.mxu0 0.0
    %2886 = vmatprep.subr.mxu0 0.0
    %2887 = vmatpush1.msra.mxu0 0.0
    %2888 = vmatprep.subr.mxu0 0.0
    %2889 = vmatpush1.msra.mxu0 0.0
    %2890 = vmatprep.subr.mxu0 0.0
    %2891 = vmatpush1.msra.mxu0 0.0
    %2892 = vmatprep.subr.mxu0 0.0
    %2893 = vmatpush1.msra.mxu0 0.0
    %2894 = vmatprep.subr.mxu0 0.0
    %2895 = vmatpush1.msra.mxu0 0.0
    %2896 = vmatprep.subr.mxu0 0.0
    %2897 = vmatpush1.msra.mxu0 0.0
    %2898 = vmatprep.subr.mxu0 0.0
    %2899 = vmatpush1.msra.mxu0 0.0
    %2900 = vmatprep.subr.mxu0 0.0
    %2901 = vmatpush1.msra.mxu0 0.0
    %2902 = vmatprep.subr.mxu0 0.0
    %2903 = vmatpush1.msra.mxu0 0.0
    %2904 = vmatprep.subr.mxu0 0.0
    %2905 = vmatpush1.msra.mxu0 0.0
    %2906 = vmatprep.subr.mxu0 0.0
    %2907 = vmatpush1.msra.mxu0 0.0
    %2908 = vmatprep.subr.mxu0 0.0
    %2909 = vmatpush1.msra.mxu0 0.0
    %2910 = vmatprep.subr.mxu0 0.0
    %2911 = vmatpush1.msra.mxu0 0.0
    %2912 = vmatprep.subr.mxu0 0.0
    %2913 = vmatpush1.msra.mxu0 0.0
    %2914 = vmatprep.subr.mxu0 0.0
    %2915 = vmatpush1.msra.mxu0 0.0
    %2916 = vmatprep.subr.mxu0 0.0
    %2917 = vmatpush1.msra.mxu0 0.0
    %2918 = vmatprep.subr.mxu0 0.0
    %2919 = vmatpush1.msra.mxu0 0.0
    %2920 = vmatprep.subr.mxu0 0.0
    %2921 = vmatpush1.msra.mxu0 0.0
    %2922 = vmatprep.subr.mxu0 0.0
    %2923 = vmatpush1.msra.mxu0 0.0
    %2924 = vmatprep.subr.mxu0 0.0
    %2925 = vmatpush1.msra.mxu0 0.0
    %2926 = vmatprep.subr.mxu0 0.0
    %2927 = vmatpush1.msra.mxu0 0.0
    %2928 = vmatprep.subr.mxu0 0.0
    %2929 = vmatpush1.msra.mxu0 0.0
    %2930 = vmatprep.subr.mxu0 0.0
    %2931 = vmatpush1.msra.mxu0 0.0
    %2932 = vmatprep.subr.mxu0 0.0
    %2933 = vmatpush1.msra.mxu0 0.0
    %2934 = vmatprep.subr.mxu0 0.0
    %2935 = vmatpush1.msra.mxu0 0.0
    %2936 = vmatprep.subr.mxu0 0.0
    %2937 = vmatpush1.msra.mxu0 0.0
    %2938 = vmatprep.mubr.f32.mxu0 0.0
    %2939 = vmatmul.mubr.f32.gmra.mrb[0].mxu0 %v2863
    %v2940 = vpop.f32.mrb[0].mxu0
    %v2941 = vadd.f32 0.0, %v2940
    %v2942 = vpop.f32.mrb[0].mxu0
    %2943 = vmatprep.mubr.f32.mxu0 0.0
    %2944 = vmatmul.mubr.f32.gmra.mrb[0].mxu0 %v2866
    %v2945 = vpop.f32.mrb[0].mxu0
    %v2946 = vadd.f32 0.0, %v2945
    %v2947 = vpop.f32.mrb[0].mxu0
    %2948 = vmatprep.mubr.f32.mxu0 0.0
    %2949 = vmatmul.mubr.f32.gmra.mrb[0].mxu0 %v2869
    %v2950 = vpop.f32.mrb[0].mxu0
    %v2951 = vadd.f32 0.0, %v2950
    %v2952 = vpop.f32.mrb[0].mxu0
    %2953 = vmatprep.mubr.f32.mxu0 0.0
    %2954 = vmatmul.mubr.f32.gmra.mrb[0].mxu0 %v2872
    %v2955 = vpop.f32.mrb[0].mxu0
    %v2956 = vadd.f32 0.0, %v2955
    %v2957 = vpop.f32.mrb[0].mxu0
    %2958 = vdwg.mxu0
    %2963 = vrot.lane.b32.xlu0 %v990, 96
    %v2964 = vpop.permute.xlu0 %2963
    %2965 = vrot.lane.b32.xlu0 %v995, 96
    %v2966 = vpop.permute.xlu0 %2965
    %2967 = vrot.lane.b32.xlu0 %v1000, 96
    %v2968 = vpop.permute.xlu0 %2967
    %2969 = vrot.lane.b32.xlu0 %v1005, 96
    %v2970 = vpop.permute.xlu0 %2969
    %v2976 = vsel %vm174, %v2164, 0
    %v2979 = vsel %vm174, %v2165, 0
    %v2982 = vsel %vm174, %v2166, 0
    %v2985 = vsel %vm174, %v2167, 0
    %2987 = vmatprep.subr.mxu0 0.0
    %2988 = vmatpush1.msra.mxu0 %v2964
    %2989 = vmatprep.subr.mxu0 0.0
    %2990 = vmatpush1.msra.mxu0 %v2966
    %2991 = vmatprep.subr.mxu0 0.0
    %2992 = vmatpush1.msra.mxu0 %v2968
    %2993 = vmatprep.subr.mxu0 0.0
    %2994 = vmatpush1.msra.mxu0 %v2970
    %2995 = vmatprep.subr.mxu0 0.0
    %2996 = vmatpush1.msra.mxu0 0.0
    %2997 = vmatprep.subr.mxu0 0.0
    %2998 = vmatpush1.msra.mxu0 0.0
    %2999 = vmatprep.subr.mxu0 0.0
    %3000 = vmatpush1.msra.mxu0 0.0
    %3001 = vmatprep.subr.mxu0 0.0
    %3002 = vmatpush1.msra.mxu0 0.0
    %3003 = vmatprep.subr.mxu0 0.0
    %3004 = vmatpush1.msra.mxu0 0.0
    %3005 = vmatprep.subr.mxu0 0.0
    %3006 = vmatpush1.msra.mxu0 0.0
    %3007 = vmatprep.subr.mxu0 0.0
    %3008 = vmatpush1.msra.mxu0 0.0
    %3009 = vmatprep.subr.mxu0 0.0
    %3010 = vmatpush1.msra.mxu0 0.0
    %3011 = vmatprep.subr.mxu0 0.0
    %3012 = vmatpush1.msra.mxu0 0.0
    %3013 = vmatprep.subr.mxu0 0.0
    %3014 = vmatpush1.msra.mxu0 0.0
    %3015 = vmatprep.subr.mxu0 0.0
    %3016 = vmatpush1.msra.mxu0 0.0
    %3017 = vmatprep.subr.mxu0 0.0
    %3018 = vmatpush1.msra.mxu0 0.0
    %3019 = vmatprep.subr.mxu0 0.0
    %3020 = vmatpush1.msra.mxu0 0.0
    %3021 = vmatprep.subr.mxu0 0.0
    %3022 = vmatpush1.msra.mxu0 0.0
    %3023 = vmatprep.subr.mxu0 0.0
    %3024 = vmatpush1.msra.mxu0 0.0
    %3025 = vmatprep.subr.mxu0 0.0
    %3026 = vmatpush1.msra.mxu0 0.0
    %3027 = vmatprep.subr.mxu0 0.0
    %3028 = vmatpush1.msra.mxu0 0.0
    %3029 = vmatprep.subr.mxu0 0.0
    %3030 = vmatpush1.msra.mxu0 0.0
    %3031 = vmatprep.subr.mxu0 0.0
    %3032 = vmatpush1.msra.mxu0 0.0
    %3033 = vmatprep.subr.mxu0 0.0
    %3034 = vmatpush1.msra.mxu0 0.0
    %3035 = vmatprep.subr.mxu0 0.0
    %3036 = vmatpush1.msra.mxu0 0.0
    %3037 = vmatprep.subr.mxu0 0.0
    %3038 = vmatpush1.msra.mxu0 0.0
    %3039 = vmatprep.subr.mxu0 0.0
    %3040 = vmatpush1.msra.mxu0 0.0
    %3041 = vmatprep.subr.mxu0 0.0
    %3042 = vmatpush1.msra.mxu0 0.0
    %3043 = vmatprep.subr.mxu0 0.0
    %3044 = vmatpush1.msra.mxu0 0.0
    %3045 = vmatprep.subr.mxu0 0.0
    %3046 = vmatpush1.msra.mxu0 0.0
    %3047 = vmatprep.subr.mxu0 0.0
    %3048 = vmatpush1.msra.mxu0 0.0
    %3049 = vmatprep.subr.mxu0 0.0
    %3050 = vmatpush1.msra.mxu0 0.0
    %3051 = vmatprep.mubr.f32.mxu0 0.0
    %3052 = vmatmul.mubr.f32.gmra.mrb[0].mxu0 %v2976
    %v3053 = vpop.f32.mrb[0].mxu0
    %v3054 = vadd.f32 0.0, %v3053
    %v3055 = vpop.f32.mrb[0].mxu0
    %3056 = vmatprep.mubr.f32.mxu0 0.0
    %3057 = vmatmul.mubr.f32.gmra.mrb[0].mxu0 %v2979
    %v3058 = vpop.f32.mrb[0].mxu0
    %v3059 = vadd.f32 0.0, %v3058
    %v3060 = vpop.f32.mrb[0].mxu0
    %3061 = vmatprep.mubr.f32.mxu0 0.0
    %3062 = vmatmul.mubr.f32.gmra.mrb[0].mxu0 %v2982
    %v3063 = vpop.f32.mrb[0].mxu0
    %v3064 = vadd.f32 0.0, %v3063
    %v3065 = vpop.f32.mrb[0].mxu0
    %3066 = vmatprep.mubr.f32.mxu0 0.0
    %3067 = vmatmul.mubr.f32.gmra.mrb[0].mxu0 %v2985
    %v3068 = vpop.f32.mrb[0].mxu0
    %v3069 = vadd.f32 0.0, %v3068
    %v3070 = vpop.f32.mrb[0].mxu0
    %3071 = vdwg.mxu0
    %v3073 = vlaneseq
    %v3074 = vshrl.u32 %v3073, 7
    %v3075 = vsub.s32 0, %v3074
    %v3076 = vrot.slane %v167, %v3075
    %v3079 = vsel %vm174, %v2263, 0
    %v3082 = vsel %vm174, %v2268, 0
    %v3085 = vsel %vm174, %v2273, 0
    %v3088 = vsel %vm174, %v2278, 0
    %v3091 = vsel %vm174, %v2376, 0
    %v3094 = vsel %vm174, %v2381, 0
    %v3097 = vsel %vm174, %v2386, 0
    %v3100 = vsel %vm174, %v2391, 0
    %v3103 = vsel %vm174, %v2489, 0
    %v3106 = vsel %vm174, %v2494, 0
    %v3109 = vsel %vm174, %v2499, 0
    %v3112 = vsel %vm174, %v2504, 0
    %v3115 = vsel %vm174, %v2602, 0
    %v3118 = vsel %vm174, %v2607, 0
    %v3121 = vsel %vm174, %v2612, 0
    %v3124 = vsel %vm174, %v2617, 0
    %v3127 = vsel %vm174, %v2715, 0
    %v3130 = vsel %vm174, %v2720, 0
    %v3133 = vsel %vm174, %v2725, 0
    %v3136 = vsel %vm174, %v2730, 0
    %v3139 = vsel %vm174, %v2828, 0
    %v3142 = vsel %vm174, %v2833, 0
    %v3145 = vsel %vm174, %v2838, 0
    %v3148 = vsel %vm174, %v2843, 0
    %v3151 = vsel %vm174, %v2941, 0
    %v3154 = vsel %vm174, %v2946, 0
    %v3157 = vsel %vm174, %v2951, 0
    %v3160 = vsel %vm174, %v2956, 0
    %v3163 = vsel %vm174, %v3054, 0
    %v3166 = vsel %vm174, %v3059, 0
    %v3169 = vsel %vm174, %v3064, 0
    %v3172 = vsel %vm174, %v3069, 0
    %3174 = vmatprep.subr.mxu0 0.0
    %3175 = vmatpush1.msra.mxu0 %v163
    %3176 = vmatprep.subr.mxu0 0.0
    %3177 = vmatpush1.msra.mxu0 %v164
    %3178 = vmatprep.subr.mxu0 0.0
    %3179 = vmatpush1.msra.mxu0 %v165
    %3180 = vmatprep.subr.mxu0 0.0
    %3181 = vmatpush1.msra.mxu0 %v166
    %3182 = vmatprep.subr.mxu0 0.0
    %3183 = vmatpush1.msra.mxu0 0.0
    %3184 = vmatprep.subr.mxu0 0.0
    %3185 = vmatpush1.msra.mxu0 0.0
    %3186 = vmatprep.subr.mxu0 0.0
    %3187 = vmatpush1.msra.mxu0 0.0
    %3188 = vmatprep.subr.mxu0 0.0
    %3189 = vmatpush1.msra.mxu0 0.0
    %3190 = vmatprep.subr.mxu0 0.0
    %3191 = vmatpush1.msra.mxu0 0.0
    %3192 = vmatprep.subr.mxu0 0.0
    %3193 = vmatpush1.msra.mxu0 0.0
    %3194 = vmatprep.subr.mxu0 0.0
    %3195 = vmatpush1.msra.mxu0 0.0
    %3196 = vmatprep.subr.mxu0 0.0
    %3197 = vmatpush1.msra.mxu0 0.0
    %3198 = vmatprep.subr.mxu0 0.0
    %3199 = vmatpush1.msra.mxu0 0.0
    %3200 = vmatprep.subr.mxu0 0.0
    %3201 = vmatpush1.msra.mxu0 0.0
    %3202 = vmatprep.subr.mxu0 0.0
    %3203 = vmatpush1.msra.mxu0 0.0
    %3204 = vmatprep.subr.mxu0 0.0
    %3205 = vmatpush1.msra.mxu0 0.0
    %3206 = vmatprep.subr.mxu0 0.0
    %3207 = vmatpush1.msra.mxu0 0.0
    %3208 = vmatprep.subr.mxu0 0.0
    %3209 = vmatpush1.msra.mxu0 0.0
    %3210 = vmatprep.subr.mxu0 0.0
    %3211 = vmatpush1.msra.mxu0 0.0
    %3212 = vmatprep.subr.mxu0 0.0
    %3213 = vmatpush1.msra.mxu0 0.0
    %3214 = vmatprep.subr.mxu0 0.0
    %3215 = vmatpush1.msra.mxu0 0.0
    %3216 = vmatprep.subr.mxu0 0.0
    %3217 = vmatpush1.msra.mxu0 0.0
    %3218 = vmatprep.subr.mxu0 0.0
    %3219 = vmatpush1.msra.mxu0 0.0
    %3220 = vmatprep.subr.mxu0 0.0
    %3221 = vmatpush1.msra.mxu0 0.0
    %3222 = vmatprep.subr.mxu0 0.0
    %3223 = vmatpush1.msra.mxu0 0.0
    %3224 = vmatprep.subr.mxu0 0.0
    %3225 = vmatpush1.msra.mxu0 0.0
    %3226 = vmatprep.subr.mxu0 0.0
    %3227 = vmatpush1.msra.mxu0 0.0
    %3228 = vmatprep.subr.mxu0 0.0
    %3229 = vmatpush1.msra.mxu0 0.0
    %3230 = vmatprep.subr.mxu0 0.0
    %3231 = vmatpush1.msra.mxu0 0.0
    %3232 = vmatprep.subr.mxu0 0.0
    %3233 = vmatpush1.msra.mxu0 0.0
    %3234 = vmatprep.subr.mxu0 0.0
    %3235 = vmatpush1.msra.mxu0 0.0
    %3236 = vmatprep.subr.mxu0 0.0
    %3237 = vmatpush1.msra.mxu0 0.0
    %3238 = vmatprep.mubr.f32.mxu0 0.0
    %3239 = vmatmul.mubr.f32.gmra.mrb[0].mxu0 %v3079
    %v3240 = vpop.f32.mrb[0].mxu0
    %v3241 = vadd.f32 %v3076, %v3240
    %v3242 = vpop.f32.mrb[0].mxu0
    %3243 = vmatprep.mubr.f32.mxu0 0.0
    %3244 = vmatmul.mubr.f32.gmra.mrb[0].mxu0 %v3082
    %v3245 = vpop.f32.mrb[0].mxu0
    %v3246 = vadd.f32 %v3076, %v3245
    %v3247 = vpop.f32.mrb[0].mxu0
    %3248 = vmatprep.mubr.f32.mxu0 0.0
    %3249 = vmatmul.mubr.f32.gmra.mrb[0].mxu0 %v3085
    %v3250 = vpop.f32.mrb[0].mxu0
    %v3251 = vadd.f32 %v3076, %v3250
    %v3252 = vpop.f32.mrb[0].mxu0
    %3253 = vmatprep.mubr.f32.mxu0 0.0
    %3254 = vmatmul.mubr.f32.gmra.mrb[0].mxu0 %v3088
    %v3255 = vpop.f32.mrb[0].mxu0
    %v3256 = vadd.f32 %v3076, %v3255
    %v3257 = vpop.f32.mrb[0].mxu0
    %3258 = vmatprep.mubr.f32.mxu0 0.0
    %3259 = vmatmul.mubr.f32.gmra.mrb[0].mxu0 %v3091
    %v3260 = vpop.f32.mrb[0].mxu0
    %v3261 = vadd.f32 %v3076, %v3260
    %v3262 = vpop.f32.mrb[0].mxu0
    %3263 = vmatprep.mubr.f32.mxu0 0.0
    %3264 = vmatmul.mubr.f32.gmra.mrb[0].mxu0 %v3094
    %v3265 = vpop.f32.mrb[0].mxu0
    %v3266 = vadd.f32 %v3076, %v3265
    %v3267 = vpop.f32.mrb[0].mxu0
    %3268 = vmatprep.mubr.f32.mxu0 0.0
    %3269 = vmatmul.mubr.f32.gmra.mrb[0].mxu0 %v3097
    %v3270 = vpop.f32.mrb[0].mxu0
    %v3271 = vadd.f32 %v3076, %v3270
    %v3272 = vpop.f32.mrb[0].mxu0
    %3273 = vmatprep.mubr.f32.mxu0 0.0
    %3274 = vmatmul.mubr.f32.gmra.mrb[0].mxu0 %v3100
    %v3275 = vpop.f32.mrb[0].mxu0
    %v3276 = vadd.f32 %v3076, %v3275
    %v3277 = vpop.f32.mrb[0].mxu0
    %3278 = vmatprep.mubr.f32.mxu0 0.0
    %3279 = vmatmul.mubr.f32.gmra.mrb[0].mxu0 %v3103
    %v3280 = vpop.f32.mrb[0].mxu0
    %v3281 = vadd.f32 %v3076, %v3280
    %v3282 = vpop.f32.mrb[0].mxu0
    %3283 = vmatprep.mubr.f32.mxu0 0.0
    %3284 = vmatmul.mubr.f32.gmra.mrb[0].mxu0 %v3106
    %v3285 = vpop.f32.mrb[0].mxu0
    %v3286 = vadd.f32 %v3076, %v3285
    %v3287 = vpop.f32.mrb[0].mxu0
    %3288 = vmatprep.mubr.f32.mxu0 0.0
    %3289 = vmatmul.mubr.f32.gmra.mrb[0].mxu0 %v3109
    %v3290 = vpop.f32.mrb[0].mxu0
    %v3291 = vadd.f32 %v3076, %v3290
    %v3292 = vpop.f32.mrb[0].mxu0
    %3293 = vmatprep.mubr.f32.mxu0 0.0
    %3294 = vmatmul.mubr.f32.gmra.mrb[0].mxu0 %v3112
    %v3295 = vpop.f32.mrb[0].mxu0
    %v3296 = vadd.f32 %v3076, %v3295
    %v3297 = vpop.f32.mrb[0].mxu0
    %3298 = vmatprep.mubr.f32.mxu0 0.0
    %3299 = vmatmul.mubr.f32.gmra.mrb[0].mxu0 %v3115
    %v3300 = vpop.f32.mrb[0].mxu0
    %v3301 = vadd.f32 %v3076, %v3300
    %v3302 = vpop.f32.mrb[0].mxu0
    %3303 = vmatprep.mubr.f32.mxu0 0.0
    %3304 = vmatmul.mubr.f32.gmra.mrb[0].mxu0 %v3118
    %v3305 = vpop.f32.mrb[0].mxu0
    %v3306 = vadd.f32 %v3076, %v3305
    %v3307 = vpop.f32.mrb[0].mxu0
    %3308 = vmatprep.mubr.f32.mxu0 0.0
    %3309 = vmatmul.mubr.f32.gmra.mrb[0].mxu0 %v3121
    %v3310 = vpop.f32.mrb[0].mxu0
    %v3311 = vadd.f32 %v3076, %v3310
    %v3312 = vpop.f32.mrb[0].mxu0
    %3313 = vmatprep.mubr.f32.mxu0 0.0
    %3314 = vmatmul.mubr.f32.gmra.mrb[0].mxu0 %v3124
    %v3315 = vpop.f32.mrb[0].mxu0
    %v3316 = vadd.f32 %v3076, %v3315
    %v3317 = vpop.f32.mrb[0].mxu0
    %3318 = vmatprep.mubr.f32.mxu0 0.0
    %3319 = vmatmul.mubr.f32.gmra.mrb[0].mxu0 %v3127
    %v3320 = vpop.f32.mrb[0].mxu0
    %v3321 = vadd.f32 %v3076, %v3320
    %v3322 = vpop.f32.mrb[0].mxu0
    %3323 = vmatprep.mubr.f32.mxu0 0.0
    %3324 = vmatmul.mubr.f32.gmra.mrb[0].mxu0 %v3130
    %v3325 = vpop.f32.mrb[0].mxu0
    %v3326 = vadd.f32 %v3076, %v3325
    %v3327 = vpop.f32.mrb[0].mxu0
    %3328 = vmatprep.mubr.f32.mxu0 0.0
    %3329 = vmatmul.mubr.f32.gmra.mrb[0].mxu0 %v3133
    %v3330 = vpop.f32.mrb[0].mxu0
    %v3331 = vadd.f32 %v3076, %v3330
    %v3332 = vpop.f32.mrb[0].mxu0
    %3333 = vmatprep.mubr.f32.mxu0 0.0
    %3334 = vmatmul.mubr.f32.gmra.mrb[0].mxu0 %v3136
    %v3335 = vpop.f32.mrb[0].mxu0
    %v3336 = vadd.f32 %v3076, %v3335
    %v3337 = vpop.f32.mrb[0].mxu0
    %3338 = vmatprep.mubr.f32.mxu0 0.0
    %3339 = vmatmul.mubr.f32.gmra.mrb[0].mxu0 %v3139
    %v3340 = vpop.f32.mrb[0].mxu0
    %v3341 = vadd.f32 %v3076, %v3340
    %v3342 = vpop.f32.mrb[0].mxu0
    %3343 = vmatprep.mubr.f32.mxu0 0.0
    %3344 = vmatmul.mubr.f32.gmra.mrb[0].mxu0 %v3142
    %v3345 = vpop.f32.mrb[0].mxu0
    %v3346 = vadd.f32 %v3076, %v3345
    %v3347 = vpop.f32.mrb[0].mxu0
    %3348 = vmatprep.mubr.f32.mxu0 0.0
    %3349 = vmatmul.mubr.f32.gmra.mrb[0].mxu0 %v3145
    %v3350 = vpop.f32.mrb[0].mxu0
    %v3351 = vadd.f32 %v3076, %v3350
    %v3352 = vpop.f32.mrb[0].mxu0
    %3353 = vmatprep.mubr.f32.mxu0 0.0
    %3354 = vmatmul.mubr.f32.gmra.mrb[0].mxu0 %v3148
    %v3355 = vpop.f32.mrb[0].mxu0
    %v3356 = vadd.f32 %v3076, %v3355
    %v3357 = vpop.f32.mrb[0].mxu0
    %3358 = vmatprep.mubr.f32.mxu0 0.0
    %3359 = vmatmul.mubr.f32.gmra.mrb[0].mxu0 %v3151
    %v3360 = vpop.f32.mrb[0].mxu0
    %v3361 = vadd.f32 %v3076, %v3360
    %v3362 = vpop.f32.mrb[0].mxu0
    %3363 = vmatprep.mubr.f32.mxu0 0.0
    %3364 = vmatmul.mubr.f32.gmra.mrb[0].mxu0 %v3154
    %v3365 = vpop.f32.mrb[0].mxu0
    %v3366 = vadd.f32 %v3076, %v3365
    %v3367 = vpop.f32.mrb[0].mxu0
    %3368 = vmatprep.mubr.f32.mxu0 0.0
    %3369 = vmatmul.mubr.f32.gmra.mrb[0].mxu0 %v3157
    %v3370 = vpop.f32.mrb[0].mxu0
    %v3371 = vadd.f32 %v3076, %v3370
    %v3372 = vpop.f32.mrb[0].mxu0
    %3373 = vmatprep.mubr.f32.mxu0 0.0
    %3374 = vmatmul.mubr.f32.gmra.mrb[0].mxu0 %v3160
    %v3375 = vpop.f32.mrb[0].mxu0
    %v3376 = vadd.f32 %v3076, %v3375
    %v3377 = vpop.f32.mrb[0].mxu0
    %3378 = vmatprep.mubr.f32.mxu0 0.0
    %3379 = vmatmul.mubr.f32.gmra.mrb[0].mxu0 %v3163
    %v3380 = vpop.f32.mrb[0].mxu0
    %v3381 = vadd.f32 %v3076, %v3380
    %v3382 = vpop.f32.mrb[0].mxu0
    %3383 = vmatprep.mubr.f32.mxu0 0.0
    %3384 = vmatmul.mubr.f32.gmra.mrb[0].mxu0 %v3166
    %v3385 = vpop.f32.mrb[0].mxu0
    %v3386 = vadd.f32 %v3076, %v3385
    %v3387 = vpop.f32.mrb[0].mxu0
    %3388 = vmatprep.mubr.f32.mxu0 0.0
    %3389 = vmatmul.mubr.f32.gmra.mrb[0].mxu0 %v3169
    %v3390 = vpop.f32.mrb[0].mxu0
    %v3391 = vadd.f32 %v3076, %v3390
    %v3392 = vpop.f32.mrb[0].mxu0
    %3393 = vmatprep.mubr.f32.mxu0 0.0
    %3394 = vmatmul.mubr.f32.gmra.mrb[0].mxu0 %v3172
    %v3395 = vpop.f32.mrb[0].mxu0
    %v3396 = vadd.f32 %v3076, %v3395
    %v3397 = vpop.f32.mrb[0].mxu0
    %3398 = vdwg.mxu0
    %3399 = vst.msk [vmem:[#allocation8] sm:$0xff] %vm174, %v3241
    %3400 = vst.msk [vmem:[#allocation8 + $0x8] sm:$0xff] %vm174, %v3246
    %3401 = vst.msk [vmem:[#allocation8 + $0x10] sm:$0xff] %vm174, %v3251
    %3402 = vst.msk [vmem:[#allocation8 + $0x18] sm:$0xff] %vm174, %v3256
    %3403 = vst.msk [vmem:[#allocation8 + $0x20] sm:$0xff] %vm174, %v3261
    %3404 = vst.msk [vmem:[#allocation8 + $0x28] sm:$0xff] %vm174, %v3266
    %3405 = vst.msk [vmem:[#allocation8 + $0x30] sm:$0xff] %vm174, %v3271
    %3406 = vst.msk [vmem:[#allocation8 + $0x38] sm:$0xff] %vm174, %v3276
    %3407 = vst.msk [vmem:[#allocation8 + $0x40] sm:$0xff] %vm174, %v3281
    %3408 = vst.msk [vmem:[#allocation8 + $0x48] sm:$0xff] %vm174, %v3286
    %3409 = vst.msk [vmem:[#allocation8 + $0x50] sm:$0xff] %vm174, %v3291
    %3410 = vst.msk [vmem:[#allocation8 + $0x58] sm:$0xff] %vm174, %v3296
    %3411 = vst.msk [vmem:[#allocation8 + $0x60] sm:$0xff] %vm174, %v3301
    %3412 = vst.msk [vmem:[#allocation8 + $0x68] sm:$0xff] %vm174, %v3306
    %3413 = vst.msk [vmem:[#allocation8 + $0x70] sm:$0xff] %vm174, %v3311
    %3414 = vst.msk [vmem:[#allocation8 + $0x78] sm:$0xff] %vm174, %v3316
    %3415 = vst.msk [vmem:[#allocation8 + $0x80] sm:$0xff] %vm174, %v3321
    %3416 = vst.msk [vmem:[#allocation8 + $0x88] sm:$0xff] %vm174, %v3326
    %3417 = vst.msk [vmem:[#allocation8 + $0x90] sm:$0xff] %vm174, %v3331
    %3418 = vst.msk [vmem:[#allocation8 + $0x98] sm:$0xff] %vm174, %v3336
    %3419 = vst.msk [vmem:[#allocation8 + $0xa0] sm:$0xff] %vm174, %v3341
    %3420 = vst.msk [vmem:[#allocation8 + $0xa8] sm:$0xff] %vm174, %v3346
    %3421 = vst.msk [vmem:[#allocation8 + $0xb0] sm:$0xff] %vm174, %v3351
    %3422 = vst.msk [vmem:[#allocation8 + $0xb8] sm:$0xff] %vm174, %v3356
    %3423 = vst.msk [vmem:[#allocation8 + $0xc0] sm:$0xff] %vm174, %v3361
    %3424 = vst.msk [vmem:[#allocation8 + $0xc8] sm:$0xff] %vm174, %v3366
    %3425 = vst.msk [vmem:[#allocation8 + $0xd0] sm:$0xff] %vm174, %v3371
    %3426 = vst.msk [vmem:[#allocation8 + $0xd8] sm:$0xff] %vm174, %v3376
    %3427 = vst.msk [vmem:[#allocation8 + $0xe0] sm:$0xff] %vm174, %v3381
    %3428 = vst.msk [vmem:[#allocation8 + $0xe8] sm:$0xff] %vm174, %v3386
    %3429 = vst.msk [vmem:[#allocation8 + $0xf0] sm:$0xff] %vm174, %v3391
    %3430 = vst.msk [vmem:[#allocation8 + $0xf8] sm:$0xff] %vm174, %v3396
    // Predicated region
    $region34: #{tpu_custom_call.1} parent=1 // pred_check
      _
    $region35: #{tpu_custom_call.1} parent=1 // pred_check_branch
      %3432 = sbr.rel (0) target = $region37
    $region36: #{tpu_custom_call.1} parent=1 // pred_region
      %s3434 = ssub.s32 4096, 4096
      %3435 = vsyncadd [#allocation4], %s3434
      %s3436 = sshll.u32 [#allocation8], 4
      %s3437 = int_to_ptr.vmem [resolvable:$true] %s3436
      %3442 = dma.vmem_to_hbm [thread:$0]  %s3437, 4096, %s5, [#allocation4], 128, 128, 8
    $region37: #{tpu_custom_call.1} parent=1 // pred_fallthru
      _
    // Predicated region
    $region38: #{tpu_custom_call.1} parent=1 // pred_check
      _
    $region39: #{tpu_custom_call.1} parent=1 // pred_check_branch
      %3444 = sbr.rel (0) target = $region41
    $region40: #{tpu_custom_call.1} parent=1 // pred_region
      %3445 = dma.done [#allocation4], 4096
    $region41: #{tpu_custom_call.1} parent=1 // pred_fallthru
      _
    %3446 = vsyncpa [#allocation3], 1
    %3447 = vsyncpa [#allocation6], 1
    %3448 = vsyncpa [#allocation4], 1

</llo_original>
